<compile_context>
chip_gen: v5e
topology: v5e:2x2
jax: 0.10.0
libtpu: 0.0.40
codegen_flags: <defaults>
</compile_context>

<pallas_src>
import jax
import jax.numpy as jnp
from jax.experimental import pallas as pl
from jax.experimental.pallas import tpu as pltpu


_LANES = 128
_TAPS = tuple((kh, kw) for kh in range(3) for kw in range(3))


def _round_up(x, m):
    return (x + m - 1) // m * m


def _largest_divisor_leq(n, cap):
    cap = max(1, min(n, cap))
    for d in range(cap, 0, -1):
        if n % d == 0:
            return d
    return 1


# ------------------------------ Pallas kernel ------------------------------- #

def _make_fused_block_kernel(stride, h1, w1sz, cin_k, coutp, bimg, rows,
                             conv_shortcut):
    """conv1+BN1+ReLU -> conv2+BN2 -> (+shortcut) -> ReLU, `bimg` images/step.

    GEMM chunks are (bimg * rows * w1sz) pixel rows; `rows` is a divisor of h1
    (rows == h1 when whole images are stacked, smaller when row-chunking a big
    stride-1 map).  All ref accesses are contiguous unit-stride slices.
    """
    n_chunks = h1 // rows
    m = bimg * rows * w1sz          # GEMM rows per chunk

    def x_tap(x_ref, kh, kw, r0):
        # Input window feeding output rows [r0, r0+rows) for tap (kh, kw),
        # flattened to (m, cin_k).
        if stride == 1:
            win = x_ref[:, r0 + kh:r0 + kh + rows, kw:kw + w1sz, :]
        else:
            ph, dh = kh % 2, kh // 2
            pw, dw = kw % 2, kw // 2
            win = x_ref[:, ph:ph + 1, pw:pw + 1,
                        r0 + dh:r0 + dh + rows, dw:dw + w1sz, :]
        return win.reshape(m, cin_k)

    def kernel(x_ref, w1_ref, b1_ref, w2_ref, b_ref, *rest):
        if conv_shortcut:
            wsc_ref, o_ref, y1p_ref = rest
        else:
            o_ref, y1p_ref = rest

        # ---- zero only the halo border of the y1 scratch (interior is fully
        #      overwritten below); per-step so it is safe with "parallel" grid.
        hp, wp = h1 + 2, w1sz + 2
        y1p_ref[:, 0:1, :, :] = jnp.zeros((bimg, 1, wp, coutp), y1p_ref.dtype)
        y1p_ref[:, hp - 1:hp, :, :] = jnp.zeros((bimg, 1, wp, coutp),
                                                y1p_ref.dtype)
        y1p_ref[:, :, 0:1, :] = jnp.zeros((bimg, hp, 1, coutp), y1p_ref.dtype)
        y1p_ref[:, :, wp - 1:wp, :] = jnp.zeros((bimg, hp, 1, coutp),
                                                y1p_ref.dtype)

        # ---- conv1 (3x3, stride) + folded BN1 + ReLU, staged into y1p (bf16)
        for c in range(n_chunks):
            r0 = c * rows
            acc1 = jnp.zeros((m, coutp), jnp.float32)
            for t, (kh, kw) in enumerate(_TAPS):
                acc1 = acc1 + jnp.dot(x_tap(x_ref, kh, kw, r0), w1_ref[t],
                                      preferred_element_type=jnp.float32)
            y1 = jnp.maximum(acc1 + b1_ref[...], 0.0)
            y1p_ref[:, 1 + r0:1 + r0 + rows, 1:1 + w1sz, :] = (
                y1.reshape(bimg, rows, w1sz, coutp).astype(y1p_ref.dtype))

        # ---- conv2 (3x3, stride 1) + folded BN2 + shortcut + ReLU
        for c in range(n_chunks):
            r0 = c * rows
            acc2 = jnp.zeros((m, coutp), jnp.float32)
            for t, (kh, kw) in enumerate(_TAPS):
                yt = y1p_ref[:, r0 + kh:r0 + kh + rows,
                             kw:kw + w1sz, :].reshape(m, coutp)
                acc2 = acc2 + jnp.dot(yt, w2_ref[t],
                                      preferred_element_type=jnp.float32)

            xs = x_tap(x_ref, 1, 1, r0)        # == x[::stride, ::stride]
            if conv_shortcut:
                acc2 = acc2 + jnp.dot(xs, wsc_ref[...],
                                      preferred_element_type=jnp.float32)
            else:
                # identity shortcut: cin_k == coutp by construction
                acc2 = acc2 + xs.astype(jnp.float32)

            out = jnp.maximum(acc2 + b_ref[...], 0.0)
            o_ref[:, r0:r0 + rows, :, :] = (
                out.reshape(bimg, rows, w1sz, coutp).astype(o_ref.dtype))

    return kernel


# ----------------------------- pallas_call glue ----------------------------- #

def _fused_block_call(xin, w1f, b1, w2f, bias, wsc, *,
                      stride, h1, w1sz, cin_k, coutp, bimg, rows, out_dtype):
    n_img = xin.shape[0]
    n_steps = n_img // bimg
    conv_shortcut = wsc is not None
    kernel = _make_fused_block_kernel(stride, h1, w1sz, cin_k, coutp, bimg,
                                      rows, conv_shortcut)

    if stride == 1:
        _, hp2, wp2, _ = xin.shape
        x_spec = pl.BlockSpec((bimg, hp2, wp2, cin_k), lambda g: (g, 0, 0, 0))
    else:
        _, _, _, hh, ww, _ = xin.shape
        x_spec = pl.BlockSpec((bimg, 2, 2, hh, ww, cin_k),
                              lambda g: (g, 0, 0, 0, 0, 0))

    in_specs = [
        x_spec,
        pl.BlockSpec((9, cin_k, coutp), lambda g: (0, 0, 0)),   # conv1 taps
        pl.BlockSpec((1, coutp), lambda g: (0, 0)),             # bias1
        pl.BlockSpec((9, coutp, coutp), lambda g: (0, 0, 0)),   # conv2 taps
        pl.BlockSpec((1, coutp), lambda g: (0, 0)),             # bias2 (+sc)
    ]
    args = [xin, w1f, b1, w2f, bias]
    if conv_shortcut:
        in_specs.append(pl.BlockSpec((cin_k, coutp), lambda g: (0, 0)))
        args.append(wsc)

    return pl.pallas_call(
        kernel,
        out_shape=jax.ShapeDtypeStruct((n_img, h1, w1sz, coutp), out_dtype),
        grid=(n_steps,),
        in_specs=in_specs,
        out_specs=pl.BlockSpec((bimg, h1, w1sz, coutp), lambda g: (g, 0, 0, 0)),
        scratch_shapes=[pltpu.VMEM((bimg, h1 + 2, w1sz + 2, coutp),
                                   jnp.bfloat16)],
        compiler_params=pltpu.CompilerParams(
            dimension_semantics=("parallel",)),
    )(*args)


# --------------------------------- wrapper ----------------------------------- #

def residual_block(x_nchw, params, stride, out_dtype=jnp.float32):
    """Forward pass of the PyTorch ResidualBlock. Input/output are NCHW."""
    assert stride in (1, 2), "ResNet18-CIFAR blocks use stride 1 or 2"
    x = jnp.transpose(x_nchw, (0, 2, 3, 1)).astype(jnp.float32)   # NHWC
    n, h, w, cin = x.shape
    cout = params["w1"].shape[-1]
    if stride == 2:
        assert h % 2 == 0 and w % 2 == 0
    h1 = (h - 1) // stride + 1
    w1sz = (w - 1) // stride + 1
    coutp = _round_up(max(cout, _LANES), _LANES)

    conv_shortcut = (stride != 1) or (cin != cout)
    # Only the identity-shortcut path pads input channels (so the residual add
    # is lane-aligned with the coutp-padded output); the conv-shortcut path
    # DMAs the raw cin channels (no wasted input bandwidth).
    cin_k = coutp if not conv_shortcut else cin

    # 3x3 spatial halo (+ optional channel pad), bf16 MXU operand.
    xp = jnp.pad(x, ((0, 0), (1, 1), (1, 1), (0, cin_k - cin)))
    xp = xp.astype(jnp.bfloat16)
    if stride == 2:
        hh, ww = (h + 2) // 2, (w + 2) // 2
        # Phase deinterleave: xin[:, ph, pw, i, j, :] == xp[:, 2i+ph, 2j+pw, :]
        xin = xp.reshape(n, hh, 2, ww, 2, cin_k).transpose(0, 2, 4, 1, 3, 5)
    else:
        xin = xp

    # Fold BN scales into the conv weights (per output channel), pad channel
    # dims, reshape to 9 taps, cast to bf16.  Pad lanes carry zero weight and
    # zero bias so the ReLU keeps them exactly 0 (sliced off below).
    w1f = params["w1"] * params["scale1"][0]
    w1f = jnp.pad(w1f, ((0, 0), (0, 0), (0, cin_k - cin), (0, coutp - cout)))
    w1f = w1f.reshape(9, cin_k, coutp).astype(jnp.bfloat16)
    w2f = params["w2"] * params["scale2"][0]
    w2f = jnp.pad(w2f, ((0, 0), (0, 0), (0, coutp - cout), (0, coutp - cout)))
    w2f = w2f.reshape(9, coutp, coutp).astype(jnp.bfloat16)
    b1 = jnp.pad(params["bias1"], ((0, 0), (0, coutp - cout)))

    if conv_shortcut:
        wsc = params["wsc"][0, 0] * params["scalesc"][0]
        wsc = jnp.pad(wsc, ((0, cin_k - cin), (0, coutp - cout)))
        wsc = wsc.astype(jnp.bfloat16)
        bias = params["bias2"] + params["biassc"]
    else:
        wsc = None
        bias = params["bias2"]
    bias = jnp.pad(bias, ((0, 0), (0, coutp - cout)))

    # GEMM M shaping: stack whole images into M when the feature map is small
    # (late stages), otherwise row-chunk a single image so the f32 accumulator
    # stays <= ~32 vregs (early 32x32 stride-1 stages).
    m_img = h1 * w1sz
    m_budget = max(w1sz, 32768 // coutp)          # ~32 vregs of f32 accumulator
    if m_img <= m_budget:
        bimg = _largest_divisor_leq(n, max(1, m_budget // m_img))
        rows = h1
    else:
        bimg = 1
        rows = _largest_divisor_leq(h1, max(1, m_budget // w1sz))

    out = _fused_block_call(xin, w1f, b1, w2f, bias, wsc,
                            stride=stride, h1=h1, w1sz=w1sz, cin_k=cin_k,
                            coutp=coutp, bimg=bimg, rows=rows,
                            out_dtype=out_dtype)
    out = out[:, :, :, :cout].astype(jnp.float32)     # drop pad lanes
    return jnp.transpose(out, (0, 3, 1, 2))           # back to NCHW


# --------------------------- parameters / reference -------------------------- #

def _fold_bn(gamma, beta, mean, var, eps=1e-5):
    scale = gamma / jnp.sqrt(var + eps)
    bias = beta - mean * scale
    return scale[None, :], bias[None, :]              # (1, C)


def init_params(key, cin, cout, stride):
    ks = jax.random.split(key, 16)
    p = {}
    p["w1"] = jax.random.normal(ks[0], (3, 3, cin, cout), jnp.float32) / (9 * cin) ** 0.5
    p["w2"] = jax.random.normal(ks[1], (3, 3, cout, cout), jnp.float32) / (9 * cout) ** 0.5
    g1 = 1.0 + 0.1 * jax.random.normal(ks[2], (cout,), jnp.float32)
    b1 = 0.1 * jax.random.normal(ks[3], (cout,), jnp.float32)
    m1 = 0.1 * jax.random.normal(ks[4], (cout,), jnp.float32)
    v1 = jnp.abs(jax.random.normal(ks[5], (cout,), jnp.float32)) + 0.5
    p["scale1"], p["bias1"] = _fold_bn(g1, b1, m1, v1)
    g2 = 1.0 + 0.1 * jax.random.normal(ks[6], (cout,), jnp.float32)
    b2 = 0.1 * jax.random.normal(ks[7], (cout,), jnp.float32)
    m2 = 0.1 * jax.random.normal(ks[8], (cout,), jnp.float32)
    v2 = jnp.abs(jax.random.normal(ks[9], (cout,), jnp.float32)) + 0.5
    p["scale2"], p["bias2"] = _fold_bn(g2, b2, m2, v2)
    if stride != 1 or cin != cout:
        p["wsc"] = jax.random.normal(ks[10], (1, 1, cin, cout), jnp.float32) / cin ** 0.5
        gs = 1.0 + 0.1 * jax.random.normal(ks[11], (cout,), jnp.float32)
        bs = 0.1 * jax.random.normal(ks[12], (cout,), jnp.float32)
        ms = 0.1 * jax.random.normal(ks[13], (cout,), jnp.float32)
        vs = jnp.abs(jax.random.normal(ks[14], (cout,), jnp.float32)) + 0.5
        p["scalesc"], p["biassc"] = _fold_bn(gs, bs, ms, vs)
    return p


def reference(x_nchw, params, stride):
    """Plain-JAX f32 reference (lax.conv) for correctness check."""
    dn = ("NHWC", "HWIO", "NHWC")
    x = jnp.transpose(x_nchw, (0, 2, 3, 1)).astype(jnp.float32)
    y = jax.lax.conv_general_dilated(x, params["w1"], (stride, stride),
                                     ((1, 1), (1, 1)), dimension_numbers=dn)
    y = jnp.maximum(y * params["scale1"][0] + params["bias1"][0], 0.0)
    y2 = jax.lax.conv_general_dilated(y, params["w2"], (1, 1),
                                      ((1, 1), (1, 1)), dimension_numbers=dn)
    y2 = y2 * params["scale2"][0] + params["bias2"][0]
    if "wsc" in params:
        sc = jax.lax.conv_general_dilated(x, params["wsc"], (stride, stride),
                                          ((0, 0), (0, 0)), dimension_numbers=dn)
        sc = sc * params["scalesc"][0] + params["biassc"][0]
    else:
        sc = x
    out = jnp.maximum(y2 + sc, 0.0)
    return jnp.transpose(out, (0, 3, 1, 2))


# ----------------------------------- main ------------------------------------ #

def _run_case(key, n, cin, cout, h, w, stride):
    kx, kp = jax.random.split(key)
    x = jax.random.normal(kx, (n, cin, h, w), jnp.float32)        # NCHW
    params = init_params(kp, cin, cout, stride)

    fwd = jax.jit(residual_block, static_argnums=2)
    out = jax.block_until_ready(fwd(x, params, stride))
    ref = reference(x, params, stride)

    assert out.shape == (n, cout, h // stride, w // stride), out.shape
    # Tolerance sized for bf16 MXU operands with f32 accumulation (a pure-f32
    # path would be ~1e-5; a real indexing/fusion bug shows up as >1e-1).
    rel = float(jnp.max(jnp.abs(out - ref) / jnp.maximum(jnp.abs(ref), 1.0)))
    assert rel < 7.5e-2, f"normalized max err {rel}"


if __name__ == "__main__":
    key = jax.random.PRNGKey(0)
    k1, k2 = jax.random.split(key)

    # Conv-shortcut block, stride 2: phase-deinterleaved input path,
    # both images stacked into a single GEMM M per grid step.
    _run_case(k1, 2, 4, 8, 16, 16, 2)

    # Identity-shortcut block, stride 1, 32x32 map: exercises the row-chunked
    # M tiling (4 chunks of 256 pixel rows) and a grid of >1 step.
    _run_case(k2, 2, 4, 4, 32, 32, 1)

    print("KERNEL_OK")
</pallas_src>

<mosaic_0001>
module attributes {stable_mosaic.version = 11 : i64} {
  func.func @kernel(%arg0: i32, %arg1: memref<2x2x2x9x9x4xbf16, #tpu.memory_space<vmem>>, %arg2: memref<9x4x128xbf16, #tpu.memory_space<vmem>>, %arg3: memref<1x128xf32, #tpu.memory_space<vmem>>, %arg4: memref<9x128x128xbf16, #tpu.memory_space<vmem>>, %arg5: memref<1x128xf32, #tpu.memory_space<vmem>>, %arg6: memref<4x128xbf16, #tpu.memory_space<vmem>>, %arg7: memref<2x8x8x128xf32, #tpu.memory_space<vmem>>, %arg8: memref<2x10x10x128xbf16, #tpu.memory_space<vmem>>) attributes {dimension_semantics = [#tpu.dimension_semantics<parallel>], iteration_bounds = array<i64: 1>, scalar_prefetch = 0 : i64, scratch_operands = 1 : i64, tpu.core_type = #tpu.core_type<tc>, window_params = [{transform_indices = @transform_0, window_bounds = array<i64: 2, 2, 2, 9, 9, 4>}, {pipeline_mode = #tpu.pipeline_mode<synchronous>, transform_indices = @transform_1, window_bounds = array<i64: 9, 4, 128>}, {pipeline_mode = #tpu.pipeline_mode<synchronous>, transform_indices = @transform_2, window_bounds = array<i64: 1, 128>}, {pipeline_mode = #tpu.pipeline_mode<synchronous>, transform_indices = @transform_3, window_bounds = array<i64: 9, 128, 128>}, {pipeline_mode = #tpu.pipeline_mode<synchronous>, transform_indices = @transform_4, window_bounds = array<i64: 1, 128>}, {pipeline_mode = #tpu.pipeline_mode<synchronous>, transform_indices = @transform_5, window_bounds = array<i64: 4, 128>}, {transform_indices = @transform_6, window_bounds = array<i64: 2, 8, 8, 128>}]} {
    %cst = arith.constant 0.000000e+00 : bf16
    %0 = vector.broadcast %cst : bf16 to vector<2x1x10x128xbf16>
    %c0 = arith.constant 0 : index
    %c0_0 = arith.constant 0 : index
    %c0_1 = arith.constant 0 : index
    %c0_2 = arith.constant 0 : index
    %1 = vector.load %arg8[%c0, %c0_0, %c0_1, %c0_2] : memref<2x10x10x128xbf16, #tpu.memory_space<vmem>>, vector<2x1x10x128xbf16>
    tpu.vector_store %arg8[%c0, %c0_0, %c0_1, %c0_2], %0 {strides = array<i32>} : memref<2x10x10x128xbf16, #tpu.memory_space<vmem>>, vector<2x1x10x128xbf16>,
    %cst_3 = arith.constant 0.000000e+00 : bf16
    %2 = vector.broadcast %cst_3 : bf16 to vector<2x1x10x128xbf16>
    %c0_4 = arith.constant 0 : index
    %c9 = arith.constant 9 : index
    %c0_5 = arith.constant 0 : index
    %c0_6 = arith.constant 0 : index
    %3 = vector.load %arg8[%c0_4, %c9, %c0_5, %c0_6] : memref<2x10x10x128xbf16, #tpu.memory_space<vmem>>, vector<2x1x10x128xbf16>
    tpu.vector_store %arg8[%c0_4, %c9, %c0_5, %c0_6], %2 {strides = array<i32>} : memref<2x10x10x128xbf16, #tpu.memory_space<vmem>>, vector<2x1x10x128xbf16>,
    %cst_7 = arith.constant 0.000000e+00 : bf16
    %4 = vector.broadcast %cst_7 : bf16 to vector<2x10x1x128xbf16>
    %c0_8 = arith.constant 0 : index
    %c0_9 = arith.constant 0 : index
    %c0_10 = arith.constant 0 : index
    %c0_11 = arith.constant 0 : index
    %5 = vector.load %arg8[%c0_8, %c0_9, %c0_10, %c0_11] : memref<2x10x10x128xbf16, #tpu.memory_space<vmem>>, vector<2x10x1x128xbf16>
    tpu.vector_store %arg8[%c0_8, %c0_9, %c0_10, %c0_11], %4 {strides = array<i32>} : memref<2x10x10x128xbf16, #tpu.memory_space<vmem>>, vector<2x10x1x128xbf16>,
    %cst_12 = arith.constant 0.000000e+00 : bf16
    %6 = vector.broadcast %cst_12 : bf16 to vector<2x10x1x128xbf16>
    %c0_13 = arith.constant 0 : index
    %c0_14 = arith.constant 0 : index
    %c9_15 = arith.constant 9 : index
    %c0_16 = arith.constant 0 : index
    %7 = vector.load %arg8[%c0_13, %c0_14, %c9_15, %c0_16] : memref<2x10x10x128xbf16, #tpu.memory_space<vmem>>, vector<2x10x1x128xbf16>
    tpu.vector_store %arg8[%c0_13, %c0_14, %c9_15, %c0_16], %6 {strides = array<i32>} : memref<2x10x10x128xbf16, #tpu.memory_space<vmem>>, vector<2x10x1x128xbf16>,
    %cst_17 = arith.constant 0.000000e+00 : f32
    %8 = vector.broadcast %cst_17 : f32 to vector<128x128xf32>
    %c0_18 = arith.constant 0 : index
    %c0_19 = arith.constant 0 : index
    %c0_20 = arith.constant 0 : index
    %c0_21 = arith.constant 0 : index
    %c0_22 = arith.constant 0 : index
    %c0_23 = arith.constant 0 : index
    %9 = vector.load %arg1[%c0_18, %c0_19, %c0_20, %c0_21, %c0_22, %c0_23] : memref<2x2x2x9x9x4xbf16, #tpu.memory_space<vmem>>, vector<2x1x1x8x8x4xbf16>
    %10 = vector.shape_cast %9 : vector<2x1x1x8x8x4xbf16> to vector<128x4xbf16>
    %c0_24 = arith.constant 0 : index
    %c0_25 = arith.constant 0 : index
    %c0_26 = arith.constant 0 : index
    %11 = vector.load %arg2[%c0_24, %c0_25, %c0_26] : memref<9x4x128xbf16, #tpu.memory_space<vmem>>, vector<1x4x128xbf16>
    %12 = vector.shape_cast %11 : vector<1x4x128xbf16> to vector<4x128xbf16>
    %cst_27 = arith.constant dense<0.000000e+00> : vector<128x128xf32>
    %13 = tpu.matmul %10, %12, %cst_27 {dimension_numbers = #tpu.dot_dimension_numbers<[1], [0], [0], [1], [0, 0, 1, 1], [], []>} : vector<128x4xbf16>, vector<4x128xbf16>, vector<128x128xf32> -> vector<128x128xf32>
    %14 = arith.addf %8, %13 : vector<128x128xf32>
    %c0_28 = arith.constant 0 : index
    %c0_29 = arith.constant 0 : index
    %c1 = arith.constant 1 : index
    %c0_30 = arith.constant 0 : index
    %c0_31 = arith.constant 0 : index
    %c0_32 = arith.constant 0 : index
    %15 = vector.load %arg1[%c0_28, %c0_29, %c1, %c0_30, %c0_31, %c0_32] : memref<2x2x2x9x9x4xbf16, #tpu.memory_space<vmem>>, vector<2x1x1x8x8x4xbf16>
    %16 = vector.shape_cast %15 : vector<2x1x1x8x8x4xbf16> to vector<128x4xbf16>
    %c1_33 = arith.constant 1 : index
    %c0_34 = arith.constant 0 : index
    %c0_35 = arith.constant 0 : index
    %17 = vector.load %arg2[%c1_33, %c0_34, %c0_35] : memref<9x4x128xbf16, #tpu.memory_space<vmem>>, vector<1x4x128xbf16>
    %18 = vector.shape_cast %17 : vector<1x4x128xbf16> to vector<4x128xbf16>
    %cst_36 = arith.constant dense<0.000000e+00> : vector<128x128xf32>
    %19 = tpu.matmul %16, %18, %cst_36 {dimension_numbers = #tpu.dot_dimension_numbers<[1], [0], [0], [1], [0, 0, 1, 1], [], []>} : vector<128x4xbf16>, vector<4x128xbf16>, vector<128x128xf32> -> vector<128x128xf32>
    %20 = arith.addf %14, %19 : vector<128x128xf32>
    %c0_37 = arith.constant 0 : index
    %c0_38 = arith.constant 0 : index
    %c0_39 = arith.constant 0 : index
    %c0_40 = arith.constant 0 : index
    %c1_41 = arith.constant 1 : index
    %c0_42 = arith.constant 0 : index
    %21 = vector.load %arg1[%c0_37, %c0_38, %c0_39, %c0_40, %c1_41, %c0_42] : memref<2x2x2x9x9x4xbf16, #tpu.memory_space<vmem>>, vector<2x1x1x8x8x4xbf16>
    %22 = vector.shape_cast %21 : vector<2x1x1x8x8x4xbf16> to vector<128x4xbf16>
    %c2 = arith.constant 2 : index
    %c0_43 = arith.constant 0 : index
    %c0_44 = arith.constant 0 : index
    %23 = vector.load %arg2[%c2, %c0_43, %c0_44] : memref<9x4x128xbf16, #tpu.memory_space<vmem>>, vector<1x4x128xbf16>
    %24 = vector.shape_cast %23 : vector<1x4x128xbf16> to vector<4x128xbf16>
    %cst_45 = arith.constant dense<0.000000e+00> : vector<128x128xf32>
    %25 = tpu.matmul %22, %24, %cst_45 {dimension_numbers = #tpu.dot_dimension_numbers<[1], [0], [0], [1], [0, 0, 1, 1], [], []>} : vector<128x4xbf16>, vector<4x128xbf16>, vector<128x128xf32> -> vector<128x128xf32>
    %26 = arith.addf %20, %25 : vector<128x128xf32>
    %c0_46 = arith.constant 0 : index
    %c1_47 = arith.constant 1 : index
    %c0_48 = arith.constant 0 : index
    %c0_49 = arith.constant 0 : index
    %c0_50 = arith.constant 0 : index
    %c0_51 = arith.constant 0 : index
    %27 = vector.load %arg1[%c0_46, %c1_47, %c0_48, %c0_49, %c0_50, %c0_51] : memref<2x2x2x9x9x4xbf16, #tpu.memory_space<vmem>>, vector<2x1x1x8x8x4xbf16>
    %28 = vector.shape_cast %27 : vector<2x1x1x8x8x4xbf16> to vector<128x4xbf16>
    %c3 = arith.constant 3 : index
    %c0_52 = arith.constant 0 : index
    %c0_53 = arith.constant 0 : index
    %29 = vector.load %arg2[%c3, %c0_52, %c0_53] : memref<9x4x128xbf16, #tpu.memory_space<vmem>>, vector<1x4x128xbf16>
    %30 = vector.shape_cast %29 : vector<1x4x128xbf16> to vector<4x128xbf16>
    %cst_54 = arith.constant dense<0.000000e+00> : vector<128x128xf32>
    %31 = tpu.matmul %28, %30, %cst_54 {dimension_numbers = #tpu.dot_dimension_numbers<[1], [0], [0], [1], [0, 0, 1, 1], [], []>} : vector<128x4xbf16>, vector<4x128xbf16>, vector<128x128xf32> -> vector<128x128xf32>
    %32 = arith.addf %26, %31 : vector<128x128xf32>
    %c0_55 = arith.constant 0 : index
    %c1_56 = arith.constant 1 : index
    %c1_57 = arith.constant 1 : index
    %c0_58 = arith.constant 0 : index
    %c0_59 = arith.constant 0 : index
    %c0_60 = arith.constant 0 : index
    %33 = vector.load %arg1[%c0_55, %c1_56, %c1_57, %c0_58, %c0_59, %c0_60] : memref<2x2x2x9x9x4xbf16, #tpu.memory_space<vmem>>, vector<2x1x1x8x8x4xbf16>
    %34 = vector.shape_cast %33 : vector<2x1x1x8x8x4xbf16> to vector<128x4xbf16>
    %c4 = arith.constant 4 : index
    %c0_61 = arith.constant 0 : index
    %c0_62 = arith.constant 0 : index
    %35 = vector.load %arg2[%c4, %c0_61, %c0_62] : memref<9x4x128xbf16, #tpu.memory_space<vmem>>, vector<1x4x128xbf16>
    %36 = vector.shape_cast %35 : vector<1x4x128xbf16> to vector<4x128xbf16>
    %cst_63 = arith.constant dense<0.000000e+00> : vector<128x128xf32>
    %37 = tpu.matmul %34, %36, %cst_63 {dimension_numbers = #tpu.dot_dimension_numbers<[1], [0], [0], [1], [0, 0, 1, 1], [], []>} : vector<128x4xbf16>, vector<4x128xbf16>, vector<128x128xf32> -> vector<128x128xf32>
    %38 = arith.addf %32, %37 : vector<128x128xf32>
    %c0_64 = arith.constant 0 : index
    %c1_65 = arith.constant 1 : index
    %c0_66 = arith.constant 0 : index
    %c0_67 = arith.constant 0 : index
    %c1_68 = arith.constant 1 : index
    %c0_69 = arith.constant 0 : index
    %39 = vector.load %arg1[%c0_64, %c1_65, %c0_66, %c0_67, %c1_68, %c0_69] : memref<2x2x2x9x9x4xbf16, #tpu.memory_space<vmem>>, vector<2x1x1x8x8x4xbf16>
    %40 = vector.shape_cast %39 : vector<2x1x1x8x8x4xbf16> to vector<128x4xbf16>
    %c5 = arith.constant 5 : index
    %c0_70 = arith.constant 0 : index
    %c0_71 = arith.constant 0 : index
    %41 = vector.load %arg2[%c5, %c0_70, %c0_71] : memref<9x4x128xbf16, #tpu.memory_space<vmem>>, vector<1x4x128xbf16>
    %42 = vector.shape_cast %41 : vector<1x4x128xbf16> to vector<4x128xbf16>
    %cst_72 = arith.constant dense<0.000000e+00> : vector<128x128xf32>
    %43 = tpu.matmul %40, %42, %cst_72 {dimension_numbers = #tpu.dot_dimension_numbers<[1], [0], [0], [1], [0, 0, 1, 1], [], []>} : vector<128x4xbf16>, vector<4x128xbf16>, vector<128x128xf32> -> vector<128x128xf32>
    %44 = arith.addf %38, %43 : vector<128x128xf32>
    %c0_73 = arith.constant 0 : index
    %c0_74 = arith.constant 0 : index
    %c0_75 = arith.constant 0 : index
    %c1_76 = arith.constant 1 : index
    %c0_77 = arith.constant 0 : index
    %c0_78 = arith.constant 0 : index
    %45 = vector.load %arg1[%c0_73, %c0_74, %c0_75, %c1_76, %c0_77, %c0_78] : memref<2x2x2x9x9x4xbf16, #tpu.memory_space<vmem>>, vector<2x1x1x8x8x4xbf16>
    %46 = vector.shape_cast %45 : vector<2x1x1x8x8x4xbf16> to vector<128x4xbf16>
    %c6 = arith.constant 6 : index
    %c0_79 = arith.constant 0 : index
    %c0_80 = arith.constant 0 : index
    %47 = vector.load %arg2[%c6, %c0_79, %c0_80] : memref<9x4x128xbf16, #tpu.memory_space<vmem>>, vector<1x4x128xbf16>
    %48 = vector.shape_cast %47 : vector<1x4x128xbf16> to vector<4x128xbf16>
    %cst_81 = arith.constant dense<0.000000e+00> : vector<128x128xf32>
    %49 = tpu.matmul %46, %48, %cst_81 {dimension_numbers = #tpu.dot_dimension_numbers<[1], [0], [0], [1], [0, 0, 1, 1], [], []>} : vector<128x4xbf16>, vector<4x128xbf16>, vector<128x128xf32> -> vector<128x128xf32>
    %50 = arith.addf %44, %49 : vector<128x128xf32>
    %c0_82 = arith.constant 0 : index
    %c0_83 = arith.constant 0 : index
    %c1_84 = arith.constant 1 : index
    %c1_85 = arith.constant 1 : index
    %c0_86 = arith.constant 0 : index
    %c0_87 = arith.constant 0 : index
    %51 = vector.load %arg1[%c0_82, %c0_83, %c1_84, %c1_85, %c0_86, %c0_87] : memref<2x2x2x9x9x4xbf16, #tpu.memory_space<vmem>>, vector<2x1x1x8x8x4xbf16>
    %52 = vector.shape_cast %51 : vector<2x1x1x8x8x4xbf16> to vector<128x4xbf16>
    %c7 = arith.constant 7 : index
    %c0_88 = arith.constant 0 : index
    %c0_89 = arith.constant 0 : index
    %53 = vector.load %arg2[%c7, %c0_88, %c0_89] : memref<9x4x128xbf16, #tpu.memory_space<vmem>>, vector<1x4x128xbf16>
    %54 = vector.shape_cast %53 : vector<1x4x128xbf16> to vector<4x128xbf16>
    %cst_90 = arith.constant dense<0.000000e+00> : vector<128x128xf32>
    %55 = tpu.matmul %52, %54, %cst_90 {dimension_numbers = #tpu.dot_dimension_numbers<[1], [0], [0], [1], [0, 0, 1, 1], [], []>} : vector<128x4xbf16>, vector<4x128xbf16>, vector<128x128xf32> -> vector<128x128xf32>
    %56 = arith.addf %50, %55 : vector<128x128xf32>
    %c0_91 = arith.constant 0 : index
    %c0_92 = arith.constant 0 : index
    %c0_93 = arith.constant 0 : index
    %c1_94 = arith.constant 1 : index
    %c1_95 = arith.constant 1 : index
    %c0_96 = arith.constant 0 : index
    %57 = vector.load %arg1[%c0_91, %c0_92, %c0_93, %c1_94, %c1_95, %c0_96] : memref<2x2x2x9x9x4xbf16, #tpu.memory_space<vmem>>, vector<2x1x1x8x8x4xbf16>
    %58 = vector.shape_cast %57 : vector<2x1x1x8x8x4xbf16> to vector<128x4xbf16>
    %c8 = arith.constant 8 : index
    %c0_97 = arith.constant 0 : index
    %c0_98 = arith.constant 0 : index
    %59 = vector.load %arg2[%c8, %c0_97, %c0_98] : memref<9x4x128xbf16, #tpu.memory_space<vmem>>, vector<1x4x128xbf16>
    %60 = vector.shape_cast %59 : vector<1x4x128xbf16> to vector<4x128xbf16>
    %cst_99 = arith.constant dense<0.000000e+00> : vector<128x128xf32>
    %61 = tpu.matmul %58, %60, %cst_99 {dimension_numbers = #tpu.dot_dimension_numbers<[1], [0], [0], [1], [0, 0, 1, 1], [], []>} : vector<128x4xbf16>, vector<4x128xbf16>, vector<128x128xf32> -> vector<128x128xf32>
    %62 = arith.addf %56, %61 : vector<128x128xf32>
    %c0_100 = arith.constant 0 : index
    %c0_101 = arith.constant 0 : index
    %63 = vector.load %arg3[%c0_100, %c0_101] : memref<1x128xf32, #tpu.memory_space<vmem>>, vector<1x128xf32>
    %64 = vector.broadcast %63 : vector<1x128xf32> to vector<128x128xf32>
    %65 = arith.addf %62, %64 : vector<128x128xf32>
    %cst_102 = arith.constant 0.000000e+00 : f32
    %66 = vector.broadcast %cst_102 : f32 to vector<128x128xf32>
    %67 = arith.maximumf %65, %66 : vector<128x128xf32>
    %68 = vector.shape_cast %67 : vector<128x128xf32> to vector<2x8x8x128xf32>
    %69 = arith.truncf %68 : vector<2x8x8x128xf32> to vector<2x8x8x128xbf16>
    %c0_103 = arith.constant 0 : index
    %c1_104 = arith.constant 1 : index
    %c1_105 = arith.constant 1 : index
    %c0_106 = arith.constant 0 : index
    %70 = vector.load %arg8[%c0_103, %c1_104, %c1_105, %c0_106] : memref<2x10x10x128xbf16, #tpu.memory_space<vmem>>, vector<2x8x8x128xbf16>
    tpu.vector_store %arg8[%c0_103, %c1_104, %c1_105, %c0_106], %69 {strides = array<i32>} : memref<2x10x10x128xbf16, #tpu.memory_space<vmem>>, vector<2x8x8x128xbf16>,
    %cst_107 = arith.constant 0.000000e+00 : f32
    %71 = vector.broadcast %cst_107 : f32 to vector<128x128xf32>
    %c0_108 = arith.constant 0 : index
    %c0_109 = arith.constant 0 : index
    %c0_110 = arith.constant 0 : index
    %c0_111 = arith.constant 0 : index
    %72 = vector.load %arg8[%c0_108, %c0_109, %c0_110, %c0_111] : memref<2x10x10x128xbf16, #tpu.memory_space<vmem>>, vector<2x8x8x128xbf16>
    %73 = vector.shape_cast %72 : vector<2x8x8x128xbf16> to vector<128x128xbf16>
    %c0_112 = arith.constant 0 : index
    %c0_113 = arith.constant 0 : index
    %c0_114 = arith.constant 0 : index
    %74 = vector.load %arg4[%c0_112, %c0_113, %c0_114] : memref<9x128x128xbf16, #tpu.memory_space<vmem>>, vector<1x128x128xbf16>
    %75 = vector.shape_cast %74 : vector<1x128x128xbf16> to vector<128x128xbf16>
    %cst_115 = arith.constant dense<0.000000e+00> : vector<128x128xf32>
    %76 = tpu.matmul %73, %75, %cst_115 {dimension_numbers = #tpu.dot_dimension_numbers<[1], [0], [0], [1], [0, 0, 1, 1], [], []>} : vector<128x128xbf16>, vector<128x128xbf16>, vector<128x128xf32> -> vector<128x128xf32>
    %77 = arith.addf %71, %76 : vector<128x128xf32>
    %c0_116 = arith.constant 0 : index
    %c0_117 = arith.constant 0 : index
    %c1_118 = arith.constant 1 : index
    %c0_119 = arith.constant 0 : index
    %78 = vector.load %arg8[%c0_116, %c0_117, %c1_118, %c0_119] : memref<2x10x10x128xbf16, #tpu.memory_space<vmem>>, vector<2x8x8x128xbf16>
    %79 = vector.shape_cast %78 : vector<2x8x8x128xbf16> to vector<128x128xbf16>
    %c1_120 = arith.constant 1 : index
    %c0_121 = arith.constant 0 : index
    %c0_122 = arith.constant 0 : index
    %80 = vector.load %arg4[%c1_120, %c0_121, %c0_122] : memref<9x128x128xbf16, #tpu.memory_space<vmem>>, vector<1x128x128xbf16>
    %81 = vector.shape_cast %80 : vector<1x128x128xbf16> to vector<128x128xbf16>
    %cst_123 = arith.constant dense<0.000000e+00> : vector<128x128xf32>
    %82 = tpu.matmul %79, %81, %cst_123 {dimension_numbers = #tpu.dot_dimension_numbers<[1], [0], [0], [1], [0, 0, 1, 1], [], []>} : vector<128x128xbf16>, vector<128x128xbf16>, vector<128x128xf32> -> vector<128x128xf32>
    %83 = arith.addf %77, %82 : vector<128x128xf32>
    %c0_124 = arith.constant 0 : index
    %c0_125 = arith.constant 0 : index
    %c2_126 = arith.constant 2 : index
    %c0_127 = arith.constant 0 : index
    %84 = vector.load %arg8[%c0_124, %c0_125, %c2_126, %c0_127] : memref<2x10x10x128xbf16, #tpu.memory_space<vmem>>, vector<2x8x8x128xbf16>
    %85 = vector.shape_cast %84 : vector<2x8x8x128xbf16> to vector<128x128xbf16>
    %c2_128 = arith.constant 2 : index
    %c0_129 = arith.constant 0 : index
    %c0_130 = arith.constant 0 : index
    %86 = vector.load %arg4[%c2_128, %c0_129, %c0_130] : memref<9x128x128xbf16, #tpu.memory_space<vmem>>, vector<1x128x128xbf16>
    %87 = vector.shape_cast %86 : vector<1x128x128xbf16> to vector<128x128xbf16>
    %cst_131 = arith.constant dense<0.000000e+00> : vector<128x128xf32>
    %88 = tpu.matmul %85, %87, %cst_131 {dimension_numbers = #tpu.dot_dimension_numbers<[1], [0], [0], [1], [0, 0, 1, 1], [], []>} : vector<128x128xbf16>, vector<128x128xbf16>, vector<128x128xf32> -> vector<128x128xf32>
    %89 = arith.addf %83, %88 : vector<128x128xf32>
    %c0_132 = arith.constant 0 : index
    %c1_133 = arith.constant 1 : index
    %c0_134 = arith.constant 0 : index
    %c0_135 = arith.constant 0 : index
    %90 = vector.load %arg8[%c0_132, %c1_133, %c0_134, %c0_135] : memref<2x10x10x128xbf16, #tpu.memory_space<vmem>>, vector<2x8x8x128xbf16>
    %91 = vector.shape_cast %90 : vector<2x8x8x128xbf16> to vector<128x128xbf16>
    %c3_136 = arith.constant 3 : index
    %c0_137 = arith.constant 0 : index
    %c0_138 = arith.constant 0 : index
    %92 = vector.load %arg4[%c3_136, %c0_137, %c0_138] : memref<9x128x128xbf16, #tpu.memory_space<vmem>>, vector<1x128x128xbf16>
    %93 = vector.shape_cast %92 : vector<1x128x128xbf16> to vector<128x128xbf16>
    %cst_139 = arith.constant dense<0.000000e+00> : vector<128x128xf32>
    %94 = tpu.matmul %91, %93, %cst_139 {dimension_numbers = #tpu.dot_dimension_numbers<[1], [0], [0], [1], [0, 0, 1, 1], [], []>} : vector<128x128xbf16>, vector<128x128xbf16>, vector<128x128xf32> -> vector<128x128xf32>
    %95 = arith.addf %89, %94 : vector<128x128xf32>
    %c0_140 = arith.constant 0 : index
    %c1_141 = arith.constant 1 : index
    %c1_142 = arith.constant 1 : index
    %c0_143 = arith.constant 0 : index
    %96 = vector.load %arg8[%c0_140, %c1_141, %c1_142, %c0_143] : memref<2x10x10x128xbf16, #tpu.memory_space<vmem>>, vector<2x8x8x128xbf16>
    %97 = vector.shape_cast %96 : vector<2x8x8x128xbf16> to vector<128x128xbf16>
    %c4_144 = arith.constant 4 : index
    %c0_145 = arith.constant 0 : index
    %c0_146 = arith.constant 0 : index
    %98 = vector.load %arg4[%c4_144, %c0_145, %c0_146] : memref<9x128x128xbf16, #tpu.memory_space<vmem>>, vector<1x128x128xbf16>
    %99 = vector.shape_cast %98 : vector<1x128x128xbf16> to vector<128x128xbf16>
    %cst_147 = arith.constant dense<0.000000e+00> : vector<128x128xf32>
    %100 = tpu.matmul %97, %99, %cst_147 {dimension_numbers = #tpu.dot_dimension_numbers<[1], [0], [0], [1], [0, 0, 1, 1], [], []>} : vector<128x128xbf16>, vector<128x128xbf16>, vector<128x128xf32> -> vector<128x128xf32>
    %101 = arith.addf %95, %100 : vector<128x128xf32>
    %c0_148 = arith.constant 0 : index
    %c1_149 = arith.constant 1 : index
    %c2_150 = arith.constant 2 : index
    %c0_151 = arith.constant 0 : index
    %102 = vector.load %arg8[%c0_148, %c1_149, %c2_150, %c0_151] : memref<2x10x10x128xbf16, #tpu.memory_space<vmem>>, vector<2x8x8x128xbf16>
    %103 = vector.shape_cast %102 : vector<2x8x8x128xbf16> to vector<128x128xbf16>
    %c5_152 = arith.constant 5 : index
    %c0_153 = arith.constant 0 : index
    %c0_154 = arith.constant 0 : index
    %104 = vector.load %arg4[%c5_152, %c0_153, %c0_154] : memref<9x128x128xbf16, #tpu.memory_space<vmem>>, vector<1x128x128xbf16>
    %105 = vector.shape_cast %104 : vector<1x128x128xbf16> to vector<128x128xbf16>
    %cst_155 = arith.constant dense<0.000000e+00> : vector<128x128xf32>
    %106 = tpu.matmul %103, %105, %cst_155 {dimension_numbers = #tpu.dot_dimension_numbers<[1], [0], [0], [1], [0, 0, 1, 1], [], []>} : vector<128x128xbf16>, vector<128x128xbf16>, vector<128x128xf32> -> vector<128x128xf32>
    %107 = arith.addf %101, %106 : vector<128x128xf32>
    %c0_156 = arith.constant 0 : index
    %c2_157 = arith.constant 2 : index
    %c0_158 = arith.constant 0 : index
    %c0_159 = arith.constant 0 : index
    %108 = vector.load %arg8[%c0_156, %c2_157, %c0_158, %c0_159] : memref<2x10x10x128xbf16, #tpu.memory_space<vmem>>, vector<2x8x8x128xbf16>
    %109 = vector.shape_cast %108 : vector<2x8x8x128xbf16> to vector<128x128xbf16>
    %c6_160 = arith.constant 6 : index
    %c0_161 = arith.constant 0 : index
    %c0_162 = arith.constant 0 : index
    %110 = vector.load %arg4[%c6_160, %c0_161, %c0_162] : memref<9x128x128xbf16, #tpu.memory_space<vmem>>, vector<1x128x128xbf16>
    %111 = vector.shape_cast %110 : vector<1x128x128xbf16> to vector<128x128xbf16>
    %cst_163 = arith.constant dense<0.000000e+00> : vector<128x128xf32>
    %112 = tpu.matmul %109, %111, %cst_163 {dimension_numbers = #tpu.dot_dimension_numbers<[1], [0], [0], [1], [0, 0, 1, 1], [], []>} : vector<128x128xbf16>, vector<128x128xbf16>, vector<128x128xf32> -> vector<128x128xf32>
    %113 = arith.addf %107, %112 : vector<128x128xf32>
    %c0_164 = arith.constant 0 : index
    %c2_165 = arith.constant 2 : index
    %c1_166 = arith.constant 1 : index
    %c0_167 = arith.constant 0 : index
    %114 = vector.load %arg8[%c0_164, %c2_165, %c1_166, %c0_167] : memref<2x10x10x128xbf16, #tpu.memory_space<vmem>>, vector<2x8x8x128xbf16>
    %115 = vector.shape_cast %114 : vector<2x8x8x128xbf16> to vector<128x128xbf16>
    %c7_168 = arith.constant 7 : index
    %c0_169 = arith.constant 0 : index
    %c0_170 = arith.constant 0 : index
    %116 = vector.load %arg4[%c7_168, %c0_169, %c0_170] : memref<9x128x128xbf16, #tpu.memory_space<vmem>>, vector<1x128x128xbf16>
    %117 = vector.shape_cast %116 : vector<1x128x128xbf16> to vector<128x128xbf16>
    %cst_171 = arith.constant dense<0.000000e+00> : vector<128x128xf32>
    %118 = tpu.matmul %115, %117, %cst_171 {dimension_numbers = #tpu.dot_dimension_numbers<[1], [0], [0], [1], [0, 0, 1, 1], [], []>} : vector<128x128xbf16>, vector<128x128xbf16>, vector<128x128xf32> -> vector<128x128xf32>
    %119 = arith.addf %113, %118 : vector<128x128xf32>
    %c0_172 = arith.constant 0 : index
    %c2_173 = arith.constant 2 : index
    %c2_174 = arith.constant 2 : index
    %c0_175 = arith.constant 0 : index
    %120 = vector.load %arg8[%c0_172, %c2_173, %c2_174, %c0_175] : memref<2x10x10x128xbf16, #tpu.memory_space<vmem>>, vector<2x8x8x128xbf16>
    %121 = vector.shape_cast %120 : vector<2x8x8x128xbf16> to vector<128x128xbf16>
    %c8_176 = arith.constant 8 : index
    %c0_177 = arith.constant 0 : index
    %c0_178 = arith.constant 0 : index
    %122 = vector.load %arg4[%c8_176, %c0_177, %c0_178] : memref<9x128x128xbf16, #tpu.memory_space<vmem>>, vector<1x128x128xbf16>
    %123 = vector.shape_cast %122 : vector<1x128x128xbf16> to vector<128x128xbf16>
    %cst_179 = arith.constant dense<0.000000e+00> : vector<128x128xf32>
    %124 = tpu.matmul %121, %123, %cst_179 {dimension_numbers = #tpu.dot_dimension_numbers<[1], [0], [0], [1], [0, 0, 1, 1], [], []>} : vector<128x128xbf16>, vector<128x128xbf16>, vector<128x128xf32> -> vector<128x128xf32>
    %125 = arith.addf %119, %124 : vector<128x128xf32>
    %c0_180 = arith.constant 0 : index
    %c1_181 = arith.constant 1 : index
    %c1_182 = arith.constant 1 : index
    %c0_183 = arith.constant 0 : index
    %c0_184 = arith.constant 0 : index
    %c0_185 = arith.constant 0 : index
    %126 = vector.load %arg1[%c0_180, %c1_181, %c1_182, %c0_183, %c0_184, %c0_185] : memref<2x2x2x9x9x4xbf16, #tpu.memory_space<vmem>>, vector<2x1x1x8x8x4xbf16>
    %127 = vector.shape_cast %126 : vector<2x1x1x8x8x4xbf16> to vector<128x4xbf16>
    %c0_186 = arith.constant 0 : index
    %c0_187 = arith.constant 0 : index
    %128 = vector.load %arg6[%c0_186, %c0_187] : memref<4x128xbf16, #tpu.memory_space<vmem>>, vector<4x128xbf16>
    %cst_188 = arith.constant dense<0.000000e+00> : vector<128x128xf32>
    %129 = tpu.matmul %127, %128, %cst_188 {dimension_numbers = #tpu.dot_dimension_numbers<[1], [0], [0], [1], [0, 0, 1, 1], [], []>} : vector<128x4xbf16>, vector<4x128xbf16>, vector<128x128xf32> -> vector<128x128xf32>
    %130 = arith.addf %125, %129 : vector<128x128xf32>
    %c0_189 = arith.constant 0 : index
    %c0_190 = arith.constant 0 : index
    %131 = vector.load %arg5[%c0_189, %c0_190] : memref<1x128xf32, #tpu.memory_space<vmem>>, vector<1x128xf32>
    %132 = vector.broadcast %131 : vector<1x128xf32> to vector<128x128xf32>
    %133 = arith.addf %130, %132 : vector<128x128xf32>
    %cst_191 = arith.constant 0.000000e+00 : f32
    %134 = vector.broadcast %cst_191 : f32 to vector<128x128xf32>
    %135 = arith.maximumf %133, %134 : vector<128x128xf32>
    %136 = vector.shape_cast %135 : vector<128x128xf32> to vector<2x8x8x128xf32>
    %c0_192 = arith.constant 0 : index
    %c0_193 = arith.constant 0 : index
    %c0_194 = arith.constant 0 : index
    %c0_195 = arith.constant 0 : index
    %137 = vector.load %arg7[%c0_192, %c0_193, %c0_194, %c0_195] : memref<2x8x8x128xf32, #tpu.memory_space<vmem>>, vector<2x8x8x128xf32>
    tpu.vector_store %arg7[%c0_192, %c0_193, %c0_194, %c0_195], %136 {strides = array<i32>} : memref<2x8x8x128xf32, #tpu.memory_space<vmem>>, vector<2x8x8x128xf32>,
    return
  }
  func.func @transform_0(%arg0: i32) -> (i32, i32, i32, i32, i32, i32) {
    %c0_i32 = arith.constant 0 : i32
    %c0_i32_0 = arith.constant 0 : i32
    %c0_i32_1 = arith.constant 0 : i32
    %c0_i32_2 = arith.constant 0 : i32
    %c0_i32_3 = arith.constant 0 : i32
    %c0_i32_4 = arith.constant 0 : i32
    return %arg0, %c0_i32, %c0_i32_0, %c0_i32_1, %c0_i32_2, %c0_i32_3 : i32, i32, i32, i32, i32, i32
  }
  func.func @transform_1(%arg0: i32) -> (i32, i32, i32) {
    %c0_i32 = arith.constant 0 : i32
    %c0_i32_0 = arith.constant 0 : i32
    %c0_i32_1 = arith.constant 0 : i32
    %c0_i32_2 = arith.constant 0 : i32
    return %c0_i32, %c0_i32_0, %c0_i32_1 : i32, i32, i32
  }
  func.func @transform_2(%arg0: i32) -> (i32, i32) {
    %c0_i32 = arith.constant 0 : i32
    %c0_i32_0 = arith.constant 0 : i32
    %c0_i32_1 = arith.constant 0 : i32
    return %c0_i32, %c0_i32_0 : i32, i32
  }
  func.func @transform_3(%arg0: i32) -> (i32, i32, i32) {
    %c0_i32 = arith.constant 0 : i32
    %c0_i32_0 = arith.constant 0 : i32
    %c0_i32_1 = arith.constant 0 : i32
    %c0_i32_2 = arith.constant 0 : i32
    return %c0_i32, %c0_i32_0, %c0_i32_1 : i32, i32, i32
  }
  func.func @transform_4(%arg0: i32) -> (i32, i32) {
    %c0_i32 = arith.constant 0 : i32
    %c0_i32_0 = arith.constant 0 : i32
    %c0_i32_1 = arith.constant 0 : i32
    return %c0_i32, %c0_i32_0 : i32, i32
  }
  func.func @transform_5(%arg0: i32) -> (i32, i32) {
    %c0_i32 = arith.constant 0 : i32
    %c0_i32_0 = arith.constant 0 : i32
    %c0_i32_1 = arith.constant 0 : i32
    return %c0_i32, %c0_i32_0 : i32, i32
  }
  func.func @transform_6(%arg0: i32) -> (i32, i32, i32, i32) {
    %c0_i32 = arith.constant 0 : i32
    %c0_i32_0 = arith.constant 0 : i32
    %c0_i32_1 = arith.constant 0 : i32
    %c0_i32_2 = arith.constant 0 : i32
    return %arg0, %c0_i32, %c0_i32_0, %c0_i32_1 : i32, i32, i32, i32
  }
}

</mosaic_0001>

<llo_original>
// kernel: residual_block.1
$region0: #{residual_block.1}
  #allocation0 [shape = 'u32[]', space=smem, size = 0x4, offset = 0x4, fixed_abs, tag = 'smem constant byte address 0x4 - core index']
  #allocation1 [shape = 'u32[72,128]{1,0:T(1,128)}', space=vmem, size = 0x9000, scoped, tag = 'internal scratch']
  #allocation2 [shape = 'bf16[2,10,10,128]{3,2,1,0:T(8,128)(2,1)}', space=vmem, size = 0x14000, scoped, tag = 'scratch operand']
  %s0 = inlined_call_operand.vmem [shape: bf16[2,2,2,9,9,4], index: 0, kind: input, shape index: {}]
  %s1 = inlined_call_operand.vmem [shape: bf16[9,4,128], index: 1, kind: input, shape index: {}]
  %s2 = inlined_call_operand.vmem [shape: f32[1,128], index: 2, kind: input, shape index: {}]
  %s3 = inlined_call_operand.vmem [shape: bf16[9,128,128], index: 3, kind: input, shape index: {}]
  %s4 = inlined_call_operand.vmem [shape: f32[1,128], index: 4, kind: input, shape index: {}]
  %s5 = inlined_call_operand.vmem [shape: bf16[4,128], index: 5, kind: input, shape index: {}]
  %s6 = inlined_call_operand.vmem [shape: f32[2,8,8,128], index: 6, kind: output, shape index: {}]
  %s7 = sld [smem:[#allocation0]]
  $region34: #{residual_block.1} parent=0
    _
  %s9 = ssub.s32 1, %s7
  %s10 = scalar_select 0, %s9, %s7
  // Predicated region
  $region2: #{residual_block.1} parent=0 // pred_check
    _
  $region3: #{residual_block.1} parent=0 // pred_check_branch
    %12 = sbr.rel (0) target = $region5
  $region4: #{residual_block.1} parent=0 // pred_region
    _
  $region5: #{residual_block.1} parent=0 // pred_fallthru
    _
  // Predicated region
  $region6: #{residual_block.1} parent=0 // pred_check
    _
  $region7: #{residual_block.1} parent=0 // pred_check_branch
    %14 = sbr.rel (0) target = $region9
  $region8: #{residual_block.1} parent=0 // pred_region
    _
  $region9: #{residual_block.1} parent=0 // pred_fallthru
    _
  // Predicated region
  $region10: #{residual_block.1} parent=0 // pred_check
    _
  $region11: #{residual_block.1} parent=0 // pred_check_branch
    %16 = sbr.rel (0) target = $region13
  $region12: #{residual_block.1} parent=0 // pred_region
    _
  $region13: #{residual_block.1} parent=0 // pred_fallthru
    _
  // Predicated region
  $region14: #{residual_block.1} parent=0 // pred_check
    _
  $region15: #{residual_block.1} parent=0 // pred_check_branch
    %18 = sbr.rel (0) target = $region17
  $region16: #{residual_block.1} parent=0 // pred_region
    _
  $region17: #{residual_block.1} parent=0 // pred_fallthru
    _
  // Predicated region
  $region18: #{residual_block.1} parent=0 // pred_check
    _
  $region19: #{residual_block.1} parent=0 // pred_check_branch
    %20 = sbr.rel (0) target = $region21
  $region20: #{residual_block.1} parent=0 // pred_region
    _
  $region21: #{residual_block.1} parent=0 // pred_fallthru
    _
  // Predicated region
  $region22: #{residual_block.1} parent=0 // pred_check
    _
  $region23: #{residual_block.1} parent=0 // pred_check_branch
    %22 = sbr.rel (0) target = $region25
  $region24: #{residual_block.1} parent=0 // pred_region
    _
  $region25: #{residual_block.1} parent=0 // pred_fallthru
    _
  %24 = vst [vmem:[#allocation2] sm:$0xf] 0
  %25 = vst [vmem:[#allocation2 + $0x4] sm:$0x1] 0
  %26 = vst [vmem:[#allocation2 + $0x50] sm:$0xf] 0
  %27 = vst [vmem:[#allocation2 + $0x54] sm:$0x1] 0
  %s28 = scalar_lea.vmem [#allocation2], 72
  %29 = vst [vmem:[%s28] sm:$0xf] 0
  %30 = vst [vmem:[%s28 + $0x4] sm:$0x1] 0
  %31 = vst [vmem:[%s28 + $0x50] sm:$0xf] 0
  %32 = vst [vmem:[%s28 + $0x54] sm:$0x1] 0
  %vm33 = vcmask 1040384
  %vm34 = vsmask.f32 256
  %vm35 = vmand %vm33, %vm34
  %v36 = vld [vmem:[#allocation2] sm:$0x1]
  %v37 = vsel %vm35, 0, %v36
  %38 = vst [vmem:[#allocation2] sm:$0x1] %v37
  %v39 = vld [vmem:[#allocation2 + $0x8] sm:$0x1]
  %v40 = vsel %vm35, 0, %v39
  %41 = vst [vmem:[#allocation2 + $0x8] sm:$0x1] %v40
  %v42 = vld [vmem:[#allocation2 + $0x10] sm:$0x1]
  %v43 = vsel %vm35, 0, %v42
  %44 = vst [vmem:[#allocation2 + $0x10] sm:$0x1] %v43
  %v45 = vld [vmem:[#allocation2 + $0x18] sm:$0x1]
  %v46 = vsel %vm35, 0, %v45
  %47 = vst [vmem:[#allocation2 + $0x18] sm:$0x1] %v46
  %v48 = vld [vmem:[#allocation2 + $0x20] sm:$0x1]
  %v49 = vsel %vm35, 0, %v48
  %50 = vst [vmem:[#allocation2 + $0x20] sm:$0x1] %v49
  %v51 = vld [vmem:[#allocation2 + $0x28] sm:$0x1]
  %v52 = vsel %vm35, 0, %v51
  %53 = vst [vmem:[#allocation2 + $0x28] sm:$0x1] %v52
  %v54 = vld [vmem:[#allocation2 + $0x30] sm:$0x1]
  %v55 = vsel %vm35, 0, %v54
  %56 = vst [vmem:[#allocation2 + $0x30] sm:$0x1] %v55
  %v57 = vld [vmem:[#allocation2 + $0x38] sm:$0x1]
  %v58 = vsel %vm35, 0, %v57
  %59 = vst [vmem:[#allocation2 + $0x38] sm:$0x1] %v58
  %v60 = vld [vmem:[#allocation2 + $0x40] sm:$0x1]
  %v61 = vsel %vm35, 0, %v60
  %62 = vst [vmem:[#allocation2 + $0x40] sm:$0x1] %v61
  %v63 = vld [vmem:[#allocation2 + $0x48] sm:$0x1]
  %v64 = vsel %vm35, 0, %v63
  %65 = vst [vmem:[#allocation2 + $0x48] sm:$0x1] %v64
  %v66 = vld [vmem:[#allocation2 + $0x50] sm:$0x1]
  %v67 = vsel %vm35, 0, %v66
  %68 = vst [vmem:[#allocation2 + $0x50] sm:$0x1] %v67
  %v69 = vld [vmem:[#allocation2 + $0x58] sm:$0x1]
  %v70 = vsel %vm35, 0, %v69
  %71 = vst [vmem:[#allocation2 + $0x58] sm:$0x1] %v70
  %v72 = vld [vmem:[#allocation2 + $0x60] sm:$0x1]
  %v73 = vsel %vm35, 0, %v72
  %74 = vst [vmem:[#allocation2 + $0x60] sm:$0x1] %v73
  %v75 = vld [vmem:[#allocation2 + $0x68] sm:$0x1]
  %v76 = vsel %vm35, 0, %v75
  %77 = vst [vmem:[#allocation2 + $0x68] sm:$0x1] %v76
  %v78 = vld [vmem:[#allocation2 + $0x70] sm:$0x1]
  %v79 = vsel %vm35, 0, %v78
  %80 = vst [vmem:[#allocation2 + $0x70] sm:$0x1] %v79
  %v81 = vld [vmem:[#allocation2 + $0x78] sm:$0x1]
  %v82 = vsel %vm35, 0, %v81
  %83 = vst [vmem:[#allocation2 + $0x78] sm:$0x1] %v82
  %v84 = vld [vmem:[#allocation2 + $0x80] sm:$0x1]
  %v85 = vsel %vm35, 0, %v84
  %86 = vst [vmem:[#allocation2 + $0x80] sm:$0x1] %v85
  %v87 = vld [vmem:[#allocation2 + $0x88] sm:$0x1]
  %v88 = vsel %vm35, 0, %v87
  %89 = vst [vmem:[#allocation2 + $0x88] sm:$0x1] %v88
  %v90 = vld [vmem:[#allocation2 + $0x90] sm:$0x1]
  %v91 = vsel %vm35, 0, %v90
  %92 = vst [vmem:[#allocation2 + $0x90] sm:$0x1] %v91
  %v93 = vld [vmem:[#allocation2 + $0x98] sm:$0x1]
  %v94 = vsel %vm35, 0, %v93
  %95 = vst [vmem:[#allocation2 + $0x98] sm:$0x1] %v94
  %vm96 = vsmask.f32 7938
  %vm97 = vmand %vm33, %vm96
  %v98 = vld [vmem:[#allocation2 + $0x4] sm:$0x1]
  %v99 = vsel %vm97, 0, %v98
  %100 = vst [vmem:[#allocation2 + $0x4] sm:$0x1] %v99
  %v101 = vld [vmem:[#allocation2 + $0xc] sm:$0x1]
  %v102 = vsel %vm97, 0, %v101
  %103 = vst [vmem:[#allocation2 + $0xc] sm:$0x1] %v102
  %v104 = vld [vmem:[#allocation2 + $0x14] sm:$0x1]
  %v105 = vsel %vm97, 0, %v104
  %106 = vst [vmem:[#allocation2 + $0x14] sm:$0x1] %v105
  %v107 = vld [vmem:[#allocation2 + $0x1c] sm:$0x1]
  %v108 = vsel %vm97, 0, %v107
  %109 = vst [vmem:[#allocation2 + $0x1c] sm:$0x1] %v108
  %v110 = vld [vmem:[#allocation2 + $0x24] sm:$0x1]
  %v111 = vsel %vm97, 0, %v110
  %112 = vst [vmem:[#allocation2 + $0x24] sm:$0x1] %v111
  %v113 = vld [vmem:[#allocation2 + $0x2c] sm:$0x1]
  %v114 = vsel %vm97, 0, %v113
  %115 = vst [vmem:[#allocation2 + $0x2c] sm:$0x1] %v114
  %v116 = vld [vmem:[#allocation2 + $0x34] sm:$0x1]
  %v117 = vsel %vm97, 0, %v116
  %118 = vst [vmem:[#allocation2 + $0x34] sm:$0x1] %v117
  %v119 = vld [vmem:[#allocation2 + $0x3c] sm:$0x1]
  %v120 = vsel %vm97, 0, %v119
  %121 = vst [vmem:[#allocation2 + $0x3c] sm:$0x1] %v120
  %v122 = vld [vmem:[#allocation2 + $0x44] sm:$0x1]
  %v123 = vsel %vm97, 0, %v122
  %124 = vst [vmem:[#allocation2 + $0x44] sm:$0x1] %v123
  %v125 = vld [vmem:[#allocation2 + $0x4c] sm:$0x1]
  %v126 = vsel %vm97, 0, %v125
  %127 = vst [vmem:[#allocation2 + $0x4c] sm:$0x1] %v126
  %v128 = vld [vmem:[#allocation2 + $0x54] sm:$0x1]
  %v129 = vsel %vm97, 0, %v128
  %130 = vst [vmem:[#allocation2 + $0x54] sm:$0x1] %v129
  %v131 = vld [vmem:[#allocation2 + $0x5c] sm:$0x1]
  %v132 = vsel %vm97, 0, %v131
  %133 = vst [vmem:[#allocation2 + $0x5c] sm:$0x1] %v132
  %v134 = vld [vmem:[#allocation2 + $0x64] sm:$0x1]
  %v135 = vsel %vm97, 0, %v134
  %136 = vst [vmem:[#allocation2 + $0x64] sm:$0x1] %v135
  %v137 = vld [vmem:[#allocation2 + $0x6c] sm:$0x1]
  %v138 = vsel %vm97, 0, %v137
  %139 = vst [vmem:[#allocation2 + $0x6c] sm:$0x1] %v138
  %v140 = vld [vmem:[#allocation2 + $0x74] sm:$0x1]
  %v141 = vsel %vm97, 0, %v140
  %142 = vst [vmem:[#allocation2 + $0x74] sm:$0x1] %v141
  %v143 = vld [vmem:[#allocation2 + $0x7c] sm:$0x1]
  %v144 = vsel %vm97, 0, %v143
  %145 = vst [vmem:[#allocation2 + $0x7c] sm:$0x1] %v144
  %v146 = vld [vmem:[#allocation2 + $0x84] sm:$0x1]
  %v147 = vsel %vm97, 0, %v146
  %148 = vst [vmem:[#allocation2 + $0x84] sm:$0x1] %v147
  %v149 = vld [vmem:[#allocation2 + $0x8c] sm:$0x1]
  %v150 = vsel %vm97, 0, %v149
  %151 = vst [vmem:[#allocation2 + $0x8c] sm:$0x1] %v150
  %v152 = vld [vmem:[#allocation2 + $0x94] sm:$0x1]
  %v153 = vsel %vm97, 0, %v152
  %154 = vst [vmem:[#allocation2 + $0x94] sm:$0x1] %v153
  %v155 = vld [vmem:[#allocation2 + $0x9c] sm:$0x1]
  %v156 = vsel %vm97, 0, %v155
  %157 = vst [vmem:[#allocation2 + $0x9c] sm:$0x1] %v156
  %v158 = vld [vmem:[%s0] sm:$0xf]
  %v159 = vld [vmem:[%s0 + $0x8] sm:$0xf]
  %v160 = vld [vmem:[%s0 + $0x10] sm:$0xf]
  %v161 = vld [vmem:[%s0 + $0x18] sm:$0xf]
  %v162 = vld [vmem:[%s0 + $0x20] sm:$0xf]
  %v163 = vld [vmem:[%s0 + $0x28] sm:$0xf]
  %v164 = vld [vmem:[%s0 + $0x30] sm:$0xf]
  %v165 = vld [vmem:[%s0 + $0x38] sm:$0xf]
  %v166 = vld [vmem:[%s0 + $0x120] sm:$0xf]
  %v167 = vld [vmem:[%s0 + $0x128] sm:$0xf]
  %v168 = vld [vmem:[%s0 + $0x130] sm:$0xf]
  %v169 = vld [vmem:[%s0 + $0x138] sm:$0xf]
  %v170 = vld [vmem:[%s0 + $0x140] sm:$0xf]
  %v171 = vld [vmem:[%s0 + $0x148] sm:$0xf]
  %v172 = vld [vmem:[%s0 + $0x150] sm:$0xf]
  %v173 = vld [vmem:[%s0 + $0x158] sm:$0xf]
  %v174 = vld [vmem:[%s1] sm:$0x3]
  %s175 = scalar_lea.vmem %s0, 72
  %v176 = vld [vmem:[%s175] sm:$0xf]
  %v177 = vld [vmem:[%s175 + $0x8] sm:$0xf]
  %v178 = vld [vmem:[%s175 + $0x10] sm:$0xf]
  %v179 = vld [vmem:[%s175 + $0x18] sm:$0xf]
  %v180 = vld [vmem:[%s175 + $0x20] sm:$0xf]
  %v181 = vld [vmem:[%s175 + $0x28] sm:$0xf]
  %v182 = vld [vmem:[%s175 + $0x30] sm:$0xf]
  %v183 = vld [vmem:[%s175 + $0x38] sm:$0xf]
  %v184 = vld [vmem:[%s175 + $0x120] sm:$0xf]
  %v185 = vld [vmem:[%s175 + $0x128] sm:$0xf]
  %v186 = vld [vmem:[%s175 + $0x130] sm:$0xf]
  %v187 = vld [vmem:[%s175 + $0x138] sm:$0xf]
  %v188 = vld [vmem:[%s175 + $0x140] sm:$0xf]
  %v189 = vld [vmem:[%s175 + $0x148] sm:$0xf]
  %v190 = vld [vmem:[%s175 + $0x150] sm:$0xf]
  %v191 = vld [vmem:[%s175 + $0x158] sm:$0xf]
  %s192 = scalar_lea.vmem %s1, 2
  %v193 = vld [vmem:[%s192] sm:$0x3]
  %v210 = vunpack.c.l.b16 %v176
  %v211 = vunpack.c.l.b16 %v177
  %v212 = vunpack.c.l.b16 %v178
  %v213 = vunpack.c.l.b16 %v179
  %v214 = vunpack.c.l.b16 %v180
  %v215 = vunpack.c.l.b16 %v181
  %v216 = vunpack.c.l.b16 %v182
  %v217 = vunpack.c.l.b16 %v183
  %v218 = vunpack.c.l.b16 %v184
  %v219 = vunpack.c.l.b16 %v185
  %v220 = vunpack.c.l.b16 %v186
  %v221 = vunpack.c.l.b16 %v187
  %v222 = vunpack.c.l.b16 %v188
  %v223 = vunpack.c.l.b16 %v189
  %v224 = vunpack.c.l.b16 %v190
  %v225 = vunpack.c.l.b16 %v191
  %v226 = vpack.c.b16 %v211, %v210
  %v227 = vpack.c.b16 %v213, %v212
  %v228 = vpack.c.b16 %v215, %v214
  %v229 = vpack.c.b16 %v217, %v216
  %v230 = vpack.c.b16 %v219, %v218
  %v231 = vpack.c.b16 %v221, %v220
  %v232 = vpack.c.b16 %v223, %v222
  %v233 = vpack.c.b16 %v225, %v224
  %vm234 = vcmask 31744
  %v236 = vsel %vm234, %v226, 0
  %v239 = vsel %vm234, %v227, 0
  %v242 = vsel %vm234, %v228, 0
  %v245 = vsel %vm234, %v229, 0
  %v248 = vsel %vm234, %v230, 0
  %v251 = vsel %vm234, %v231, 0
  %v254 = vsel %vm234, %v232, 0
  %v257 = vsel %vm234, %v233, 0
  %vm259 = vcmask 1041408
  %v261 = vsel %vm259, %v193, 0
  %263 = vmatpush.bf16.msra.mxu0 0
  %264 = vmatpush.bf16.msra.mxu0 0
  %265 = vmatpush.bf16.msra.mxu0 0
  %266 = vmatpush.bf16.msra.mxu0 0
  %267 = vmatpush.bf16.msra.mxu0 0
  %268 = vmatpush.bf16.msra.mxu0 0
  %269 = vmatpush.bf16.msra.mxu0 0
  %270 = vmatpush.bf16.msra.mxu0 %v261
  %271 = vmatmul.bf16.gmra.mxu0 %v236
  %v272 = vpop.f32.mrf.mxu0
  %v273 = vadd.f32 0.0, %v272
  %v274 = vpop.f32.mrf.mxu0
  %v275 = vadd.f32 0.0, %v274
  %276 = vmatmul.bf16.gmra.mxu0 %v239
  %v277 = vpop.f32.mrf.mxu0
  %v278 = vadd.f32 0.0, %v277
  %v279 = vpop.f32.mrf.mxu0
  %v280 = vadd.f32 0.0, %v279
  %281 = vmatmul.bf16.gmra.mxu0 %v242
  %v282 = vpop.f32.mrf.mxu0
  %v283 = vadd.f32 0.0, %v282
  %v284 = vpop.f32.mrf.mxu0
  %v285 = vadd.f32 0.0, %v284
  %286 = vmatmul.bf16.gmra.mxu0 %v245
  %v287 = vpop.f32.mrf.mxu0
  %v288 = vadd.f32 0.0, %v287
  %v289 = vpop.f32.mrf.mxu0
  %v290 = vadd.f32 0.0, %v289
  %291 = vmatmul.bf16.gmra.mxu0 %v248
  %v292 = vpop.f32.mrf.mxu0
  %v293 = vadd.f32 0.0, %v292
  %v294 = vpop.f32.mrf.mxu0
  %v295 = vadd.f32 0.0, %v294
  %296 = vmatmul.bf16.gmra.mxu0 %v251
  %v297 = vpop.f32.mrf.mxu0
  %v298 = vadd.f32 0.0, %v297
  %v299 = vpop.f32.mrf.mxu0
  %v300 = vadd.f32 0.0, %v299
  %301 = vmatmul.bf16.gmra.mxu0 %v254
  %v302 = vpop.f32.mrf.mxu0
  %v303 = vadd.f32 0.0, %v302
  %v304 = vpop.f32.mrf.mxu0
  %v305 = vadd.f32 0.0, %v304
  %306 = vmatmul.bf16.gmra.mxu0 %v257
  %v307 = vpop.f32.mrf.mxu0
  %v308 = vadd.f32 0.0, %v307
  %v309 = vpop.f32.mrf.mxu0
  %v310 = vadd.f32 0.0, %v309
  %311 = vdwg.mxu0
  %v328 = vunpack.c.l.b16 %v158
  %v329 = vunpack.c.l.b16 %v159
  %v330 = vunpack.c.l.b16 %v160
  %v331 = vunpack.c.l.b16 %v161
  %v332 = vunpack.c.l.b16 %v162
  %v333 = vunpack.c.l.b16 %v163
  %v334 = vunpack.c.l.b16 %v164
  %v335 = vunpack.c.l.b16 %v165
  %v336 = vunpack.c.l.b16 %v166
  %v337 = vunpack.c.l.b16 %v167
  %v338 = vunpack.c.l.b16 %v168
  %v339 = vunpack.c.l.b16 %v169
  %v340 = vunpack.c.l.b16 %v170
  %v341 = vunpack.c.l.b16 %v171
  %v342 = vunpack.c.l.b16 %v172
  %v343 = vunpack.c.l.b16 %v173
  %v344 = vpack.c.b16 %v329, %v328
  %v345 = vpack.c.b16 %v331, %v330
  %v346 = vpack.c.b16 %v333, %v332
  %v347 = vpack.c.b16 %v335, %v334
  %v348 = vpack.c.b16 %v337, %v336
  %v349 = vpack.c.b16 %v339, %v338
  %v350 = vpack.c.b16 %v341, %v340
  %v351 = vpack.c.b16 %v343, %v342
  %v353 = vsel %vm234, %v344, 0
  %v356 = vsel %vm234, %v345, 0
  %v359 = vsel %vm234, %v346, 0
  %v362 = vsel %vm234, %v347, 0
  %v365 = vsel %vm234, %v348, 0
  %v368 = vsel %vm234, %v349, 0
  %v371 = vsel %vm234, %v350, 0
  %v374 = vsel %vm234, %v351, 0
  %v377 = vsel %vm259, %v174, 0
  %379 = vmatpush.bf16.msra.mxu0 0
  %380 = vmatpush.bf16.msra.mxu0 0
  %381 = vmatpush.bf16.msra.mxu0 0
  %382 = vmatpush.bf16.msra.mxu0 0
  %383 = vmatpush.bf16.msra.mxu0 0
  %384 = vmatpush.bf16.msra.mxu0 0
  %385 = vmatpush.bf16.msra.mxu0 0
  %386 = vmatpush.bf16.msra.mxu0 %v377
  %387 = vmatmul.bf16.gmra.mxu0 %v353
  %v388 = vpop.f32.mrf.mxu0
  %v389 = vadd.f32 %v273, %v388
  %v390 = vpop.f32.mrf.mxu0
  %v391 = vadd.f32 %v275, %v390
  %392 = vmatmul.bf16.gmra.mxu0 %v356
  %v393 = vpop.f32.mrf.mxu0
  %v394 = vadd.f32 %v278, %v393
  %v395 = vpop.f32.mrf.mxu0
  %v396 = vadd.f32 %v280, %v395
  %397 = vmatmul.bf16.gmra.mxu0 %v359
  %v398 = vpop.f32.mrf.mxu0
  %v399 = vadd.f32 %v283, %v398
  %v400 = vpop.f32.mrf.mxu0
  %v401 = vadd.f32 %v285, %v400
  %402 = vmatmul.bf16.gmra.mxu0 %v362
  %v403 = vpop.f32.mrf.mxu0
  %v404 = vadd.f32 %v288, %v403
  %v405 = vpop.f32.mrf.mxu0
  %v406 = vadd.f32 %v290, %v405
  %407 = vmatmul.bf16.gmra.mxu0 %v365
  %v408 = vpop.f32.mrf.mxu0
  %v409 = vadd.f32 %v293, %v408
  %v410 = vpop.f32.mrf.mxu0
  %v411 = vadd.f32 %v295, %v410
  %412 = vmatmul.bf16.gmra.mxu0 %v368
  %v413 = vpop.f32.mrf.mxu0
  %v414 = vadd.f32 %v298, %v413
  %v415 = vpop.f32.mrf.mxu0
  %v416 = vadd.f32 %v300, %v415
  %417 = vmatmul.bf16.gmra.mxu0 %v371
  %v418 = vpop.f32.mrf.mxu0
  %v419 = vadd.f32 %v303, %v418
  %v420 = vpop.f32.mrf.mxu0
  %v421 = vadd.f32 %v305, %v420
  %422 = vmatmul.bf16.gmra.mxu0 %v374
  %v423 = vpop.f32.mrf.mxu0
  %v424 = vadd.f32 %v308, %v423
  %v425 = vpop.f32.mrf.mxu0
  %v426 = vadd.f32 %v310, %v425
  %427 = vdwg.mxu0
  %v428 = vld [vmem:[%s0] sm:$0xf]
  %v429 = vld [vmem:[%s0 + $0x4] sm:$0x1]
  %v430 = vld [vmem:[%s0 + $0x8] sm:$0xf]
  %v431 = vld [vmem:[%s0 + $0xc] sm:$0x1]
  %v432 = vld [vmem:[%s0 + $0x10] sm:$0xf]
  %v433 = vld [vmem:[%s0 + $0x14] sm:$0x1]
  %v434 = vld [vmem:[%s0 + $0x18] sm:$0xf]
  %v435 = vld [vmem:[%s0 + $0x1c] sm:$0x1]
  %v436 = vld [vmem:[%s0 + $0x20] sm:$0xf]
  %v437 = vld [vmem:[%s0 + $0x24] sm:$0x1]
  %v438 = vld [vmem:[%s0 + $0x28] sm:$0xf]
  %v439 = vld [vmem:[%s0 + $0x2c] sm:$0x1]
  %v440 = vld [vmem:[%s0 + $0x30] sm:$0xf]
  %v441 = vld [vmem:[%s0 + $0x34] sm:$0x1]
  %v442 = vld [vmem:[%s0 + $0x38] sm:$0xf]
  %v443 = vld [vmem:[%s0 + $0x3c] sm:$0x1]
  %v444 = vld [vmem:[%s0 + $0x120] sm:$0xf]
  %v445 = vld [vmem:[%s0 + $0x124] sm:$0x1]
  %v446 = vld [vmem:[%s0 + $0x128] sm:$0xf]
  %v447 = vld [vmem:[%s0 + $0x12c] sm:$0x1]
  %v448 = vld [vmem:[%s0 + $0x130] sm:$0xf]
  %v449 = vld [vmem:[%s0 + $0x134] sm:$0x1]
  %v450 = vld [vmem:[%s0 + $0x138] sm:$0xf]
  %v451 = vld [vmem:[%s0 + $0x13c] sm:$0x1]
  %v452 = vld [vmem:[%s0 + $0x140] sm:$0xf]
  %v453 = vld [vmem:[%s0 + $0x144] sm:$0x1]
  %v454 = vld [vmem:[%s0 + $0x148] sm:$0xf]
  %v455 = vld [vmem:[%s0 + $0x14c] sm:$0x1]
  %v456 = vld [vmem:[%s0 + $0x150] sm:$0xf]
  %v457 = vld [vmem:[%s0 + $0x154] sm:$0x1]
  %v458 = vld [vmem:[%s0 + $0x158] sm:$0xf]
  %v459 = vld [vmem:[%s0 + $0x15c] sm:$0x1]
  %vm460 = vsmask.f32 3328
  %vm461 = vsmask.f32 7440
  %vm462 = vmor %vm460, %vm461
  %v464 = vshrl.u32 %v428, 16
  %v466 = vrot.slane %v464, 4
  %v467 = vshll.u32 %v428, 16
  %v469 = vrot.slane %v467, 5
  %v470 = vor.u32 %v466, %v469
  %v471 = vrot.slane %v470, 4
  %v473 = vshll.u32 %v429, 16
  %v475 = vrot.slane %v473, 5
  %v476 = vsel %vm462, %v471, %v475
  %v478 = vshrl.u32 %v430, 16
  %v480 = vrot.slane %v478, 4
  %v481 = vshll.u32 %v430, 16
  %v483 = vrot.slane %v481, 5
  %v484 = vor.u32 %v480, %v483
  %v485 = vrot.slane %v484, 4
  %v487 = vshll.u32 %v431, 16
  %v489 = vrot.slane %v487, 5
  %v490 = vsel %vm462, %v485, %v489
  %v492 = vshrl.u32 %v432, 16
  %v494 = vrot.slane %v492, 4
  %v495 = vshll.u32 %v432, 16
  %v497 = vrot.slane %v495, 5
  %v498 = vor.u32 %v494, %v497
  %v499 = vrot.slane %v498, 4
  %v501 = vshll.u32 %v433, 16
  %v503 = vrot.slane %v501, 5
  %v504 = vsel %vm462, %v499, %v503
  %v506 = vshrl.u32 %v434, 16
  %v508 = vrot.slane %v506, 4
  %v509 = vshll.u32 %v434, 16
  %v511 = vrot.slane %v509, 5
  %v512 = vor.u32 %v508, %v511
  %v513 = vrot.slane %v512, 4
  %v515 = vshll.u32 %v435, 16
  %v517 = vrot.slane %v515, 5
  %v518 = vsel %vm462, %v513, %v517
  %v520 = vshrl.u32 %v436, 16
  %v522 = vrot.slane %v520, 4
  %v523 = vshll.u32 %v436, 16
  %v525 = vrot.slane %v523, 5
  %v526 = vor.u32 %v522, %v525
  %v527 = vrot.slane %v526, 4
  %v529 = vshll.u32 %v437, 16
  %v531 = vrot.slane %v529, 5
  %v532 = vsel %vm462, %v527, %v531
  %v534 = vshrl.u32 %v438, 16
  %v536 = vrot.slane %v534, 4
  %v537 = vshll.u32 %v438, 16
  %v539 = vrot.slane %v537, 5
  %v540 = vor.u32 %v536, %v539
  %v541 = vrot.slane %v540, 4
  %v543 = vshll.u32 %v439, 16
  %v545 = vrot.slane %v543, 5
  %v546 = vsel %vm462, %v541, %v545
  %v548 = vshrl.u32 %v440, 16
  %v550 = vrot.slane %v548, 4
  %v551 = vshll.u32 %v440, 16
  %v553 = vrot.slane %v551, 5
  %v554 = vor.u32 %v550, %v553
  %v555 = vrot.slane %v554, 4
  %v557 = vshll.u32 %v441, 16
  %v559 = vrot.slane %v557, 5
  %v560 = vsel %vm462, %v555, %v559
  %v562 = vshrl.u32 %v442, 16
  %v564 = vrot.slane %v562, 4
  %v565 = vshll.u32 %v442, 16
  %v567 = vrot.slane %v565, 5
  %v568 = vor.u32 %v564, %v567
  %v569 = vrot.slane %v568, 4
  %v571 = vshll.u32 %v443, 16
  %v573 = vrot.slane %v571, 5
  %v574 = vsel %vm462, %v569, %v573
  %v576 = vshrl.u32 %v444, 16
  %v578 = vrot.slane %v576, 4
  %v579 = vshll.u32 %v444, 16
  %v581 = vrot.slane %v579, 5
  %v582 = vor.u32 %v578, %v581
  %v583 = vrot.slane %v582, 4
  %v585 = vshll.u32 %v445, 16
  %v587 = vrot.slane %v585, 5
  %v588 = vsel %vm462, %v583, %v587
  %v590 = vshrl.u32 %v446, 16
  %v592 = vrot.slane %v590, 4
  %v593 = vshll.u32 %v446, 16
  %v595 = vrot.slane %v593, 5
  %v596 = vor.u32 %v592, %v595
  %v597 = vrot.slane %v596, 4
  %v599 = vshll.u32 %v447, 16
  %v601 = vrot.slane %v599, 5
  %v602 = vsel %vm462, %v597, %v601
  %v604 = vshrl.u32 %v448, 16
  %v606 = vrot.slane %v604, 4
  %v607 = vshll.u32 %v448, 16
  %v609 = vrot.slane %v607, 5
  %v610 = vor.u32 %v606, %v609
  %v611 = vrot.slane %v610, 4
  %v613 = vshll.u32 %v449, 16
  %v615 = vrot.slane %v613, 5
  %v616 = vsel %vm462, %v611, %v615
  %v618 = vshrl.u32 %v450, 16
  %v620 = vrot.slane %v618, 4
  %v621 = vshll.u32 %v450, 16
  %v623 = vrot.slane %v621, 5
  %v624 = vor.u32 %v620, %v623
  %v625 = vrot.slane %v624, 4
  %v627 = vshll.u32 %v451, 16
  %v629 = vrot.slane %v627, 5
  %v630 = vsel %vm462, %v625, %v629
  %v632 = vshrl.u32 %v452, 16
  %v634 = vrot.slane %v632, 4
  %v635 = vshll.u32 %v452, 16
  %v637 = vrot.slane %v635, 5
  %v638 = vor.u32 %v634, %v637
  %v639 = vrot.slane %v638, 4
  %v641 = vshll.u32 %v453, 16
  %v643 = vrot.slane %v641, 5
  %v644 = vsel %vm462, %v639, %v643
  %v646 = vshrl.u32 %v454, 16
  %v648 = vrot.slane %v646, 4
  %v649 = vshll.u32 %v454, 16
  %v651 = vrot.slane %v649, 5
  %v652 = vor.u32 %v648, %v651
  %v653 = vrot.slane %v652, 4
  %v655 = vshll.u32 %v455, 16
  %v657 = vrot.slane %v655, 5
  %v658 = vsel %vm462, %v653, %v657
  %v660 = vshrl.u32 %v456, 16
  %v662 = vrot.slane %v660, 4
  %v663 = vshll.u32 %v456, 16
  %v665 = vrot.slane %v663, 5
  %v666 = vor.u32 %v662, %v665
  %v667 = vrot.slane %v666, 4
  %v669 = vshll.u32 %v457, 16
  %v671 = vrot.slane %v669, 5
  %v672 = vsel %vm462, %v667, %v671
  %v674 = vshrl.u32 %v458, 16
  %v676 = vrot.slane %v674, 4
  %v677 = vshll.u32 %v458, 16
  %v679 = vrot.slane %v677, 5
  %v680 = vor.u32 %v676, %v679
  %v681 = vrot.slane %v680, 4
  %v683 = vshll.u32 %v459, 16
  %v685 = vrot.slane %v683, 5
  %v686 = vsel %vm462, %v681, %v685
  %s687 = scalar_lea.vmem %s1, 4
  %v688 = vld [vmem:[%s687] sm:$0x3]
  %v689 = vunpack.c.l.b16 %v476
  %v690 = vunpack.c.l.b16 %v490
  %v691 = vunpack.c.l.b16 %v504
  %v692 = vunpack.c.l.b16 %v518
  %v693 = vunpack.c.l.b16 %v532
  %v694 = vunpack.c.l.b16 %v546
  %v695 = vunpack.c.l.b16 %v560
  %v696 = vunpack.c.l.b16 %v574
  %v697 = vunpack.c.l.b16 %v588
  %v698 = vunpack.c.l.b16 %v602
  %v699 = vunpack.c.l.b16 %v616
  %v700 = vunpack.c.l.b16 %v630
  %v701 = vunpack.c.l.b16 %v644
  %v702 = vunpack.c.l.b16 %v658
  %v703 = vunpack.c.l.b16 %v672
  %v704 = vunpack.c.l.b16 %v686
  %v705 = vpack.c.b16 %v690, %v689
  %v706 = vpack.c.b16 %v692, %v691
  %v707 = vpack.c.b16 %v694, %v693
  %v708 = vpack.c.b16 %v696, %v695
  %v709 = vpack.c.b16 %v698, %v697
  %v710 = vpack.c.b16 %v700, %v699
  %v711 = vpack.c.b16 %v702, %v701
  %v712 = vpack.c.b16 %v704, %v703
  %v714 = vsel %vm234, %v705, 0
  %v717 = vsel %vm234, %v706, 0
  %v720 = vsel %vm234, %v707, 0
  %v723 = vsel %vm234, %v708, 0
  %v726 = vsel %vm234, %v709, 0
  %v729 = vsel %vm234, %v710, 0
  %v732 = vsel %vm234, %v711, 0
  %v735 = vsel %vm234, %v712, 0
  %v738 = vsel %vm259, %v688, 0
  %740 = vmatpush.bf16.msra.mxu0 0
  %741 = vmatpush.bf16.msra.mxu0 0
  %742 = vmatpush.bf16.msra.mxu0 0
  %743 = vmatpush.bf16.msra.mxu0 0
  %744 = vmatpush.bf16.msra.mxu0 0
  %745 = vmatpush.bf16.msra.mxu0 0
  %746 = vmatpush.bf16.msra.mxu0 0
  %747 = vmatpush.bf16.msra.mxu0 %v738
  %748 = vmatmul.bf16.gmra.mxu0 %v714
  %v749 = vpop.f32.mrf.mxu0
  %v750 = vadd.f32 0.0, %v749
  %v751 = vpop.f32.mrf.mxu0
  %v752 = vadd.f32 0.0, %v751
  %753 = vmatmul.bf16.gmra.mxu0 %v717
  %v754 = vpop.f32.mrf.mxu0
  %v755 = vadd.f32 0.0, %v754
  %v756 = vpop.f32.mrf.mxu0
  %v757 = vadd.f32 0.0, %v756
  %758 = vmatmul.bf16.gmra.mxu0 %v720
  %v759 = vpop.f32.mrf.mxu0
  %v760 = vadd.f32 0.0, %v759
  %v761 = vpop.f32.mrf.mxu0
  %v762 = vadd.f32 0.0, %v761
  %763 = vmatmul.bf16.gmra.mxu0 %v723
  %v764 = vpop.f32.mrf.mxu0
  %v765 = vadd.f32 0.0, %v764
  %v766 = vpop.f32.mrf.mxu0
  %v767 = vadd.f32 0.0, %v766
  %768 = vmatmul.bf16.gmra.mxu0 %v726
  %v769 = vpop.f32.mrf.mxu0
  %v770 = vadd.f32 0.0, %v769
  %v771 = vpop.f32.mrf.mxu0
  %v772 = vadd.f32 0.0, %v771
  %773 = vmatmul.bf16.gmra.mxu0 %v729
  %v774 = vpop.f32.mrf.mxu0
  %v775 = vadd.f32 0.0, %v774
  %v776 = vpop.f32.mrf.mxu0
  %v777 = vadd.f32 0.0, %v776
  %778 = vmatmul.bf16.gmra.mxu0 %v732
  %v779 = vpop.f32.mrf.mxu0
  %v780 = vadd.f32 0.0, %v779
  %v781 = vpop.f32.mrf.mxu0
  %v782 = vadd.f32 0.0, %v781
  %783 = vmatmul.bf16.gmra.mxu0 %v735
  %v784 = vpop.f32.mrf.mxu0
  %v785 = vadd.f32 0.0, %v784
  %v786 = vpop.f32.mrf.mxu0
  %v787 = vadd.f32 0.0, %v786
  %788 = vdwg.mxu0
  %v789 = vadd.f32 %v389, %v750
  %v790 = vadd.f32 %v391, %v752
  %v791 = vadd.f32 %v394, %v755
  %v792 = vadd.f32 %v396, %v757
  %v793 = vadd.f32 %v399, %v760
  %v794 = vadd.f32 %v401, %v762
  %v795 = vadd.f32 %v404, %v765
  %v796 = vadd.f32 %v406, %v767
  %v797 = vadd.f32 %v409, %v770
  %v798 = vadd.f32 %v411, %v772
  %v799 = vadd.f32 %v414, %v775
  %v800 = vadd.f32 %v416, %v777
  %v801 = vadd.f32 %v419, %v780
  %v802 = vadd.f32 %v421, %v782
  %v803 = vadd.f32 %v424, %v785
  %v804 = vadd.f32 %v426, %v787
  %s805 = scalar_lea.vmem %s0, 144
  %v806 = vld [vmem:[%s805] sm:$0xf]
  %v807 = vld [vmem:[%s805 + $0x8] sm:$0xf]
  %v808 = vld [vmem:[%s805 + $0x10] sm:$0xf]
  %v809 = vld [vmem:[%s805 + $0x18] sm:$0xf]
  %v810 = vld [vmem:[%s805 + $0x20] sm:$0xf]
  %v811 = vld [vmem:[%s805 + $0x28] sm:$0xf]
  %v812 = vld [vmem:[%s805 + $0x30] sm:$0xf]
  %v813 = vld [vmem:[%s805 + $0x38] sm:$0xf]
  %v814 = vld [vmem:[%s805 + $0x120] sm:$0xf]
  %v815 = vld [vmem:[%s805 + $0x128] sm:$0xf]
  %v816 = vld [vmem:[%s805 + $0x130] sm:$0xf]
  %v817 = vld [vmem:[%s805 + $0x138] sm:$0xf]
  %v818 = vld [vmem:[%s805 + $0x140] sm:$0xf]
  %v819 = vld [vmem:[%s805 + $0x148] sm:$0xf]
  %v820 = vld [vmem:[%s805 + $0x150] sm:$0xf]
  %v821 = vld [vmem:[%s805 + $0x158] sm:$0xf]
  %s822 = scalar_lea.vmem %s1, 6
  %v823 = vld [vmem:[%s822] sm:$0x3]
  %v840 = vunpack.c.l.b16 %v806
  %v841 = vunpack.c.l.b16 %v807
  %v842 = vunpack.c.l.b16 %v808
  %v843 = vunpack.c.l.b16 %v809
  %v844 = vunpack.c.l.b16 %v810
  %v845 = vunpack.c.l.b16 %v811
  %v846 = vunpack.c.l.b16 %v812
  %v847 = vunpack.c.l.b16 %v813
  %v848 = vunpack.c.l.b16 %v814
  %v849 = vunpack.c.l.b16 %v815
  %v850 = vunpack.c.l.b16 %v816
  %v851 = vunpack.c.l.b16 %v817
  %v852 = vunpack.c.l.b16 %v818
  %v853 = vunpack.c.l.b16 %v819
  %v854 = vunpack.c.l.b16 %v820
  %v855 = vunpack.c.l.b16 %v821
  %v856 = vpack.c.b16 %v841, %v840
  %v857 = vpack.c.b16 %v843, %v842
  %v858 = vpack.c.b16 %v845, %v844
  %v859 = vpack.c.b16 %v847, %v846
  %v860 = vpack.c.b16 %v849, %v848
  %v861 = vpack.c.b16 %v851, %v850
  %v862 = vpack.c.b16 %v853, %v852
  %v863 = vpack.c.b16 %v855, %v854
  %v865 = vsel %vm234, %v856, 0
  %v868 = vsel %vm234, %v857, 0
  %v871 = vsel %vm234, %v858, 0
  %v874 = vsel %vm234, %v859, 0
  %v877 = vsel %vm234, %v860, 0
  %v880 = vsel %vm234, %v861, 0
  %v883 = vsel %vm234, %v862, 0
  %v886 = vsel %vm234, %v863, 0
  %v889 = vsel %vm259, %v823, 0
  %891 = vmatpush.bf16.msra.mxu0 0
  %892 = vmatpush.bf16.msra.mxu0 0
  %893 = vmatpush.bf16.msra.mxu0 0
  %894 = vmatpush.bf16.msra.mxu0 0
  %895 = vmatpush.bf16.msra.mxu0 0
  %896 = vmatpush.bf16.msra.mxu0 0
  %897 = vmatpush.bf16.msra.mxu0 0
  %898 = vmatpush.bf16.msra.mxu0 %v889
  %899 = vmatmul.bf16.gmra.mxu0 %v865
  %v900 = vpop.f32.mrf.mxu0
  %v901 = vadd.f32 0.0, %v900
  %v902 = vpop.f32.mrf.mxu0
  %v903 = vadd.f32 0.0, %v902
  %904 = vmatmul.bf16.gmra.mxu0 %v868
  %v905 = vpop.f32.mrf.mxu0
  %v906 = vadd.f32 0.0, %v905
  %v907 = vpop.f32.mrf.mxu0
  %v908 = vadd.f32 0.0, %v907
  %909 = vmatmul.bf16.gmra.mxu0 %v871
  %v910 = vpop.f32.mrf.mxu0
  %v911 = vadd.f32 0.0, %v910
  %v912 = vpop.f32.mrf.mxu0
  %v913 = vadd.f32 0.0, %v912
  %914 = vmatmul.bf16.gmra.mxu0 %v874
  %v915 = vpop.f32.mrf.mxu0
  %v916 = vadd.f32 0.0, %v915
  %v917 = vpop.f32.mrf.mxu0
  %v918 = vadd.f32 0.0, %v917
  %919 = vmatmul.bf16.gmra.mxu0 %v877
  %v920 = vpop.f32.mrf.mxu0
  %v921 = vadd.f32 0.0, %v920
  %v922 = vpop.f32.mrf.mxu0
  %v923 = vadd.f32 0.0, %v922
  %924 = vmatmul.bf16.gmra.mxu0 %v880
  %v925 = vpop.f32.mrf.mxu0
  %v926 = vadd.f32 0.0, %v925
  %v927 = vpop.f32.mrf.mxu0
  %v928 = vadd.f32 0.0, %v927
  %929 = vmatmul.bf16.gmra.mxu0 %v883
  %v930 = vpop.f32.mrf.mxu0
  %v931 = vadd.f32 0.0, %v930
  %v932 = vpop.f32.mrf.mxu0
  %v933 = vadd.f32 0.0, %v932
  %934 = vmatmul.bf16.gmra.mxu0 %v886
  %v935 = vpop.f32.mrf.mxu0
  %v936 = vadd.f32 0.0, %v935
  %v937 = vpop.f32.mrf.mxu0
  %v938 = vadd.f32 0.0, %v937
  %939 = vdwg.mxu0
  %v940 = vadd.f32 %v789, %v901
  %v941 = vadd.f32 %v790, %v903
  %v942 = vadd.f32 %v791, %v906
  %v943 = vadd.f32 %v792, %v908
  %v944 = vadd.f32 %v793, %v911
  %v945 = vadd.f32 %v794, %v913
  %v946 = vadd.f32 %v795, %v916
  %v947 = vadd.f32 %v796, %v918
  %v948 = vadd.f32 %v797, %v921
  %v949 = vadd.f32 %v798, %v923
  %v950 = vadd.f32 %v799, %v926
  %v951 = vadd.f32 %v800, %v928
  %v952 = vadd.f32 %v801, %v931
  %v953 = vadd.f32 %v802, %v933
  %v954 = vadd.f32 %v803, %v936
  %v955 = vadd.f32 %v804, %v938
  %s956 = scalar_lea.vmem %s0, 216
  %v957 = vld [vmem:[%s956] sm:$0xf]
  %v958 = vld [vmem:[%s956 + $0x8] sm:$0xf]
  %v959 = vld [vmem:[%s956 + $0x10] sm:$0xf]
  %v960 = vld [vmem:[%s956 + $0x18] sm:$0xf]
  %v961 = vld [vmem:[%s956 + $0x20] sm:$0xf]
  %v962 = vld [vmem:[%s956 + $0x28] sm:$0xf]
  %v963 = vld [vmem:[%s956 + $0x30] sm:$0xf]
  %v964 = vld [vmem:[%s956 + $0x38] sm:$0xf]
  %v965 = vld [vmem:[%s956 + $0x120] sm:$0xf]
  %v966 = vld [vmem:[%s956 + $0x128] sm:$0xf]
  %v967 = vld [vmem:[%s956 + $0x130] sm:$0xf]
  %v968 = vld [vmem:[%s956 + $0x138] sm:$0xf]
  %v969 = vld [vmem:[%s956 + $0x140] sm:$0xf]
  %v970 = vld [vmem:[%s956 + $0x148] sm:$0xf]
  %v971 = vld [vmem:[%s956 + $0x150] sm:$0xf]
  %v972 = vld [vmem:[%s956 + $0x158] sm:$0xf]
  %s973 = scalar_lea.vmem %s1, 8
  %v974 = vld [vmem:[%s973] sm:$0x3]
  %v991 = vunpack.c.l.b16 %v957
  %v992 = vunpack.c.l.b16 %v958
  %v993 = vunpack.c.l.b16 %v959
  %v994 = vunpack.c.l.b16 %v960
  %v995 = vunpack.c.l.b16 %v961
  %v996 = vunpack.c.l.b16 %v962
  %v997 = vunpack.c.l.b16 %v963
  %v998 = vunpack.c.l.b16 %v964
  %v999 = vunpack.c.l.b16 %v965
  %v1000 = vunpack.c.l.b16 %v966
  %v1001 = vunpack.c.l.b16 %v967
  %v1002 = vunpack.c.l.b16 %v968
  %v1003 = vunpack.c.l.b16 %v969
  %v1004 = vunpack.c.l.b16 %v970
  %v1005 = vunpack.c.l.b16 %v971
  %v1006 = vunpack.c.l.b16 %v972
  %v1007 = vpack.c.b16 %v992, %v991
  %v1008 = vpack.c.b16 %v994, %v993
  %v1009 = vpack.c.b16 %v996, %v995
  %v1010 = vpack.c.b16 %v998, %v997
  %v1011 = vpack.c.b16 %v1000, %v999
  %v1012 = vpack.c.b16 %v1002, %v1001
  %v1013 = vpack.c.b16 %v1004, %v1003
  %v1014 = vpack.c.b16 %v1006, %v1005
  %v1016 = vsel %vm234, %v1007, 0
  %v1019 = vsel %vm234, %v1008, 0
  %v1022 = vsel %vm234, %v1009, 0
  %v1025 = vsel %vm234, %v1010, 0
  %v1028 = vsel %vm234, %v1011, 0
  %v1031 = vsel %vm234, %v1012, 0
  %v1034 = vsel %vm234, %v1013, 0
  %v1037 = vsel %vm234, %v1014, 0
  %v1040 = vsel %vm259, %v974, 0
  %1042 = vmatpush.bf16.msra.mxu0 0
  %1043 = vmatpush.bf16.msra.mxu0 0
  %1044 = vmatpush.bf16.msra.mxu0 0
  %1045 = vmatpush.bf16.msra.mxu0 0
  %1046 = vmatpush.bf16.msra.mxu0 0
  %1047 = vmatpush.bf16.msra.mxu0 0
  %1048 = vmatpush.bf16.msra.mxu0 0
  %1049 = vmatpush.bf16.msra.mxu0 %v1040
  %1050 = vmatmul.bf16.gmra.mxu0 %v1016
  %v1051 = vpop.f32.mrf.mxu0
  %v1052 = vadd.f32 0.0, %v1051
  %v1053 = vpop.f32.mrf.mxu0
  %v1054 = vadd.f32 0.0, %v1053
  %1055 = vmatmul.bf16.gmra.mxu0 %v1019
  %v1056 = vpop.f32.mrf.mxu0
  %v1057 = vadd.f32 0.0, %v1056
  %v1058 = vpop.f32.mrf.mxu0
  %v1059 = vadd.f32 0.0, %v1058
  %1060 = vmatmul.bf16.gmra.mxu0 %v1022
  %v1061 = vpop.f32.mrf.mxu0
  %v1062 = vadd.f32 0.0, %v1061
  %v1063 = vpop.f32.mrf.mxu0
  %v1064 = vadd.f32 0.0, %v1063
  %1065 = vmatmul.bf16.gmra.mxu0 %v1025
  %v1066 = vpop.f32.mrf.mxu0
  %v1067 = vadd.f32 0.0, %v1066
  %v1068 = vpop.f32.mrf.mxu0
  %v1069 = vadd.f32 0.0, %v1068
  %1070 = vmatmul.bf16.gmra.mxu0 %v1028
  %v1071 = vpop.f32.mrf.mxu0
  %v1072 = vadd.f32 0.0, %v1071
  %v1073 = vpop.f32.mrf.mxu0
  %v1074 = vadd.f32 0.0, %v1073
  %1075 = vmatmul.bf16.gmra.mxu0 %v1031
  %v1076 = vpop.f32.mrf.mxu0
  %v1077 = vadd.f32 0.0, %v1076
  %v1078 = vpop.f32.mrf.mxu0
  %v1079 = vadd.f32 0.0, %v1078
  %1080 = vmatmul.bf16.gmra.mxu0 %v1034
  %v1081 = vpop.f32.mrf.mxu0
  %v1082 = vadd.f32 0.0, %v1081
  %v1083 = vpop.f32.mrf.mxu0
  %v1084 = vadd.f32 0.0, %v1083
  %1085 = vmatmul.bf16.gmra.mxu0 %v1037
  %v1086 = vpop.f32.mrf.mxu0
  %v1087 = vadd.f32 0.0, %v1086
  %v1088 = vpop.f32.mrf.mxu0
  %v1089 = vadd.f32 0.0, %v1088
  %1090 = vdwg.mxu0
  %v1091 = vadd.f32 %v940, %v1052
  %v1092 = vadd.f32 %v941, %v1054
  %v1093 = vadd.f32 %v942, %v1057
  %v1094 = vadd.f32 %v943, %v1059
  %v1095 = vadd.f32 %v944, %v1062
  %v1096 = vadd.f32 %v945, %v1064
  %v1097 = vadd.f32 %v946, %v1067
  %v1098 = vadd.f32 %v947, %v1069
  %v1099 = vadd.f32 %v948, %v1072
  %v1100 = vadd.f32 %v949, %v1074
  %v1101 = vadd.f32 %v950, %v1077
  %v1102 = vadd.f32 %v951, %v1079
  %v1103 = vadd.f32 %v952, %v1082
  %v1104 = vadd.f32 %v953, %v1084
  %v1105 = vadd.f32 %v954, %v1087
  %v1106 = vadd.f32 %v955, %v1089
  %v1107 = vld [vmem:[%s805] sm:$0xf]
  %v1108 = vld [vmem:[%s805 + $0x4] sm:$0x1]
  %v1109 = vld [vmem:[%s805 + $0x8] sm:$0xf]
  %v1110 = vld [vmem:[%s805 + $0xc] sm:$0x1]
  %v1111 = vld [vmem:[%s805 + $0x10] sm:$0xf]
  %v1112 = vld [vmem:[%s805 + $0x14] sm:$0x1]
  %v1113 = vld [vmem:[%s805 + $0x18] sm:$0xf]
  %v1114 = vld [vmem:[%s805 + $0x1c] sm:$0x1]
  %v1115 = vld [vmem:[%s805 + $0x20] sm:$0xf]
  %v1116 = vld [vmem:[%s805 + $0x24] sm:$0x1]
  %v1117 = vld [vmem:[%s805 + $0x28] sm:$0xf]
  %v1118 = vld [vmem:[%s805 + $0x2c] sm:$0x1]
  %v1119 = vld [vmem:[%s805 + $0x30] sm:$0xf]
  %v1120 = vld [vmem:[%s805 + $0x34] sm:$0x1]
  %v1121 = vld [vmem:[%s805 + $0x38] sm:$0xf]
  %v1122 = vld [vmem:[%s805 + $0x3c] sm:$0x1]
  %v1123 = vld [vmem:[%s805 + $0x120] sm:$0xf]
  %v1124 = vld [vmem:[%s805 + $0x124] sm:$0x1]
  %v1125 = vld [vmem:[%s805 + $0x128] sm:$0xf]
  %v1126 = vld [vmem:[%s805 + $0x12c] sm:$0x1]
  %v1127 = vld [vmem:[%s805 + $0x130] sm:$0xf]
  %v1128 = vld [vmem:[%s805 + $0x134] sm:$0x1]
  %v1129 = vld [vmem:[%s805 + $0x138] sm:$0xf]
  %v1130 = vld [vmem:[%s805 + $0x13c] sm:$0x1]
  %v1131 = vld [vmem:[%s805 + $0x140] sm:$0xf]
  %v1132 = vld [vmem:[%s805 + $0x144] sm:$0x1]
  %v1133 = vld [vmem:[%s805 + $0x148] sm:$0xf]
  %v1134 = vld [vmem:[%s805 + $0x14c] sm:$0x1]
  %v1135 = vld [vmem:[%s805 + $0x150] sm:$0xf]
  %v1136 = vld [vmem:[%s805 + $0x154] sm:$0x1]
  %v1137 = vld [vmem:[%s805 + $0x158] sm:$0xf]
  %v1138 = vld [vmem:[%s805 + $0x15c] sm:$0x1]
  %v1140 = vshrl.u32 %v1107, 16
  %v1142 = vrot.slane %v1140, 4
  %v1143 = vshll.u32 %v1107, 16
  %v1145 = vrot.slane %v1143, 5
  %v1146 = vor.u32 %v1142, %v1145
  %v1147 = vrot.slane %v1146, 4
  %v1149 = vshll.u32 %v1108, 16
  %v1151 = vrot.slane %v1149, 5
  %v1152 = vsel %vm462, %v1147, %v1151
  %v1154 = vshrl.u32 %v1109, 16
  %v1156 = vrot.slane %v1154, 4
  %v1157 = vshll.u32 %v1109, 16
  %v1159 = vrot.slane %v1157, 5
  %v1160 = vor.u32 %v1156, %v1159
  %v1161 = vrot.slane %v1160, 4
  %v1163 = vshll.u32 %v1110, 16
  %v1165 = vrot.slane %v1163, 5
  %v1166 = vsel %vm462, %v1161, %v1165
  %v1168 = vshrl.u32 %v1111, 16
  %v1170 = vrot.slane %v1168, 4
  %v1171 = vshll.u32 %v1111, 16
  %v1173 = vrot.slane %v1171, 5
  %v1174 = vor.u32 %v1170, %v1173
  %v1175 = vrot.slane %v1174, 4
  %v1177 = vshll.u32 %v1112, 16
  %v1179 = vrot.slane %v1177, 5
  %v1180 = vsel %vm462, %v1175, %v1179
  %v1182 = vshrl.u32 %v1113, 16
  %v1184 = vrot.slane %v1182, 4
  %v1185 = vshll.u32 %v1113, 16
  %v1187 = vrot.slane %v1185, 5
  %v1188 = vor.u32 %v1184, %v1187
  %v1189 = vrot.slane %v1188, 4
  %v1191 = vshll.u32 %v1114, 16
  %v1193 = vrot.slane %v1191, 5
  %v1194 = vsel %vm462, %v1189, %v1193
  %v1196 = vshrl.u32 %v1115, 16
  %v1198 = vrot.slane %v1196, 4
  %v1199 = vshll.u32 %v1115, 16
  %v1201 = vrot.slane %v1199, 5
  %v1202 = vor.u32 %v1198, %v1201
  %v1203 = vrot.slane %v1202, 4
  %v1205 = vshll.u32 %v1116, 16
  %v1207 = vrot.slane %v1205, 5
  %v1208 = vsel %vm462, %v1203, %v1207
  %v1210 = vshrl.u32 %v1117, 16
  %v1212 = vrot.slane %v1210, 4
  %v1213 = vshll.u32 %v1117, 16
  %v1215 = vrot.slane %v1213, 5
  %v1216 = vor.u32 %v1212, %v1215
  %v1217 = vrot.slane %v1216, 4
  %v1219 = vshll.u32 %v1118, 16
  %v1221 = vrot.slane %v1219, 5
  %v1222 = vsel %vm462, %v1217, %v1221
  %v1224 = vshrl.u32 %v1119, 16
  %v1226 = vrot.slane %v1224, 4
  %v1227 = vshll.u32 %v1119, 16
  %v1229 = vrot.slane %v1227, 5
  %v1230 = vor.u32 %v1226, %v1229
  %v1231 = vrot.slane %v1230, 4
  %v1233 = vshll.u32 %v1120, 16
  %v1235 = vrot.slane %v1233, 5
  %v1236 = vsel %vm462, %v1231, %v1235
  %v1238 = vshrl.u32 %v1121, 16
  %v1240 = vrot.slane %v1238, 4
  %v1241 = vshll.u32 %v1121, 16
  %v1243 = vrot.slane %v1241, 5
  %v1244 = vor.u32 %v1240, %v1243
  %v1245 = vrot.slane %v1244, 4
  %v1247 = vshll.u32 %v1122, 16
  %v1249 = vrot.slane %v1247, 5
  %v1250 = vsel %vm462, %v1245, %v1249
  %v1252 = vshrl.u32 %v1123, 16
  %v1254 = vrot.slane %v1252, 4
  %v1255 = vshll.u32 %v1123, 16
  %v1257 = vrot.slane %v1255, 5
  %v1258 = vor.u32 %v1254, %v1257
  %v1259 = vrot.slane %v1258, 4
  %v1261 = vshll.u32 %v1124, 16
  %v1263 = vrot.slane %v1261, 5
  %v1264 = vsel %vm462, %v1259, %v1263
  %v1266 = vshrl.u32 %v1125, 16
  %v1268 = vrot.slane %v1266, 4
  %v1269 = vshll.u32 %v1125, 16
  %v1271 = vrot.slane %v1269, 5
  %v1272 = vor.u32 %v1268, %v1271
  %v1273 = vrot.slane %v1272, 4
  %v1275 = vshll.u32 %v1126, 16
  %v1277 = vrot.slane %v1275, 5
  %v1278 = vsel %vm462, %v1273, %v1277
  %v1280 = vshrl.u32 %v1127, 16
  %v1282 = vrot.slane %v1280, 4
  %v1283 = vshll.u32 %v1127, 16
  %v1285 = vrot.slane %v1283, 5
  %v1286 = vor.u32 %v1282, %v1285
  %v1287 = vrot.slane %v1286, 4
  %v1289 = vshll.u32 %v1128, 16
  %v1291 = vrot.slane %v1289, 5
  %v1292 = vsel %vm462, %v1287, %v1291
  %v1294 = vshrl.u32 %v1129, 16
  %v1296 = vrot.slane %v1294, 4
  %v1297 = vshll.u32 %v1129, 16
  %v1299 = vrot.slane %v1297, 5
  %v1300 = vor.u32 %v1296, %v1299
  %v1301 = vrot.slane %v1300, 4
  %v1303 = vshll.u32 %v1130, 16
  %v1305 = vrot.slane %v1303, 5
  %v1306 = vsel %vm462, %v1301, %v1305
  %v1308 = vshrl.u32 %v1131, 16
  %v1310 = vrot.slane %v1308, 4
  %v1311 = vshll.u32 %v1131, 16
  %v1313 = vrot.slane %v1311, 5
  %v1314 = vor.u32 %v1310, %v1313
  %v1315 = vrot.slane %v1314, 4
  %v1317 = vshll.u32 %v1132, 16
  %v1319 = vrot.slane %v1317, 5
  %v1320 = vsel %vm462, %v1315, %v1319
  %v1322 = vshrl.u32 %v1133, 16
  %v1324 = vrot.slane %v1322, 4
  %v1325 = vshll.u32 %v1133, 16
  %v1327 = vrot.slane %v1325, 5
  %v1328 = vor.u32 %v1324, %v1327
  %v1329 = vrot.slane %v1328, 4
  %v1331 = vshll.u32 %v1134, 16
  %v1333 = vrot.slane %v1331, 5
  %v1334 = vsel %vm462, %v1329, %v1333
  %v1336 = vshrl.u32 %v1135, 16
  %v1338 = vrot.slane %v1336, 4
  %v1339 = vshll.u32 %v1135, 16
  %v1341 = vrot.slane %v1339, 5
  %v1342 = vor.u32 %v1338, %v1341
  %v1343 = vrot.slane %v1342, 4
  %v1345 = vshll.u32 %v1136, 16
  %v1347 = vrot.slane %v1345, 5
  %v1348 = vsel %vm462, %v1343, %v1347
  %v1350 = vshrl.u32 %v1137, 16
  %v1352 = vrot.slane %v1350, 4
  %v1353 = vshll.u32 %v1137, 16
  %v1355 = vrot.slane %v1353, 5
  %v1356 = vor.u32 %v1352, %v1355
  %v1357 = vrot.slane %v1356, 4
  %v1359 = vshll.u32 %v1138, 16
  %v1361 = vrot.slane %v1359, 5
  %v1362 = vsel %vm462, %v1357, %v1361
  %s1363 = scalar_lea.vmem %s1, 10
  %v1364 = vld [vmem:[%s1363] sm:$0x3]
  %v1365 = vunpack.c.l.b16 %v1152
  %v1366 = vunpack.c.l.b16 %v1166
  %v1367 = vunpack.c.l.b16 %v1180
  %v1368 = vunpack.c.l.b16 %v1194
  %v1369 = vunpack.c.l.b16 %v1208
  %v1370 = vunpack.c.l.b16 %v1222
  %v1371 = vunpack.c.l.b16 %v1236
  %v1372 = vunpack.c.l.b16 %v1250
  %v1373 = vunpack.c.l.b16 %v1264
  %v1374 = vunpack.c.l.b16 %v1278
  %v1375 = vunpack.c.l.b16 %v1292
  %v1376 = vunpack.c.l.b16 %v1306
  %v1377 = vunpack.c.l.b16 %v1320
  %v1378 = vunpack.c.l.b16 %v1334
  %v1379 = vunpack.c.l.b16 %v1348
  %v1380 = vunpack.c.l.b16 %v1362
  %v1381 = vpack.c.b16 %v1366, %v1365
  %v1382 = vpack.c.b16 %v1368, %v1367
  %v1383 = vpack.c.b16 %v1370, %v1369
  %v1384 = vpack.c.b16 %v1372, %v1371
  %v1385 = vpack.c.b16 %v1374, %v1373
  %v1386 = vpack.c.b16 %v1376, %v1375
  %v1387 = vpack.c.b16 %v1378, %v1377
  %v1388 = vpack.c.b16 %v1380, %v1379
  %v1390 = vsel %vm234, %v1381, 0
  %v1393 = vsel %vm234, %v1382, 0
  %v1396 = vsel %vm234, %v1383, 0
  %v1399 = vsel %vm234, %v1384, 0
  %v1402 = vsel %vm234, %v1385, 0
  %v1405 = vsel %vm234, %v1386, 0
  %v1408 = vsel %vm234, %v1387, 0
  %v1411 = vsel %vm234, %v1388, 0
  %v1414 = vsel %vm259, %v1364, 0
  %1416 = vmatpush.bf16.msra.mxu0 0
  %1417 = vmatpush.bf16.msra.mxu0 0
  %1418 = vmatpush.bf16.msra.mxu0 0
  %1419 = vmatpush.bf16.msra.mxu0 0
  %1420 = vmatpush.bf16.msra.mxu0 0
  %1421 = vmatpush.bf16.msra.mxu0 0
  %1422 = vmatpush.bf16.msra.mxu0 0
  %1423 = vmatpush.bf16.msra.mxu0 %v1414
  %1424 = vmatmul.bf16.gmra.mxu0 %v1390
  %v1425 = vpop.f32.mrf.mxu0
  %v1426 = vadd.f32 0.0, %v1425
  %v1427 = vpop.f32.mrf.mxu0
  %v1428 = vadd.f32 0.0, %v1427
  %1429 = vmatmul.bf16.gmra.mxu0 %v1393
  %v1430 = vpop.f32.mrf.mxu0
  %v1431 = vadd.f32 0.0, %v1430
  %v1432 = vpop.f32.mrf.mxu0
  %v1433 = vadd.f32 0.0, %v1432
  %1434 = vmatmul.bf16.gmra.mxu0 %v1396
  %v1435 = vpop.f32.mrf.mxu0
  %v1436 = vadd.f32 0.0, %v1435
  %v1437 = vpop.f32.mrf.mxu0
  %v1438 = vadd.f32 0.0, %v1437
  %1439 = vmatmul.bf16.gmra.mxu0 %v1399
  %v1440 = vpop.f32.mrf.mxu0
  %v1441 = vadd.f32 0.0, %v1440
  %v1442 = vpop.f32.mrf.mxu0
  %v1443 = vadd.f32 0.0, %v1442
  %1444 = vmatmul.bf16.gmra.mxu0 %v1402
  %v1445 = vpop.f32.mrf.mxu0
  %v1446 = vadd.f32 0.0, %v1445
  %v1447 = vpop.f32.mrf.mxu0
  %v1448 = vadd.f32 0.0, %v1447
  %1449 = vmatmul.bf16.gmra.mxu0 %v1405
  %v1450 = vpop.f32.mrf.mxu0
  %v1451 = vadd.f32 0.0, %v1450
  %v1452 = vpop.f32.mrf.mxu0
  %v1453 = vadd.f32 0.0, %v1452
  %1454 = vmatmul.bf16.gmra.mxu0 %v1408
  %v1455 = vpop.f32.mrf.mxu0
  %v1456 = vadd.f32 0.0, %v1455
  %v1457 = vpop.f32.mrf.mxu0
  %v1458 = vadd.f32 0.0, %v1457
  %1459 = vmatmul.bf16.gmra.mxu0 %v1411
  %v1460 = vpop.f32.mrf.mxu0
  %v1461 = vadd.f32 0.0, %v1460
  %v1462 = vpop.f32.mrf.mxu0
  %v1463 = vadd.f32 0.0, %v1462
  %1464 = vdwg.mxu0
  %v1465 = vadd.f32 %v1091, %v1426
  %v1466 = vadd.f32 %v1092, %v1428
  %v1467 = vadd.f32 %v1093, %v1431
  %v1468 = vadd.f32 %v1094, %v1433
  %v1469 = vadd.f32 %v1095, %v1436
  %v1470 = vadd.f32 %v1096, %v1438
  %v1471 = vadd.f32 %v1097, %v1441
  %v1472 = vadd.f32 %v1098, %v1443
  %v1473 = vadd.f32 %v1099, %v1446
  %v1474 = vadd.f32 %v1100, %v1448
  %v1475 = vadd.f32 %v1101, %v1451
  %v1476 = vadd.f32 %v1102, %v1453
  %v1477 = vadd.f32 %v1103, %v1456
  %v1478 = vadd.f32 %v1104, %v1458
  %v1479 = vadd.f32 %v1105, %v1461
  %v1480 = vadd.f32 %v1106, %v1463
  %s1481 = scalar_lea.vmem %s0, 8
  %v1482 = vld [vmem:[%s1481] sm:$0xf]
  %v1483 = vld [vmem:[%s1481 + $0x8] sm:$0xf]
  %v1484 = vld [vmem:[%s1481 + $0x10] sm:$0xf]
  %v1485 = vld [vmem:[%s1481 + $0x18] sm:$0xf]
  %v1486 = vld [vmem:[%s1481 + $0x20] sm:$0xf]
  %v1487 = vld [vmem:[%s1481 + $0x28] sm:$0xf]
  %v1488 = vld [vmem:[%s1481 + $0x30] sm:$0xf]
  %v1489 = vld [vmem:[%s1481 + $0x38] sm:$0xf]
  %v1490 = vld [vmem:[%s1481 + $0x120] sm:$0xf]
  %v1491 = vld [vmem:[%s1481 + $0x128] sm:$0xf]
  %v1492 = vld [vmem:[%s1481 + $0x130] sm:$0xf]
  %v1493 = vld [vmem:[%s1481 + $0x138] sm:$0xf]
  %v1494 = vld [vmem:[%s1481 + $0x140] sm:$0xf]
  %v1495 = vld [vmem:[%s1481 + $0x148] sm:$0xf]
  %v1496 = vld [vmem:[%s1481 + $0x150] sm:$0xf]
  %v1497 = vld [vmem:[%s1481 + $0x158] sm:$0xf]
  %s1498 = scalar_lea.vmem %s1, 12
  %v1499 = vld [vmem:[%s1498] sm:$0x3]
  %v1516 = vunpack.c.l.b16 %v1482
  %v1517 = vunpack.c.l.b16 %v1483
  %v1518 = vunpack.c.l.b16 %v1484
  %v1519 = vunpack.c.l.b16 %v1485
  %v1520 = vunpack.c.l.b16 %v1486
  %v1521 = vunpack.c.l.b16 %v1487
  %v1522 = vunpack.c.l.b16 %v1488
  %v1523 = vunpack.c.l.b16 %v1489
  %v1524 = vunpack.c.l.b16 %v1490
  %v1525 = vunpack.c.l.b16 %v1491
  %v1526 = vunpack.c.l.b16 %v1492
  %v1527 = vunpack.c.l.b16 %v1493
  %v1528 = vunpack.c.l.b16 %v1494
  %v1529 = vunpack.c.l.b16 %v1495
  %v1530 = vunpack.c.l.b16 %v1496
  %v1531 = vunpack.c.l.b16 %v1497
  %v1532 = vpack.c.b16 %v1517, %v1516
  %v1533 = vpack.c.b16 %v1519, %v1518
  %v1534 = vpack.c.b16 %v1521, %v1520
  %v1535 = vpack.c.b16 %v1523, %v1522
  %v1536 = vpack.c.b16 %v1525, %v1524
  %v1537 = vpack.c.b16 %v1527, %v1526
  %v1538 = vpack.c.b16 %v1529, %v1528
  %v1539 = vpack.c.b16 %v1531, %v1530
  %v1541 = vsel %vm234, %v1532, 0
  %v1544 = vsel %vm234, %v1533, 0
  %v1547 = vsel %vm234, %v1534, 0
  %v1550 = vsel %vm234, %v1535, 0
  %v1553 = vsel %vm234, %v1536, 0
  %v1556 = vsel %vm234, %v1537, 0
  %v1559 = vsel %vm234, %v1538, 0
  %v1562 = vsel %vm234, %v1539, 0
  %v1565 = vsel %vm259, %v1499, 0
  %1567 = vmatpush.bf16.msra.mxu0 0
  %1568 = vmatpush.bf16.msra.mxu0 0
  %1569 = vmatpush.bf16.msra.mxu0 0
  %1570 = vmatpush.bf16.msra.mxu0 0
  %1571 = vmatpush.bf16.msra.mxu0 0
  %1572 = vmatpush.bf16.msra.mxu0 0
  %1573 = vmatpush.bf16.msra.mxu0 0
  %1574 = vmatpush.bf16.msra.mxu0 %v1565
  %1575 = vmatmul.bf16.gmra.mxu0 %v1541
  %v1576 = vpop.f32.mrf.mxu0
  %v1577 = vadd.f32 0.0, %v1576
  %v1578 = vpop.f32.mrf.mxu0
  %v1579 = vadd.f32 0.0, %v1578
  %1580 = vmatmul.bf16.gmra.mxu0 %v1544
  %v1581 = vpop.f32.mrf.mxu0
  %v1582 = vadd.f32 0.0, %v1581
  %v1583 = vpop.f32.mrf.mxu0
  %v1584 = vadd.f32 0.0, %v1583
  %1585 = vmatmul.bf16.gmra.mxu0 %v1547
  %v1586 = vpop.f32.mrf.mxu0
  %v1587 = vadd.f32 0.0, %v1586
  %v1588 = vpop.f32.mrf.mxu0
  %v1589 = vadd.f32 0.0, %v1588
  %1590 = vmatmul.bf16.gmra.mxu0 %v1550
  %v1591 = vpop.f32.mrf.mxu0
  %v1592 = vadd.f32 0.0, %v1591
  %v1593 = vpop.f32.mrf.mxu0
  %v1594 = vadd.f32 0.0, %v1593
  %1595 = vmatmul.bf16.gmra.mxu0 %v1553
  %v1596 = vpop.f32.mrf.mxu0
  %v1597 = vadd.f32 0.0, %v1596
  %v1598 = vpop.f32.mrf.mxu0
  %v1599 = vadd.f32 0.0, %v1598
  %1600 = vmatmul.bf16.gmra.mxu0 %v1556
  %v1601 = vpop.f32.mrf.mxu0
  %v1602 = vadd.f32 0.0, %v1601
  %v1603 = vpop.f32.mrf.mxu0
  %v1604 = vadd.f32 0.0, %v1603
  %1605 = vmatmul.bf16.gmra.mxu0 %v1559
  %v1606 = vpop.f32.mrf.mxu0
  %v1607 = vadd.f32 0.0, %v1606
  %v1608 = vpop.f32.mrf.mxu0
  %v1609 = vadd.f32 0.0, %v1608
  %1610 = vmatmul.bf16.gmra.mxu0 %v1562
  %v1611 = vpop.f32.mrf.mxu0
  %v1612 = vadd.f32 0.0, %v1611
  %v1613 = vpop.f32.mrf.mxu0
  %v1614 = vadd.f32 0.0, %v1613
  %1615 = vdwg.mxu0
  %v1616 = vadd.f32 %v1465, %v1577
  %v1617 = vadd.f32 %v1466, %v1579
  %v1618 = vadd.f32 %v1467, %v1582
  %v1619 = vadd.f32 %v1468, %v1584
  %v1620 = vadd.f32 %v1469, %v1587
  %v1621 = vadd.f32 %v1470, %v1589
  %v1622 = vadd.f32 %v1471, %v1592
  %v1623 = vadd.f32 %v1472, %v1594
  %v1624 = vadd.f32 %v1473, %v1597
  %v1625 = vadd.f32 %v1474, %v1599
  %v1626 = vadd.f32 %v1475, %v1602
  %v1627 = vadd.f32 %v1476, %v1604
  %v1628 = vadd.f32 %v1477, %v1607
  %v1629 = vadd.f32 %v1478, %v1609
  %v1630 = vadd.f32 %v1479, %v1612
  %v1631 = vadd.f32 %v1480, %v1614
  %s1632 = scalar_lea.vmem %s0, 80
  %v1633 = vld [vmem:[%s1632] sm:$0xf]
  %v1634 = vld [vmem:[%s1632 + $0x8] sm:$0xf]
  %v1635 = vld [vmem:[%s1632 + $0x10] sm:$0xf]
  %v1636 = vld [vmem:[%s1632 + $0x18] sm:$0xf]
  %v1637 = vld [vmem:[%s1632 + $0x20] sm:$0xf]
  %v1638 = vld [vmem:[%s1632 + $0x28] sm:$0xf]
  %v1639 = vld [vmem:[%s1632 + $0x30] sm:$0xf]
  %v1640 = vld [vmem:[%s1632 + $0x38] sm:$0xf]
  %v1641 = vld [vmem:[%s1632 + $0x120] sm:$0xf]
  %v1642 = vld [vmem:[%s1632 + $0x128] sm:$0xf]
  %v1643 = vld [vmem:[%s1632 + $0x130] sm:$0xf]
  %v1644 = vld [vmem:[%s1632 + $0x138] sm:$0xf]
  %v1645 = vld [vmem:[%s1632 + $0x140] sm:$0xf]
  %v1646 = vld [vmem:[%s1632 + $0x148] sm:$0xf]
  %v1647 = vld [vmem:[%s1632 + $0x150] sm:$0xf]
  %v1648 = vld [vmem:[%s1632 + $0x158] sm:$0xf]
  %s1649 = scalar_lea.vmem %s1, 14
  %v1650 = vld [vmem:[%s1649] sm:$0x3]
  %v1667 = vunpack.c.l.b16 %v1633
  %v1668 = vunpack.c.l.b16 %v1634
  %v1669 = vunpack.c.l.b16 %v1635
  %v1670 = vunpack.c.l.b16 %v1636
  %v1671 = vunpack.c.l.b16 %v1637
  %v1672 = vunpack.c.l.b16 %v1638
  %v1673 = vunpack.c.l.b16 %v1639
  %v1674 = vunpack.c.l.b16 %v1640
  %v1675 = vunpack.c.l.b16 %v1641
  %v1676 = vunpack.c.l.b16 %v1642
  %v1677 = vunpack.c.l.b16 %v1643
  %v1678 = vunpack.c.l.b16 %v1644
  %v1679 = vunpack.c.l.b16 %v1645
  %v1680 = vunpack.c.l.b16 %v1646
  %v1681 = vunpack.c.l.b16 %v1647
  %v1682 = vunpack.c.l.b16 %v1648
  %v1683 = vpack.c.b16 %v1668, %v1667
  %v1684 = vpack.c.b16 %v1670, %v1669
  %v1685 = vpack.c.b16 %v1672, %v1671
  %v1686 = vpack.c.b16 %v1674, %v1673
  %v1687 = vpack.c.b16 %v1676, %v1675
  %v1688 = vpack.c.b16 %v1678, %v1677
  %v1689 = vpack.c.b16 %v1680, %v1679
  %v1690 = vpack.c.b16 %v1682, %v1681
  %v1692 = vsel %vm234, %v1683, 0
  %v1695 = vsel %vm234, %v1684, 0
  %v1698 = vsel %vm234, %v1685, 0
  %v1701 = vsel %vm234, %v1686, 0
  %v1704 = vsel %vm234, %v1687, 0
  %v1707 = vsel %vm234, %v1688, 0
  %v1710 = vsel %vm234, %v1689, 0
  %v1713 = vsel %vm234, %v1690, 0
  %v1716 = vsel %vm259, %v1650, 0
  %1718 = vmatpush.bf16.msra.mxu0 0
  %1719 = vmatpush.bf16.msra.mxu0 0
  %1720 = vmatpush.bf16.msra.mxu0 0
  %1721 = vmatpush.bf16.msra.mxu0 0
  %1722 = vmatpush.bf16.msra.mxu0 0
  %1723 = vmatpush.bf16.msra.mxu0 0
  %1724 = vmatpush.bf16.msra.mxu0 0
  %1725 = vmatpush.bf16.msra.mxu0 %v1716
  %1726 = vmatmul.bf16.gmra.mxu0 %v1692
  %v1727 = vpop.f32.mrf.mxu0
  %v1728 = vadd.f32 0.0, %v1727
  %v1729 = vpop.f32.mrf.mxu0
  %v1730 = vadd.f32 0.0, %v1729
  %1731 = vmatmul.bf16.gmra.mxu0 %v1695
  %v1732 = vpop.f32.mrf.mxu0
  %v1733 = vadd.f32 0.0, %v1732
  %v1734 = vpop.f32.mrf.mxu0
  %v1735 = vadd.f32 0.0, %v1734
  %1736 = vmatmul.bf16.gmra.mxu0 %v1698
  %v1737 = vpop.f32.mrf.mxu0
  %v1738 = vadd.f32 0.0, %v1737
  %v1739 = vpop.f32.mrf.mxu0
  %v1740 = vadd.f32 0.0, %v1739
  %1741 = vmatmul.bf16.gmra.mxu0 %v1701
  %v1742 = vpop.f32.mrf.mxu0
  %v1743 = vadd.f32 0.0, %v1742
  %v1744 = vpop.f32.mrf.mxu0
  %v1745 = vadd.f32 0.0, %v1744
  %1746 = vmatmul.bf16.gmra.mxu0 %v1704
  %v1747 = vpop.f32.mrf.mxu0
  %v1748 = vadd.f32 0.0, %v1747
  %v1749 = vpop.f32.mrf.mxu0
  %v1750 = vadd.f32 0.0, %v1749
  %1751 = vmatmul.bf16.gmra.mxu0 %v1707
  %v1752 = vpop.f32.mrf.mxu0
  %v1753 = vadd.f32 0.0, %v1752
  %v1754 = vpop.f32.mrf.mxu0
  %v1755 = vadd.f32 0.0, %v1754
  %1756 = vmatmul.bf16.gmra.mxu0 %v1710
  %v1757 = vpop.f32.mrf.mxu0
  %v1758 = vadd.f32 0.0, %v1757
  %v1759 = vpop.f32.mrf.mxu0
  %v1760 = vadd.f32 0.0, %v1759
  %1761 = vmatmul.bf16.gmra.mxu0 %v1713
  %v1762 = vpop.f32.mrf.mxu0
  %v1763 = vadd.f32 0.0, %v1762
  %v1764 = vpop.f32.mrf.mxu0
  %v1765 = vadd.f32 0.0, %v1764
  %1766 = vdwg.mxu0
  %v1767 = vadd.f32 %v1616, %v1728
  %v1768 = vadd.f32 %v1617, %v1730
  %v1769 = vadd.f32 %v1618, %v1733
  %v1770 = vadd.f32 %v1619, %v1735
  %v1771 = vadd.f32 %v1620, %v1738
  %v1772 = vadd.f32 %v1621, %v1740
  %v1773 = vadd.f32 %v1622, %v1743
  %v1774 = vadd.f32 %v1623, %v1745
  %v1775 = vadd.f32 %v1624, %v1748
  %v1776 = vadd.f32 %v1625, %v1750
  %v1777 = vadd.f32 %v1626, %v1753
  %v1778 = vadd.f32 %v1627, %v1755
  %v1779 = vadd.f32 %v1628, %v1758
  %v1780 = vadd.f32 %v1629, %v1760
  %v1781 = vadd.f32 %v1630, %v1763
  %v1782 = vadd.f32 %v1631, %v1765
  %v1783 = vld [vmem:[%s1481] sm:$0xf]
  %v1784 = vld [vmem:[%s1481 + $0x4] sm:$0x1]
  %v1785 = vld [vmem:[%s1481 + $0x8] sm:$0xf]
  %v1786 = vld [vmem:[%s1481 + $0xc] sm:$0x1]
  %v1787 = vld [vmem:[%s1481 + $0x10] sm:$0xf]
  %v1788 = vld [vmem:[%s1481 + $0x14] sm:$0x1]
  %v1789 = vld [vmem:[%s1481 + $0x18] sm:$0xf]
  %v1790 = vld [vmem:[%s1481 + $0x1c] sm:$0x1]
  %v1791 = vld [vmem:[%s1481 + $0x20] sm:$0xf]
  %v1792 = vld [vmem:[%s1481 + $0x24] sm:$0x1]
  %v1793 = vld [vmem:[%s1481 + $0x28] sm:$0xf]
  %v1794 = vld [vmem:[%s1481 + $0x2c] sm:$0x1]
  %v1795 = vld [vmem:[%s1481 + $0x30] sm:$0xf]
  %v1796 = vld [vmem:[%s1481 + $0x34] sm:$0x1]
  %v1797 = vld [vmem:[%s1481 + $0x38] sm:$0xf]
  %v1798 = vld [vmem:[%s1481 + $0x3c] sm:$0x1]
  %v1799 = vld [vmem:[%s1481 + $0x120] sm:$0xf]
  %v1800 = vld [vmem:[%s1481 + $0x124] sm:$0x1]
  %v1801 = vld [vmem:[%s1481 + $0x128] sm:$0xf]
  %v1802 = vld [vmem:[%s1481 + $0x12c] sm:$0x1]
  %v1803 = vld [vmem:[%s1481 + $0x130] sm:$0xf]
  %v1804 = vld [vmem:[%s1481 + $0x134] sm:$0x1]
  %v1805 = vld [vmem:[%s1481 + $0x138] sm:$0xf]
  %v1806 = vld [vmem:[%s1481 + $0x13c] sm:$0x1]
  %v1807 = vld [vmem:[%s1481 + $0x140] sm:$0xf]
  %v1808 = vld [vmem:[%s1481 + $0x144] sm:$0x1]
  %v1809 = vld [vmem:[%s1481 + $0x148] sm:$0xf]
  %v1810 = vld [vmem:[%s1481 + $0x14c] sm:$0x1]
  %v1811 = vld [vmem:[%s1481 + $0x150] sm:$0xf]
  %v1812 = vld [vmem:[%s1481 + $0x154] sm:$0x1]
  %v1813 = vld [vmem:[%s1481 + $0x158] sm:$0xf]
  %v1814 = vld [vmem:[%s1481 + $0x15c] sm:$0x1]
  %v1816 = vshrl.u32 %v1783, 16
  %v1818 = vrot.slane %v1816, 4
  %v1819 = vshll.u32 %v1783, 16
  %v1821 = vrot.slane %v1819, 5
  %v1822 = vor.u32 %v1818, %v1821
  %v1823 = vrot.slane %v1822, 4
  %v1825 = vshll.u32 %v1784, 16
  %v1827 = vrot.slane %v1825, 5
  %v1828 = vsel %vm462, %v1823, %v1827
  %v1830 = vshrl.u32 %v1785, 16
  %v1832 = vrot.slane %v1830, 4
  %v1833 = vshll.u32 %v1785, 16
  %v1835 = vrot.slane %v1833, 5
  %v1836 = vor.u32 %v1832, %v1835
  %v1837 = vrot.slane %v1836, 4
  %v1839 = vshll.u32 %v1786, 16
  %v1841 = vrot.slane %v1839, 5
  %v1842 = vsel %vm462, %v1837, %v1841
  %v1844 = vshrl.u32 %v1787, 16
  %v1846 = vrot.slane %v1844, 4
  %v1847 = vshll.u32 %v1787, 16
  %v1849 = vrot.slane %v1847, 5
  %v1850 = vor.u32 %v1846, %v1849
  %v1851 = vrot.slane %v1850, 4
  %v1853 = vshll.u32 %v1788, 16
  %v1855 = vrot.slane %v1853, 5
  %v1856 = vsel %vm462, %v1851, %v1855
  %v1858 = vshrl.u32 %v1789, 16
  %v1860 = vrot.slane %v1858, 4
  %v1861 = vshll.u32 %v1789, 16
  %v1863 = vrot.slane %v1861, 5
  %v1864 = vor.u32 %v1860, %v1863
  %v1865 = vrot.slane %v1864, 4
  %v1867 = vshll.u32 %v1790, 16
  %v1869 = vrot.slane %v1867, 5
  %v1870 = vsel %vm462, %v1865, %v1869
  %v1872 = vshrl.u32 %v1791, 16
  %v1874 = vrot.slane %v1872, 4
  %v1875 = vshll.u32 %v1791, 16
  %v1877 = vrot.slane %v1875, 5
  %v1878 = vor.u32 %v1874, %v1877
  %v1879 = vrot.slane %v1878, 4
  %v1881 = vshll.u32 %v1792, 16
  %v1883 = vrot.slane %v1881, 5
  %v1884 = vsel %vm462, %v1879, %v1883
  %v1886 = vshrl.u32 %v1793, 16
  %v1888 = vrot.slane %v1886, 4
  %v1889 = vshll.u32 %v1793, 16
  %v1891 = vrot.slane %v1889, 5
  %v1892 = vor.u32 %v1888, %v1891
  %v1893 = vrot.slane %v1892, 4
  %v1895 = vshll.u32 %v1794, 16
  %v1897 = vrot.slane %v1895, 5
  %v1898 = vsel %vm462, %v1893, %v1897
  %v1900 = vshrl.u32 %v1795, 16
  %v1902 = vrot.slane %v1900, 4
  %v1903 = vshll.u32 %v1795, 16
  %v1905 = vrot.slane %v1903, 5
  %v1906 = vor.u32 %v1902, %v1905
  %v1907 = vrot.slane %v1906, 4
  %v1909 = vshll.u32 %v1796, 16
  %v1911 = vrot.slane %v1909, 5
  %v1912 = vsel %vm462, %v1907, %v1911
  %v1914 = vshrl.u32 %v1797, 16
  %v1916 = vrot.slane %v1914, 4
  %v1917 = vshll.u32 %v1797, 16
  %v1919 = vrot.slane %v1917, 5
  %v1920 = vor.u32 %v1916, %v1919
  %v1921 = vrot.slane %v1920, 4
  %v1923 = vshll.u32 %v1798, 16
  %v1925 = vrot.slane %v1923, 5
  %v1926 = vsel %vm462, %v1921, %v1925
  %v1928 = vshrl.u32 %v1799, 16
  %v1930 = vrot.slane %v1928, 4
  %v1931 = vshll.u32 %v1799, 16
  %v1933 = vrot.slane %v1931, 5
  %v1934 = vor.u32 %v1930, %v1933
  %v1935 = vrot.slane %v1934, 4
  %v1937 = vshll.u32 %v1800, 16
  %v1939 = vrot.slane %v1937, 5
  %v1940 = vsel %vm462, %v1935, %v1939
  %v1942 = vshrl.u32 %v1801, 16
  %v1944 = vrot.slane %v1942, 4
  %v1945 = vshll.u32 %v1801, 16
  %v1947 = vrot.slane %v1945, 5
  %v1948 = vor.u32 %v1944, %v1947
  %v1949 = vrot.slane %v1948, 4
  %v1951 = vshll.u32 %v1802, 16
  %v1953 = vrot.slane %v1951, 5
  %v1954 = vsel %vm462, %v1949, %v1953
  %v1956 = vshrl.u32 %v1803, 16
  %v1958 = vrot.slane %v1956, 4
  %v1959 = vshll.u32 %v1803, 16
  %v1961 = vrot.slane %v1959, 5
  %v1962 = vor.u32 %v1958, %v1961
  %v1963 = vrot.slane %v1962, 4
  %v1965 = vshll.u32 %v1804, 16
  %v1967 = vrot.slane %v1965, 5
  %v1968 = vsel %vm462, %v1963, %v1967
  %v1970 = vshrl.u32 %v1805, 16
  %v1972 = vrot.slane %v1970, 4
  %v1973 = vshll.u32 %v1805, 16
  %v1975 = vrot.slane %v1973, 5
  %v1976 = vor.u32 %v1972, %v1975
  %v1977 = vrot.slane %v1976, 4
  %v1979 = vshll.u32 %v1806, 16
  %v1981 = vrot.slane %v1979, 5
  %v1982 = vsel %vm462, %v1977, %v1981
  %v1984 = vshrl.u32 %v1807, 16
  %v1986 = vrot.slane %v1984, 4
  %v1987 = vshll.u32 %v1807, 16
  %v1989 = vrot.slane %v1987, 5
  %v1990 = vor.u32 %v1986, %v1989
  %v1991 = vrot.slane %v1990, 4
  %v1993 = vshll.u32 %v1808, 16
  %v1995 = vrot.slane %v1993, 5
  %v1996 = vsel %vm462, %v1991, %v1995
  %v1998 = vshrl.u32 %v1809, 16
  %v2000 = vrot.slane %v1998, 4
  %v2001 = vshll.u32 %v1809, 16
  %v2003 = vrot.slane %v2001, 5
  %v2004 = vor.u32 %v2000, %v2003
  %v2005 = vrot.slane %v2004, 4
  %v2007 = vshll.u32 %v1810, 16
  %v2009 = vrot.slane %v2007, 5
  %v2010 = vsel %vm462, %v2005, %v2009
  %v2012 = vshrl.u32 %v1811, 16
  %v2014 = vrot.slane %v2012, 4
  %v2015 = vshll.u32 %v1811, 16
  %v2017 = vrot.slane %v2015, 5
  %v2018 = vor.u32 %v2014, %v2017
  %v2019 = vrot.slane %v2018, 4
  %v2021 = vshll.u32 %v1812, 16
  %v2023 = vrot.slane %v2021, 5
  %v2024 = vsel %vm462, %v2019, %v2023
  %v2026 = vshrl.u32 %v1813, 16
  %v2028 = vrot.slane %v2026, 4
  %v2029 = vshll.u32 %v1813, 16
  %v2031 = vrot.slane %v2029, 5
  %v2032 = vor.u32 %v2028, %v2031
  %v2033 = vrot.slane %v2032, 4
  %v2035 = vshll.u32 %v1814, 16
  %v2037 = vrot.slane %v2035, 5
  %v2038 = vsel %vm462, %v2033, %v2037
  %s2039 = scalar_lea.vmem %s1, 16
  %v2040 = vld [vmem:[%s2039] sm:$0x3]
  %v2041 = vunpack.c.l.b16 %v1828
  %v2042 = vunpack.c.l.b16 %v1842
  %v2043 = vunpack.c.l.b16 %v1856
  %v2044 = vunpack.c.l.b16 %v1870
  %v2045 = vunpack.c.l.b16 %v1884
  %v2046 = vunpack.c.l.b16 %v1898
  %v2047 = vunpack.c.l.b16 %v1912
  %v2048 = vunpack.c.l.b16 %v1926
  %v2049 = vunpack.c.l.b16 %v1940
  %v2050 = vunpack.c.l.b16 %v1954
  %v2051 = vunpack.c.l.b16 %v1968
  %v2052 = vunpack.c.l.b16 %v1982
  %v2053 = vunpack.c.l.b16 %v1996
  %v2054 = vunpack.c.l.b16 %v2010
  %v2055 = vunpack.c.l.b16 %v2024
  %v2056 = vunpack.c.l.b16 %v2038
  %v2057 = vpack.c.b16 %v2042, %v2041
  %v2058 = vpack.c.b16 %v2044, %v2043
  %v2059 = vpack.c.b16 %v2046, %v2045
  %v2060 = vpack.c.b16 %v2048, %v2047
  %v2061 = vpack.c.b16 %v2050, %v2049
  %v2062 = vpack.c.b16 %v2052, %v2051
  %v2063 = vpack.c.b16 %v2054, %v2053
  %v2064 = vpack.c.b16 %v2056, %v2055
  %v2066 = vsel %vm234, %v2057, 0
  %v2069 = vsel %vm234, %v2058, 0
  %v2072 = vsel %vm234, %v2059, 0
  %v2075 = vsel %vm234, %v2060, 0
  %v2078 = vsel %vm234, %v2061, 0
  %v2081 = vsel %vm234, %v2062, 0
  %v2084 = vsel %vm234, %v2063, 0
  %v2087 = vsel %vm234, %v2064, 0
  %v2090 = vsel %vm259, %v2040, 0
  %2092 = vmatpush.bf16.msra.mxu0 0
  %2093 = vmatpush.bf16.msra.mxu0 0
  %2094 = vmatpush.bf16.msra.mxu0 0
  %2095 = vmatpush.bf16.msra.mxu0 0
  %2096 = vmatpush.bf16.msra.mxu0 0
  %2097 = vmatpush.bf16.msra.mxu0 0
  %2098 = vmatpush.bf16.msra.mxu0 0
  %2099 = vmatpush.bf16.msra.mxu0 %v2090
  %2100 = vmatmul.bf16.gmra.mxu0 %v2066
  %v2101 = vpop.f32.mrf.mxu0
  %v2102 = vadd.f32 0.0, %v2101
  %v2103 = vpop.f32.mrf.mxu0
  %v2104 = vadd.f32 0.0, %v2103
  %2105 = vmatmul.bf16.gmra.mxu0 %v2069
  %v2106 = vpop.f32.mrf.mxu0
  %v2107 = vadd.f32 0.0, %v2106
  %v2108 = vpop.f32.mrf.mxu0
  %v2109 = vadd.f32 0.0, %v2108
  %2110 = vmatmul.bf16.gmra.mxu0 %v2072
  %v2111 = vpop.f32.mrf.mxu0
  %v2112 = vadd.f32 0.0, %v2111
  %v2113 = vpop.f32.mrf.mxu0
  %v2114 = vadd.f32 0.0, %v2113
  %2115 = vmatmul.bf16.gmra.mxu0 %v2075
  %v2116 = vpop.f32.mrf.mxu0
  %v2117 = vadd.f32 0.0, %v2116
  %v2118 = vpop.f32.mrf.mxu0
  %v2119 = vadd.f32 0.0, %v2118
  %2120 = vmatmul.bf16.gmra.mxu0 %v2078
  %v2121 = vpop.f32.mrf.mxu0
  %v2122 = vadd.f32 0.0, %v2121
  %v2123 = vpop.f32.mrf.mxu0
  %v2124 = vadd.f32 0.0, %v2123
  %2125 = vmatmul.bf16.gmra.mxu0 %v2081
  %v2126 = vpop.f32.mrf.mxu0
  %v2127 = vadd.f32 0.0, %v2126
  %v2128 = vpop.f32.mrf.mxu0
  %v2129 = vadd.f32 0.0, %v2128
  %2130 = vmatmul.bf16.gmra.mxu0 %v2084
  %v2131 = vpop.f32.mrf.mxu0
  %v2132 = vadd.f32 0.0, %v2131
  %v2133 = vpop.f32.mrf.mxu0
  %v2134 = vadd.f32 0.0, %v2133
  %2135 = vmatmul.bf16.gmra.mxu0 %v2087
  %v2136 = vpop.f32.mrf.mxu0
  %v2137 = vadd.f32 0.0, %v2136
  %v2138 = vpop.f32.mrf.mxu0
  %v2139 = vadd.f32 0.0, %v2138
  %2140 = vdwg.mxu0
  %v2141 = vadd.f32 %v1767, %v2102
  %v2142 = vadd.f32 %v1768, %v2104
  %v2143 = vadd.f32 %v1769, %v2107
  %v2144 = vadd.f32 %v1770, %v2109
  %v2145 = vadd.f32 %v1771, %v2112
  %v2146 = vadd.f32 %v1772, %v2114
  %v2147 = vadd.f32 %v1773, %v2117
  %v2148 = vadd.f32 %v1774, %v2119
  %v2149 = vadd.f32 %v1775, %v2122
  %v2150 = vadd.f32 %v1776, %v2124
  %v2151 = vadd.f32 %v1777, %v2127
  %v2152 = vadd.f32 %v1778, %v2129
  %v2153 = vadd.f32 %v1779, %v2132
  %v2154 = vadd.f32 %v1780, %v2134
  %v2155 = vadd.f32 %v1781, %v2137
  %v2156 = vadd.f32 %v1782, %v2139
  %v2157 = vld [vmem:[%s2] sm:$0x1]
  %v2159 = vperm.slane %v2157, 0
  %v2161 = vadd.f32 %v2141, %v2159
  %v2162 = vadd.f32 %v2142, %v2159
  %v2163 = vadd.f32 %v2143, %v2159
  %v2164 = vadd.f32 %v2144, %v2159
  %v2165 = vadd.f32 %v2145, %v2159
  %v2166 = vadd.f32 %v2146, %v2159
  %v2167 = vadd.f32 %v2147, %v2159
  %v2168 = vadd.f32 %v2148, %v2159
  %v2169 = vadd.f32 %v2149, %v2159
  %v2170 = vadd.f32 %v2150, %v2159
  %v2171 = vadd.f32 %v2151, %v2159
  %v2172 = vadd.f32 %v2152, %v2159
  %v2173 = vadd.f32 %v2153, %v2159
  %v2174 = vadd.f32 %v2154, %v2159
  %v2175 = vadd.f32 %v2155, %v2159
  %v2176 = vadd.f32 %v2156, %v2159
  %v2177 = vmax.f32 %v2161, 0.0
  %v2178 = vmax.f32 %v2162, 0.0
  %v2179 = vmax.f32 %v2163, 0.0
  %v2180 = vmax.f32 %v2164, 0.0
  %v2181 = vmax.f32 %v2165, 0.0
  %v2182 = vmax.f32 %v2166, 0.0
  %v2183 = vmax.f32 %v2167, 0.0
  %v2184 = vmax.f32 %v2168, 0.0
  %v2185 = vmax.f32 %v2169, 0.0
  %v2186 = vmax.f32 %v2170, 0.0
  %v2187 = vmax.f32 %v2171, 0.0
  %v2188 = vmax.f32 %v2172, 0.0
  %v2189 = vmax.f32 %v2173, 0.0
  %v2190 = vmax.f32 %v2174, 0.0
  %v2191 = vmax.f32 %v2175, 0.0
  %v2192 = vmax.f32 %v2176, 0.0
  %v2193 = vpack.c.bf16 %v2177, %v2177
  %v2194 = vpack.c.bf16 %v2178, %v2178
  %v2195 = vpack.c.bf16 %v2179, %v2179
  %v2196 = vpack.c.bf16 %v2180, %v2180
  %v2197 = vpack.c.bf16 %v2181, %v2181
  %v2198 = vpack.c.bf16 %v2182, %v2182
  %v2199 = vpack.c.bf16 %v2183, %v2183
  %v2200 = vpack.c.bf16 %v2184, %v2184
  %v2201 = vpack.c.bf16 %v2185, %v2185
  %v2202 = vpack.c.bf16 %v2186, %v2186
  %v2203 = vpack.c.bf16 %v2187, %v2187
  %v2204 = vpack.c.bf16 %v2188, %v2188
  %v2205 = vpack.c.bf16 %v2189, %v2189
  %v2206 = vpack.c.bf16 %v2190, %v2190
  %v2207 = vpack.c.bf16 %v2191, %v2191
  %v2208 = vpack.c.bf16 %v2192, %v2192
  %v2210 = vshrl.u32 %v2193, 16
  %v2212 = vrot.slane %v2210, 7
  %v2213 = vshll.u32 %v2193, 16
  %v2215 = vor.u32 %v2212, %v2213
  %v2216 = vrot.slane %v2212, 4
  %v2218 = vshrl.u32 %v2194, 16
  %v2220 = vrot.slane %v2218, 7
  %v2221 = vshll.u32 %v2194, 16
  %v2223 = vor.u32 %v2220, %v2221
  %v2224 = vrot.slane %v2220, 4
  %v2226 = vshrl.u32 %v2195, 16
  %v2228 = vrot.slane %v2226, 7
  %v2229 = vshll.u32 %v2195, 16
  %v2231 = vor.u32 %v2228, %v2229
  %v2232 = vrot.slane %v2228, 4
  %v2234 = vshrl.u32 %v2196, 16
  %v2236 = vrot.slane %v2234, 7
  %v2237 = vshll.u32 %v2196, 16
  %v2239 = vor.u32 %v2236, %v2237
  %v2240 = vrot.slane %v2236, 4
  %v2242 = vshrl.u32 %v2197, 16
  %v2244 = vrot.slane %v2242, 7
  %v2245 = vshll.u32 %v2197, 16
  %v2247 = vor.u32 %v2244, %v2245
  %v2248 = vrot.slane %v2244, 4
  %v2250 = vshrl.u32 %v2198, 16
  %v2252 = vrot.slane %v2250, 7
  %v2253 = vshll.u32 %v2198, 16
  %v2255 = vor.u32 %v2252, %v2253
  %v2256 = vrot.slane %v2252, 4
  %v2258 = vshrl.u32 %v2199, 16
  %v2260 = vrot.slane %v2258, 7
  %v2261 = vshll.u32 %v2199, 16
  %v2263 = vor.u32 %v2260, %v2261
  %v2264 = vrot.slane %v2260, 4
  %v2266 = vshrl.u32 %v2200, 16
  %v2268 = vrot.slane %v2266, 7
  %v2269 = vshll.u32 %v2200, 16
  %v2271 = vor.u32 %v2268, %v2269
  %v2272 = vrot.slane %v2268, 4
  %v2274 = vshrl.u32 %v2201, 16
  %v2276 = vrot.slane %v2274, 7
  %v2277 = vshll.u32 %v2201, 16
  %v2279 = vor.u32 %v2276, %v2277
  %v2280 = vrot.slane %v2276, 4
  %v2282 = vshrl.u32 %v2202, 16
  %v2284 = vrot.slane %v2282, 7
  %v2285 = vshll.u32 %v2202, 16
  %v2287 = vor.u32 %v2284, %v2285
  %v2288 = vrot.slane %v2284, 4
  %v2290 = vshrl.u32 %v2203, 16
  %v2292 = vrot.slane %v2290, 7
  %v2293 = vshll.u32 %v2203, 16
  %v2295 = vor.u32 %v2292, %v2293
  %v2296 = vrot.slane %v2292, 4
  %v2298 = vshrl.u32 %v2204, 16
  %v2300 = vrot.slane %v2298, 7
  %v2301 = vshll.u32 %v2204, 16
  %v2303 = vor.u32 %v2300, %v2301
  %v2304 = vrot.slane %v2300, 4
  %v2306 = vshrl.u32 %v2205, 16
  %v2308 = vrot.slane %v2306, 7
  %v2309 = vshll.u32 %v2205, 16
  %v2311 = vor.u32 %v2308, %v2309
  %v2312 = vrot.slane %v2308, 4
  %v2314 = vshrl.u32 %v2206, 16
  %v2316 = vrot.slane %v2314, 7
  %v2317 = vshll.u32 %v2206, 16
  %v2319 = vor.u32 %v2316, %v2317
  %v2320 = vrot.slane %v2316, 4
  %v2322 = vshrl.u32 %v2207, 16
  %v2324 = vrot.slane %v2322, 7
  %v2325 = vshll.u32 %v2207, 16
  %v2327 = vor.u32 %v2324, %v2325
  %v2328 = vrot.slane %v2324, 4
  %v2330 = vshrl.u32 %v2208, 16
  %v2332 = vrot.slane %v2330, 7
  %v2333 = vshll.u32 %v2208, 16
  %v2335 = vor.u32 %v2332, %v2333
  %v2336 = vrot.slane %v2332, 4
  %s2369 = scalar_lea.vmem [#allocation2], 8
  %vm2370 = vcmask 1043456
  %vm2371 = vmand %vm2370, %vm96
  %v2372 = vld [vmem:[%s2369] sm:$0xf]
  %v2373 = vsel %vm2371, %v2215, %v2372
  %2374 = vst [vmem:[%s2369] sm:$0xf] %v2373
  %v2375 = vld [vmem:[%s2369 + $0x4] sm:$0x1]
  %v2376 = vsel %vm35, %v2216, %v2375
  %2377 = vst [vmem:[%s2369 + $0x4] sm:$0x1] %v2376
  %v2378 = vld [vmem:[%s2369 + $0x8] sm:$0xf]
  %v2379 = vsel %vm2371, %v2223, %v2378
  %2380 = vst [vmem:[%s2369 + $0x8] sm:$0xf] %v2379
  %v2381 = vld [vmem:[%s2369 + $0xc] sm:$0x1]
  %v2382 = vsel %vm35, %v2224, %v2381
  %2383 = vst [vmem:[%s2369 + $0xc] sm:$0x1] %v2382
  %v2384 = vld [vmem:[%s2369 + $0x10] sm:$0xf]
  %v2385 = vsel %vm2371, %v2231, %v2384
  %2386 = vst [vmem:[%s2369 + $0x10] sm:$0xf] %v2385
  %v2387 = vld [vmem:[%s2369 + $0x14] sm:$0x1]
  %v2388 = vsel %vm35, %v2232, %v2387
  %2389 = vst [vmem:[%s2369 + $0x14] sm:$0x1] %v2388
  %v2390 = vld [vmem:[%s2369 + $0x18] sm:$0xf]
  %v2391 = vsel %vm2371, %v2239, %v2390
  %2392 = vst [vmem:[%s2369 + $0x18] sm:$0xf] %v2391
  %v2393 = vld [vmem:[%s2369 + $0x1c] sm:$0x1]
  %v2394 = vsel %vm35, %v2240, %v2393
  %2395 = vst [vmem:[%s2369 + $0x1c] sm:$0x1] %v2394
  %v2396 = vld [vmem:[%s2369 + $0x20] sm:$0xf]
  %v2397 = vsel %vm2371, %v2247, %v2396
  %2398 = vst [vmem:[%s2369 + $0x20] sm:$0xf] %v2397
  %v2399 = vld [vmem:[%s2369 + $0x24] sm:$0x1]
  %v2400 = vsel %vm35, %v2248, %v2399
  %2401 = vst [vmem:[%s2369 + $0x24] sm:$0x1] %v2400
  %v2402 = vld [vmem:[%s2369 + $0x28] sm:$0xf]
  %v2403 = vsel %vm2371, %v2255, %v2402
  %2404 = vst [vmem:[%s2369 + $0x28] sm:$0xf] %v2403
  %v2405 = vld [vmem:[%s2369 + $0x2c] sm:$0x1]
  %v2406 = vsel %vm35, %v2256, %v2405
  %2407 = vst [vmem:[%s2369 + $0x2c] sm:$0x1] %v2406
  %v2408 = vld [vmem:[%s2369 + $0x30] sm:$0xf]
  %v2409 = vsel %vm2371, %v2263, %v2408
  %2410 = vst [vmem:[%s2369 + $0x30] sm:$0xf] %v2409
  %v2411 = vld [vmem:[%s2369 + $0x34] sm:$0x1]
  %v2412 = vsel %vm35, %v2264, %v2411
  %2413 = vst [vmem:[%s2369 + $0x34] sm:$0x1] %v2412
  %v2414 = vld [vmem:[%s2369 + $0x38] sm:$0xf]
  %v2415 = vsel %vm2371, %v2271, %v2414
  %2416 = vst [vmem:[%s2369 + $0x38] sm:$0xf] %v2415
  %v2417 = vld [vmem:[%s2369 + $0x3c] sm:$0x1]
  %v2418 = vsel %vm35, %v2272, %v2417
  %2419 = vst [vmem:[%s2369 + $0x3c] sm:$0x1] %v2418
  %v2420 = vld [vmem:[%s2369 + $0x50] sm:$0xf]
  %v2421 = vsel %vm2371, %v2279, %v2420
  %2422 = vst [vmem:[%s2369 + $0x50] sm:$0xf] %v2421
  %v2423 = vld [vmem:[%s2369 + $0x54] sm:$0x1]
  %v2424 = vsel %vm35, %v2280, %v2423
  %2425 = vst [vmem:[%s2369 + $0x54] sm:$0x1] %v2424
  %v2426 = vld [vmem:[%s2369 + $0x58] sm:$0xf]
  %v2427 = vsel %vm2371, %v2287, %v2426
  %2428 = vst [vmem:[%s2369 + $0x58] sm:$0xf] %v2427
  %v2429 = vld [vmem:[%s2369 + $0x5c] sm:$0x1]
  %v2430 = vsel %vm35, %v2288, %v2429
  %2431 = vst [vmem:[%s2369 + $0x5c] sm:$0x1] %v2430
  %v2432 = vld [vmem:[%s2369 + $0x60] sm:$0xf]
  %v2433 = vsel %vm2371, %v2295, %v2432
  %2434 = vst [vmem:[%s2369 + $0x60] sm:$0xf] %v2433
  %v2435 = vld [vmem:[%s2369 + $0x64] sm:$0x1]
  %v2436 = vsel %vm35, %v2296, %v2435
  %2437 = vst [vmem:[%s2369 + $0x64] sm:$0x1] %v2436
  %v2438 = vld [vmem:[%s2369 + $0x68] sm:$0xf]
  %v2439 = vsel %vm2371, %v2303, %v2438
  %2440 = vst [vmem:[%s2369 + $0x68] sm:$0xf] %v2439
  %v2441 = vld [vmem:[%s2369 + $0x6c] sm:$0x1]
  %v2442 = vsel %vm35, %v2304, %v2441
  %2443 = vst [vmem:[%s2369 + $0x6c] sm:$0x1] %v2442
  %v2444 = vld [vmem:[%s2369 + $0x70] sm:$0xf]
  %v2445 = vsel %vm2371, %v2311, %v2444
  %2446 = vst [vmem:[%s2369 + $0x70] sm:$0xf] %v2445
  %v2447 = vld [vmem:[%s2369 + $0x74] sm:$0x1]
  %v2448 = vsel %vm35, %v2312, %v2447
  %2449 = vst [vmem:[%s2369 + $0x74] sm:$0x1] %v2448
  %v2450 = vld [vmem:[%s2369 + $0x78] sm:$0xf]
  %v2451 = vsel %vm2371, %v2319, %v2450
  %2452 = vst [vmem:[%s2369 + $0x78] sm:$0xf] %v2451
  %v2453 = vld [vmem:[%s2369 + $0x7c] sm:$0x1]
  %v2454 = vsel %vm35, %v2320, %v2453
  %2455 = vst [vmem:[%s2369 + $0x7c] sm:$0x1] %v2454
  %v2456 = vld [vmem:[%s2369 + $0x80] sm:$0xf]
  %v2457 = vsel %vm2371, %v2327, %v2456
  %2458 = vst [vmem:[%s2369 + $0x80] sm:$0xf] %v2457
  %v2459 = vld [vmem:[%s2369 + $0x84] sm:$0x1]
  %v2460 = vsel %vm35, %v2328, %v2459
  %2461 = vst [vmem:[%s2369 + $0x84] sm:$0x1] %v2460
  %v2462 = vld [vmem:[%s2369 + $0x88] sm:$0xf]
  %v2463 = vsel %vm2371, %v2335, %v2462
  %2464 = vst [vmem:[%s2369 + $0x88] sm:$0xf] %v2463
  %v2465 = vld [vmem:[%s2369 + $0x8c] sm:$0x1]
  %v2466 = vsel %vm35, %v2336, %v2465
  %2467 = vst [vmem:[%s2369 + $0x8c] sm:$0x1] %v2466
  %v2468 = vld [vmem:[#allocation2] sm:$0xf]
  %v2469 = vld [vmem:[#allocation2 + $0x8] sm:$0xf]
  %v2470 = vld [vmem:[#allocation2 + $0x10] sm:$0xf]
  %v2471 = vld [vmem:[#allocation2 + $0x18] sm:$0xf]
  %v2472 = vld [vmem:[#allocation2 + $0x20] sm:$0xf]
  %v2473 = vld [vmem:[#allocation2 + $0x28] sm:$0xf]
  %v2474 = vld [vmem:[#allocation2 + $0x30] sm:$0xf]
  %v2475 = vld [vmem:[#allocation2 + $0x38] sm:$0xf]
  %v2476 = vld [vmem:[#allocation2 + $0x50] sm:$0xf]
  %v2477 = vld [vmem:[#allocation2 + $0x58] sm:$0xf]
  %v2478 = vld [vmem:[#allocation2 + $0x60] sm:$0xf]
  %v2479 = vld [vmem:[#allocation2 + $0x68] sm:$0xf]
  %v2480 = vld [vmem:[#allocation2 + $0x70] sm:$0xf]
  %v2481 = vld [vmem:[#allocation2 + $0x78] sm:$0xf]
  %v2482 = vld [vmem:[#allocation2 + $0x80] sm:$0xf]
  %v2483 = vld [vmem:[#allocation2 + $0x88] sm:$0xf]
  %v2484 = vld [vmem:[%s3] sm:$0xf]
  %v2485 = vld [vmem:[%s3 + $0x4] sm:$0xf]
  %v2486 = vld [vmem:[%s3 + $0x8] sm:$0xf]
  %v2487 = vld [vmem:[%s3 + $0xc] sm:$0xf]
  %v2488 = vld [vmem:[%s3 + $0x10] sm:$0xf]
  %v2489 = vld [vmem:[%s3 + $0x14] sm:$0xf]
  %v2490 = vld [vmem:[%s3 + $0x18] sm:$0xf]
  %v2491 = vld [vmem:[%s3 + $0x1c] sm:$0xf]
  %v2492 = vld [vmem:[%s3 + $0x20] sm:$0xf]
  %v2493 = vld [vmem:[%s3 + $0x24] sm:$0xf]
  %v2494 = vld [vmem:[%s3 + $0x28] sm:$0xf]
  %v2495 = vld [vmem:[%s3 + $0x2c] sm:$0xf]
  %v2496 = vld [vmem:[%s3 + $0x30] sm:$0xf]
  %v2497 = vld [vmem:[%s3 + $0x34] sm:$0xf]
  %v2498 = vld [vmem:[%s3 + $0x38] sm:$0xf]
  %v2499 = vld [vmem:[%s3 + $0x3c] sm:$0xf]
  %v2500 = vld [vmem:[#allocation2 + $0x4] sm:$0x1]
  %v2501 = vld [vmem:[#allocation2 + $0xc] sm:$0x1]
  %v2502 = vld [vmem:[#allocation2 + $0x14] sm:$0x1]
  %v2503 = vld [vmem:[#allocation2 + $0x1c] sm:$0x1]
  %v2504 = vld [vmem:[#allocation2 + $0x24] sm:$0x1]
  %v2505 = vld [vmem:[#allocation2 + $0x2c] sm:$0x1]
  %v2506 = vld [vmem:[#allocation2 + $0x34] sm:$0x1]
  %v2507 = vld [vmem:[#allocation2 + $0x3c] sm:$0x1]
  %v2508 = vld [vmem:[#allocation2 + $0x54] sm:$0x1]
  %v2509 = vld [vmem:[#allocation2 + $0x5c] sm:$0x1]
  %v2510 = vld [vmem:[#allocation2 + $0x64] sm:$0x1]
  %v2511 = vld [vmem:[#allocation2 + $0x6c] sm:$0x1]
  %v2512 = vld [vmem:[#allocation2 + $0x74] sm:$0x1]
  %v2513 = vld [vmem:[#allocation2 + $0x7c] sm:$0x1]
  %v2514 = vld [vmem:[#allocation2 + $0x84] sm:$0x1]
  %v2515 = vld [vmem:[#allocation2 + $0x8c] sm:$0x1]
  %v2517 = vshrl.u32 %v2468, 16
  %v2519 = vrot.slane %v2517, 4
  %v2520 = vshll.u32 %v2468, 16
  %v2522 = vrot.slane %v2520, 5
  %v2523 = vor.u32 %v2519, %v2522
  %v2524 = vrot.slane %v2523, 4
  %v2526 = vshll.u32 %v2500, 16
  %v2528 = vrot.slane %v2526, 5
  %v2529 = vsel %vm462, %v2524, %v2528
  %v2531 = vshrl.u32 %v2469, 16
  %v2533 = vrot.slane %v2531, 4
  %v2534 = vshll.u32 %v2469, 16
  %v2536 = vrot.slane %v2534, 5
  %v2537 = vor.u32 %v2533, %v2536
  %v2538 = vrot.slane %v2537, 4
  %v2540 = vshll.u32 %v2501, 16
  %v2542 = vrot.slane %v2540, 5
  %v2543 = vsel %vm462, %v2538, %v2542
  %v2545 = vshrl.u32 %v2470, 16
  %v2547 = vrot.slane %v2545, 4
  %v2548 = vshll.u32 %v2470, 16
  %v2550 = vrot.slane %v2548, 5
  %v2551 = vor.u32 %v2547, %v2550
  %v2552 = vrot.slane %v2551, 4
  %v2554 = vshll.u32 %v2502, 16
  %v2556 = vrot.slane %v2554, 5
  %v2557 = vsel %vm462, %v2552, %v2556
  %v2559 = vshrl.u32 %v2471, 16
  %v2561 = vrot.slane %v2559, 4
  %v2562 = vshll.u32 %v2471, 16
  %v2564 = vrot.slane %v2562, 5
  %v2565 = vor.u32 %v2561, %v2564
  %v2566 = vrot.slane %v2565, 4
  %v2568 = vshll.u32 %v2503, 16
  %v2570 = vrot.slane %v2568, 5
  %v2571 = vsel %vm462, %v2566, %v2570
  %v2573 = vshrl.u32 %v2472, 16
  %v2575 = vrot.slane %v2573, 4
  %v2576 = vshll.u32 %v2472, 16
  %v2578 = vrot.slane %v2576, 5
  %v2579 = vor.u32 %v2575, %v2578
  %v2580 = vrot.slane %v2579, 4
  %v2582 = vshll.u32 %v2504, 16
  %v2584 = vrot.slane %v2582, 5
  %v2585 = vsel %vm462, %v2580, %v2584
  %v2587 = vshrl.u32 %v2473, 16
  %v2589 = vrot.slane %v2587, 4
  %v2590 = vshll.u32 %v2473, 16
  %v2592 = vrot.slane %v2590, 5
  %v2593 = vor.u32 %v2589, %v2592
  %v2594 = vrot.slane %v2593, 4
  %v2596 = vshll.u32 %v2505, 16
  %v2598 = vrot.slane %v2596, 5
  %v2599 = vsel %vm462, %v2594, %v2598
  %v2601 = vshrl.u32 %v2474, 16
  %v2603 = vrot.slane %v2601, 4
  %v2604 = vshll.u32 %v2474, 16
  %v2606 = vrot.slane %v2604, 5
  %v2607 = vor.u32 %v2603, %v2606
  %v2608 = vrot.slane %v2607, 4
  %v2610 = vshll.u32 %v2506, 16
  %v2612 = vrot.slane %v2610, 5
  %v2613 = vsel %vm462, %v2608, %v2612
  %v2615 = vshrl.u32 %v2475, 16
  %v2617 = vrot.slane %v2615, 4
  %v2618 = vshll.u32 %v2475, 16
  %v2620 = vrot.slane %v2618, 5
  %v2621 = vor.u32 %v2617, %v2620
  %v2622 = vrot.slane %v2621, 4
  %v2624 = vshll.u32 %v2507, 16
  %v2626 = vrot.slane %v2624, 5
  %v2627 = vsel %vm462, %v2622, %v2626
  %v2629 = vshrl.u32 %v2476, 16
  %v2631 = vrot.slane %v2629, 4
  %v2632 = vshll.u32 %v2476, 16
  %v2634 = vrot.slane %v2632, 5
  %v2635 = vor.u32 %v2631, %v2634
  %v2636 = vrot.slane %v2635, 4
  %v2638 = vshll.u32 %v2508, 16
  %v2640 = vrot.slane %v2638, 5
  %v2641 = vsel %vm462, %v2636, %v2640
  %v2643 = vshrl.u32 %v2477, 16
  %v2645 = vrot.slane %v2643, 4
  %v2646 = vshll.u32 %v2477, 16
  %v2648 = vrot.slane %v2646, 5
  %v2649 = vor.u32 %v2645, %v2648
  %v2650 = vrot.slane %v2649, 4
  %v2652 = vshll.u32 %v2509, 16
  %v2654 = vrot.slane %v2652, 5
  %v2655 = vsel %vm462, %v2650, %v2654
  %v2657 = vshrl.u32 %v2478, 16
  %v2659 = vrot.slane %v2657, 4
  %v2660 = vshll.u32 %v2478, 16
  %v2662 = vrot.slane %v2660, 5
  %v2663 = vor.u32 %v2659, %v2662
  %v2664 = vrot.slane %v2663, 4
  %v2666 = vshll.u32 %v2510, 16
  %v2668 = vrot.slane %v2666, 5
  %v2669 = vsel %vm462, %v2664, %v2668
  %v2671 = vshrl.u32 %v2479, 16
  %v2673 = vrot.slane %v2671, 4
  %v2674 = vshll.u32 %v2479, 16
  %v2676 = vrot.slane %v2674, 5
  %v2677 = vor.u32 %v2673, %v2676
  %v2678 = vrot.slane %v2677, 4
  %v2680 = vshll.u32 %v2511, 16
  %v2682 = vrot.slane %v2680, 5
  %v2683 = vsel %vm462, %v2678, %v2682
  %v2685 = vshrl.u32 %v2480, 16
  %v2687 = vrot.slane %v2685, 4
  %v2688 = vshll.u32 %v2480, 16
  %v2690 = vrot.slane %v2688, 5
  %v2691 = vor.u32 %v2687, %v2690
  %v2692 = vrot.slane %v2691, 4
  %v2694 = vshll.u32 %v2512, 16
  %v2696 = vrot.slane %v2694, 5
  %v2697 = vsel %vm462, %v2692, %v2696
  %v2699 = vshrl.u32 %v2481, 16
  %v2701 = vrot.slane %v2699, 4
  %v2702 = vshll.u32 %v2481, 16
  %v2704 = vrot.slane %v2702, 5
  %v2705 = vor.u32 %v2701, %v2704
  %v2706 = vrot.slane %v2705, 4
  %v2708 = vshll.u32 %v2513, 16
  %v2710 = vrot.slane %v2708, 5
  %v2711 = vsel %vm462, %v2706, %v2710
  %v2713 = vshrl.u32 %v2482, 16
  %v2715 = vrot.slane %v2713, 4
  %v2716 = vshll.u32 %v2482, 16
  %v2718 = vrot.slane %v2716, 5
  %v2719 = vor.u32 %v2715, %v2718
  %v2720 = vrot.slane %v2719, 4
  %v2722 = vshll.u32 %v2514, 16
  %v2724 = vrot.slane %v2722, 5
  %v2725 = vsel %vm462, %v2720, %v2724
  %v2727 = vshrl.u32 %v2483, 16
  %v2729 = vrot.slane %v2727, 4
  %v2730 = vshll.u32 %v2483, 16
  %v2732 = vrot.slane %v2730, 5
  %v2733 = vor.u32 %v2729, %v2732
  %v2734 = vrot.slane %v2733, 4
  %v2736 = vshll.u32 %v2515, 16
  %v2738 = vrot.slane %v2736, 5
  %v2739 = vsel %vm462, %v2734, %v2738
  %s2740 = scalar_lea.vmem %s3, 64
  %v2741 = vld [vmem:[%s2740] sm:$0xf]
  %v2742 = vld [vmem:[%s2740 + $0x4] sm:$0xf]
  %v2743 = vld [vmem:[%s2740 + $0x8] sm:$0xf]
  %v2744 = vld [vmem:[%s2740 + $0xc] sm:$0xf]
  %v2745 = vld [vmem:[%s2740 + $0x10] sm:$0xf]
  %v2746 = vld [vmem:[%s2740 + $0x14] sm:$0xf]
  %v2747 = vld [vmem:[%s2740 + $0x18] sm:$0xf]
  %v2748 = vld [vmem:[%s2740 + $0x1c] sm:$0xf]
  %v2749 = vld [vmem:[%s2740 + $0x20] sm:$0xf]
  %v2750 = vld [vmem:[%s2740 + $0x24] sm:$0xf]
  %v2751 = vld [vmem:[%s2740 + $0x28] sm:$0xf]
  %v2752 = vld [vmem:[%s2740 + $0x2c] sm:$0xf]
  %v2753 = vld [vmem:[%s2740 + $0x30] sm:$0xf]
  %v2754 = vld [vmem:[%s2740 + $0x34] sm:$0xf]
  %v2755 = vld [vmem:[%s2740 + $0x38] sm:$0xf]
  %v2756 = vld [vmem:[%s2740 + $0x3c] sm:$0xf]
  %v2757 = vunpack.c.l.b16 %v2529
  %v2758 = vunpack.c.l.b16 %v2543
  %v2759 = vunpack.c.l.b16 %v2557
  %v2760 = vunpack.c.l.b16 %v2571
  %v2761 = vunpack.c.l.b16 %v2585
  %v2762 = vunpack.c.l.b16 %v2599
  %v2763 = vunpack.c.l.b16 %v2613
  %v2764 = vunpack.c.l.b16 %v2627
  %v2765 = vunpack.c.l.b16 %v2641
  %v2766 = vunpack.c.l.b16 %v2655
  %v2767 = vunpack.c.l.b16 %v2669
  %v2768 = vunpack.c.l.b16 %v2683
  %v2769 = vunpack.c.l.b16 %v2697
  %v2770 = vunpack.c.l.b16 %v2711
  %v2771 = vunpack.c.l.b16 %v2725
  %v2772 = vunpack.c.l.b16 %v2739
  %v2773 = vpack.c.b16 %v2758, %v2757
  %v2774 = vpack.c.b16 %v2760, %v2759
  %v2775 = vpack.c.b16 %v2762, %v2761
  %v2776 = vpack.c.b16 %v2764, %v2763
  %v2777 = vpack.c.b16 %v2766, %v2765
  %v2778 = vpack.c.b16 %v2768, %v2767
  %v2779 = vpack.c.b16 %v2770, %v2769
  %v2780 = vpack.c.b16 %v2772, %v2771
  %v2805 = vunpack.c.l.b16 %v2741
  %v2806 = vunpack.c.l.b16 %v2742
  %v2807 = vunpack.c.l.b16 %v2743
  %v2808 = vunpack.c.l.b16 %v2744
  %v2809 = vunpack.c.l.b16 %v2745
  %v2810 = vunpack.c.l.b16 %v2746
  %v2811 = vunpack.c.l.b16 %v2747
  %v2812 = vunpack.c.l.b16 %v2748
  %v2813 = vunpack.c.l.b16 %v2749
  %v2814 = vunpack.c.l.b16 %v2750
  %v2815 = vunpack.c.l.b16 %v2751
  %v2816 = vunpack.c.l.b16 %v2752
  %v2817 = vunpack.c.l.b16 %v2753
  %v2818 = vunpack.c.l.b16 %v2754
  %v2819 = vunpack.c.l.b16 %v2755
  %v2820 = vunpack.c.l.b16 %v2756
  %v2821 = vpack.c.b16 %v2806, %v2805
  %v2822 = vpack.c.b16 %v2808, %v2807
  %v2823 = vpack.c.b16 %v2810, %v2809
  %v2824 = vpack.c.b16 %v2812, %v2811
  %v2825 = vpack.c.b16 %v2814, %v2813
  %v2826 = vpack.c.b16 %v2816, %v2815
  %v2827 = vpack.c.b16 %v2818, %v2817
  %v2828 = vpack.c.b16 %v2820, %v2819
  %2837 = vmatpush.bf16.msra.mxu0 %v2828
  %2838 = vmatpush.bf16.msra.mxu0 %v2827
  %2839 = vmatpush.bf16.msra.mxu0 %v2826
  %2840 = vmatpush.bf16.msra.mxu0 %v2825
  %2841 = vmatpush.bf16.msra.mxu0 %v2824
  %2842 = vmatpush.bf16.msra.mxu0 %v2823
  %2843 = vmatpush.bf16.msra.mxu0 %v2822
  %2844 = vmatpush.bf16.msra.mxu0 %v2821
  %2845 = vmatmul.bf16.gmra.mxu0 %v2773
  %v2846 = vpop.f32.mrf.mxu0
  %v2847 = vadd.f32 0.0, %v2846
  %v2848 = vpop.f32.mrf.mxu0
  %v2849 = vadd.f32 0.0, %v2848
  %2850 = vmatmul.bf16.gmra.mxu0 %v2774
  %v2851 = vpop.f32.mrf.mxu0
  %v2852 = vadd.f32 0.0, %v2851
  %v2853 = vpop.f32.mrf.mxu0
  %v2854 = vadd.f32 0.0, %v2853
  %2855 = vmatmul.bf16.gmra.mxu0 %v2775
  %v2856 = vpop.f32.mrf.mxu0
  %v2857 = vadd.f32 0.0, %v2856
  %v2858 = vpop.f32.mrf.mxu0
  %v2859 = vadd.f32 0.0, %v2858
  %2860 = vmatmul.bf16.gmra.mxu0 %v2776
  %v2861 = vpop.f32.mrf.mxu0
  %v2862 = vadd.f32 0.0, %v2861
  %v2863 = vpop.f32.mrf.mxu0
  %v2864 = vadd.f32 0.0, %v2863
  %2865 = vmatmul.bf16.gmra.mxu0 %v2777
  %v2866 = vpop.f32.mrf.mxu0
  %v2867 = vadd.f32 0.0, %v2866
  %v2868 = vpop.f32.mrf.mxu0
  %v2869 = vadd.f32 0.0, %v2868
  %2870 = vmatmul.bf16.gmra.mxu0 %v2778
  %v2871 = vpop.f32.mrf.mxu0
  %v2872 = vadd.f32 0.0, %v2871
  %v2873 = vpop.f32.mrf.mxu0
  %v2874 = vadd.f32 0.0, %v2873
  %2875 = vmatmul.bf16.gmra.mxu0 %v2779
  %v2876 = vpop.f32.mrf.mxu0
  %v2877 = vadd.f32 0.0, %v2876
  %v2878 = vpop.f32.mrf.mxu0
  %v2879 = vadd.f32 0.0, %v2878
  %2880 = vmatmul.bf16.gmra.mxu0 %v2780
  %v2881 = vpop.f32.mrf.mxu0
  %v2882 = vadd.f32 0.0, %v2881
  %v2883 = vpop.f32.mrf.mxu0
  %v2884 = vadd.f32 0.0, %v2883
  %2885 = vdwg.mxu0
  %v2902 = vunpack.c.l.b16 %v2468
  %v2903 = vunpack.c.l.b16 %v2469
  %v2904 = vunpack.c.l.b16 %v2470
  %v2905 = vunpack.c.l.b16 %v2471
  %v2906 = vunpack.c.l.b16 %v2472
  %v2907 = vunpack.c.l.b16 %v2473
  %v2908 = vunpack.c.l.b16 %v2474
  %v2909 = vunpack.c.l.b16 %v2475
  %v2910 = vunpack.c.l.b16 %v2476
  %v2911 = vunpack.c.l.b16 %v2477
  %v2912 = vunpack.c.l.b16 %v2478
  %v2913 = vunpack.c.l.b16 %v2479
  %v2914 = vunpack.c.l.b16 %v2480
  %v2915 = vunpack.c.l.b16 %v2481
  %v2916 = vunpack.c.l.b16 %v2482
  %v2917 = vunpack.c.l.b16 %v2483
  %v2918 = vpack.c.b16 %v2903, %v2902
  %v2919 = vpack.c.b16 %v2905, %v2904
  %v2920 = vpack.c.b16 %v2907, %v2906
  %v2921 = vpack.c.b16 %v2909, %v2908
  %v2922 = vpack.c.b16 %v2911, %v2910
  %v2923 = vpack.c.b16 %v2913, %v2912
  %v2924 = vpack.c.b16 %v2915, %v2914
  %v2925 = vpack.c.b16 %v2917, %v2916
  %v2950 = vunpack.c.l.b16 %v2484
  %v2951 = vunpack.c.l.b16 %v2485
  %v2952 = vunpack.c.l.b16 %v2486
  %v2953 = vunpack.c.l.b16 %v2487
  %v2954 = vunpack.c.l.b16 %v2488
  %v2955 = vunpack.c.l.b16 %v2489
  %v2956 = vunpack.c.l.b16 %v2490
  %v2957 = vunpack.c.l.b16 %v2491
  %v2958 = vunpack.c.l.b16 %v2492
  %v2959 = vunpack.c.l.b16 %v2493
  %v2960 = vunpack.c.l.b16 %v2494
  %v2961 = vunpack.c.l.b16 %v2495
  %v2962 = vunpack.c.l.b16 %v2496
  %v2963 = vunpack.c.l.b16 %v2497
  %v2964 = vunpack.c.l.b16 %v2498
  %v2965 = vunpack.c.l.b16 %v2499
  %v2966 = vpack.c.b16 %v2951, %v2950
  %v2967 = vpack.c.b16 %v2953, %v2952
  %v2968 = vpack.c.b16 %v2955, %v2954
  %v2969 = vpack.c.b16 %v2957, %v2956
  %v2970 = vpack.c.b16 %v2959, %v2958
  %v2971 = vpack.c.b16 %v2961, %v2960
  %v2972 = vpack.c.b16 %v2963, %v2962
  %v2973 = vpack.c.b16 %v2965, %v2964
  %2982 = vmatpush.bf16.msra.mxu0 %v2973
  %2983 = vmatpush.bf16.msra.mxu0 %v2972
  %2984 = vmatpush.bf16.msra.mxu0 %v2971
  %2985 = vmatpush.bf16.msra.mxu0 %v2970
  %2986 = vmatpush.bf16.msra.mxu0 %v2969
  %2987 = vmatpush.bf16.msra.mxu0 %v2968
  %2988 = vmatpush.bf16.msra.mxu0 %v2967
  %2989 = vmatpush.bf16.msra.mxu0 %v2966
  %2990 = vmatmul.bf16.gmra.mxu0 %v2918
  %v2991 = vpop.f32.mrf.mxu0
  %v2992 = vadd.f32 %v2847, %v2991
  %v2993 = vpop.f32.mrf.mxu0
  %v2994 = vadd.f32 %v2849, %v2993
  %2995 = vmatmul.bf16.gmra.mxu0 %v2919
  %v2996 = vpop.f32.mrf.mxu0
  %v2997 = vadd.f32 %v2852, %v2996
  %v2998 = vpop.f32.mrf.mxu0
  %v2999 = vadd.f32 %v2854, %v2998
  %3000 = vmatmul.bf16.gmra.mxu0 %v2920
  %v3001 = vpop.f32.mrf.mxu0
  %v3002 = vadd.f32 %v2857, %v3001
  %v3003 = vpop.f32.mrf.mxu0
  %v3004 = vadd.f32 %v2859, %v3003
  %3005 = vmatmul.bf16.gmra.mxu0 %v2921
  %v3006 = vpop.f32.mrf.mxu0
  %v3007 = vadd.f32 %v2862, %v3006
  %v3008 = vpop.f32.mrf.mxu0
  %v3009 = vadd.f32 %v2864, %v3008
  %3010 = vmatmul.bf16.gmra.mxu0 %v2922
  %v3011 = vpop.f32.mrf.mxu0
  %v3012 = vadd.f32 %v2867, %v3011
  %v3013 = vpop.f32.mrf.mxu0
  %v3014 = vadd.f32 %v2869, %v3013
  %3015 = vmatmul.bf16.gmra.mxu0 %v2923
  %v3016 = vpop.f32.mrf.mxu0
  %v3017 = vadd.f32 %v2872, %v3016
  %v3018 = vpop.f32.mrf.mxu0
  %v3019 = vadd.f32 %v2874, %v3018
  %3020 = vmatmul.bf16.gmra.mxu0 %v2924
  %v3021 = vpop.f32.mrf.mxu0
  %v3022 = vadd.f32 %v2877, %v3021
  %v3023 = vpop.f32.mrf.mxu0
  %v3024 = vadd.f32 %v2879, %v3023
  %3025 = vmatmul.bf16.gmra.mxu0 %v2925
  %v3026 = vpop.f32.mrf.mxu0
  %v3027 = vadd.f32 %v2882, %v3026
  %v3028 = vpop.f32.mrf.mxu0
  %v3029 = vadd.f32 %v2884, %v3028
  %3030 = vdwg.mxu0
  %v3031 = vld [vmem:[#allocation2] sm:$0xe]
  %v3032 = vld [vmem:[#allocation2 + $0x8] sm:$0xe]
  %v3033 = vld [vmem:[#allocation2 + $0x10] sm:$0xe]
  %v3034 = vld [vmem:[#allocation2 + $0x18] sm:$0xe]
  %v3035 = vld [vmem:[#allocation2 + $0x20] sm:$0xe]
  %v3036 = vld [vmem:[#allocation2 + $0x28] sm:$0xe]
  %v3037 = vld [vmem:[#allocation2 + $0x30] sm:$0xe]
  %v3038 = vld [vmem:[#allocation2 + $0x38] sm:$0xe]
  %v3039 = vld [vmem:[#allocation2 + $0x50] sm:$0xe]
  %v3040 = vld [vmem:[#allocation2 + $0x58] sm:$0xe]
  %v3041 = vld [vmem:[#allocation2 + $0x60] sm:$0xe]
  %v3042 = vld [vmem:[#allocation2 + $0x68] sm:$0xe]
  %v3043 = vld [vmem:[#allocation2 + $0x70] sm:$0xe]
  %v3044 = vld [vmem:[#allocation2 + $0x78] sm:$0xe]
  %v3045 = vld [vmem:[#allocation2 + $0x80] sm:$0xe]
  %v3046 = vld [vmem:[#allocation2 + $0x88] sm:$0xe]
  %vm3079 = vcmask 1042432
  %vm3080 = vcmask 1046532
  %vm3081 = vmor %vm3079, %vm3080
  %v3082 = vrot.slane %v3031, 5
  %v3083 = vrot.slane %v3082, 4
  %v3084 = vrot.slane %v2500, 5
  %v3085 = vsel %vm3081, %v3083, %v3084
  %v3086 = vrot.slane %v3032, 5
  %v3087 = vrot.slane %v3086, 4
  %v3088 = vrot.slane %v2501, 5
  %v3089 = vsel %vm3081, %v3087, %v3088
  %v3090 = vrot.slane %v3033, 5
  %v3091 = vrot.slane %v3090, 4
  %v3092 = vrot.slane %v2502, 5
  %v3093 = vsel %vm3081, %v3091, %v3092
  %v3094 = vrot.slane %v3034, 5
  %v3095 = vrot.slane %v3094, 4
  %v3096 = vrot.slane %v2503, 5
  %v3097 = vsel %vm3081, %v3095, %v3096
  %v3098 = vrot.slane %v3035, 5
  %v3099 = vrot.slane %v3098, 4
  %v3100 = vrot.slane %v2504, 5
  %v3101 = vsel %vm3081, %v3099, %v3100
  %v3102 = vrot.slane %v3036, 5
  %v3103 = vrot.slane %v3102, 4
  %v3104 = vrot.slane %v2505, 5
  %v3105 = vsel %vm3081, %v3103, %v3104
  %v3106 = vrot.slane %v3037, 5
  %v3107 = vrot.slane %v3106, 4
  %v3108 = vrot.slane %v2506, 5
  %v3109 = vsel %vm3081, %v3107, %v3108
  %v3110 = vrot.slane %v3038, 5
  %v3111 = vrot.slane %v3110, 4
  %v3112 = vrot.slane %v2507, 5
  %v3113 = vsel %vm3081, %v3111, %v3112
  %v3114 = vrot.slane %v3039, 5
  %v3115 = vrot.slane %v3114, 4
  %v3116 = vrot.slane %v2508, 5
  %v3117 = vsel %vm3081, %v3115, %v3116
  %v3118 = vrot.slane %v3040, 5
  %v3119 = vrot.slane %v3118, 4
  %v3120 = vrot.slane %v2509, 5
  %v3121 = vsel %vm3081, %v3119, %v3120
  %v3122 = vrot.slane %v3041, 5
  %v3123 = vrot.slane %v3122, 4
  %v3124 = vrot.slane %v2510, 5
  %v3125 = vsel %vm3081, %v3123, %v3124
  %v3126 = vrot.slane %v3042, 5
  %v3127 = vrot.slane %v3126, 4
  %v3128 = vrot.slane %v2511, 5
  %v3129 = vsel %vm3081, %v3127, %v3128
  %v3130 = vrot.slane %v3043, 5
  %v3131 = vrot.slane %v3130, 4
  %v3132 = vrot.slane %v2512, 5
  %v3133 = vsel %vm3081, %v3131, %v3132
  %v3134 = vrot.slane %v3044, 5
  %v3135 = vrot.slane %v3134, 4
  %v3136 = vrot.slane %v2513, 5
  %v3137 = vsel %vm3081, %v3135, %v3136
  %v3138 = vrot.slane %v3045, 5
  %v3139 = vrot.slane %v3138, 4
  %v3140 = vrot.slane %v2514, 5
  %v3141 = vsel %vm3081, %v3139, %v3140
  %v3142 = vrot.slane %v3046, 5
  %v3143 = vrot.slane %v3142, 4
  %v3144 = vrot.slane %v2515, 5
  %v3145 = vsel %vm3081, %v3143, %v3144
  %s3146 = scalar_lea.vmem %s3, 128
  %v3147 = vld [vmem:[%s3146] sm:$0xf]
  %v3148 = vld [vmem:[%s3146 + $0x4] sm:$0xf]
  %v3149 = vld [vmem:[%s3146 + $0x8] sm:$0xf]
  %v3150 = vld [vmem:[%s3146 + $0xc] sm:$0xf]
  %v3151 = vld [vmem:[%s3146 + $0x10] sm:$0xf]
  %v3152 = vld [vmem:[%s3146 + $0x14] sm:$0xf]
  %v3153 = vld [vmem:[%s3146 + $0x18] sm:$0xf]
  %v3154 = vld [vmem:[%s3146 + $0x1c] sm:$0xf]
  %v3155 = vld [vmem:[%s3146 + $0x20] sm:$0xf]
  %v3156 = vld [vmem:[%s3146 + $0x24] sm:$0xf]
  %v3157 = vld [vmem:[%s3146 + $0x28] sm:$0xf]
  %v3158 = vld [vmem:[%s3146 + $0x2c] sm:$0xf]
  %v3159 = vld [vmem:[%s3146 + $0x30] sm:$0xf]
  %v3160 = vld [vmem:[%s3146 + $0x34] sm:$0xf]
  %v3161 = vld [vmem:[%s3146 + $0x38] sm:$0xf]
  %v3162 = vld [vmem:[%s3146 + $0x3c] sm:$0xf]
  %v3163 = vunpack.c.l.b16 %v3085
  %v3164 = vunpack.c.l.b16 %v3089
  %v3165 = vunpack.c.l.b16 %v3093
  %v3166 = vunpack.c.l.b16 %v3097
  %v3167 = vunpack.c.l.b16 %v3101
  %v3168 = vunpack.c.l.b16 %v3105
  %v3169 = vunpack.c.l.b16 %v3109
  %v3170 = vunpack.c.l.b16 %v3113
  %v3171 = vunpack.c.l.b16 %v3117
  %v3172 = vunpack.c.l.b16 %v3121
  %v3173 = vunpack.c.l.b16 %v3125
  %v3174 = vunpack.c.l.b16 %v3129
  %v3175 = vunpack.c.l.b16 %v3133
  %v3176 = vunpack.c.l.b16 %v3137
  %v3177 = vunpack.c.l.b16 %v3141
  %v3178 = vunpack.c.l.b16 %v3145
  %v3179 = vpack.c.b16 %v3164, %v3163
  %v3180 = vpack.c.b16 %v3166, %v3165
  %v3181 = vpack.c.b16 %v3168, %v3167
  %v3182 = vpack.c.b16 %v3170, %v3169
  %v3183 = vpack.c.b16 %v3172, %v3171
  %v3184 = vpack.c.b16 %v3174, %v3173
  %v3185 = vpack.c.b16 %v3176, %v3175
  %v3186 = vpack.c.b16 %v3178, %v3177
  %v3211 = vunpack.c.l.b16 %v3147
  %v3212 = vunpack.c.l.b16 %v3148
  %v3213 = vunpack.c.l.b16 %v3149
  %v3214 = vunpack.c.l.b16 %v3150
  %v3215 = vunpack.c.l.b16 %v3151
  %v3216 = vunpack.c.l.b16 %v3152
  %v3217 = vunpack.c.l.b16 %v3153
  %v3218 = vunpack.c.l.b16 %v3154
  %v3219 = vunpack.c.l.b16 %v3155
  %v3220 = vunpack.c.l.b16 %v3156
  %v3221 = vunpack.c.l.b16 %v3157
  %v3222 = vunpack.c.l.b16 %v3158
  %v3223 = vunpack.c.l.b16 %v3159
  %v3224 = vunpack.c.l.b16 %v3160
  %v3225 = vunpack.c.l.b16 %v3161
  %v3226 = vunpack.c.l.b16 %v3162
  %v3227 = vpack.c.b16 %v3212, %v3211
  %v3228 = vpack.c.b16 %v3214, %v3213
  %v3229 = vpack.c.b16 %v3216, %v3215
  %v3230 = vpack.c.b16 %v3218, %v3217
  %v3231 = vpack.c.b16 %v3220, %v3219
  %v3232 = vpack.c.b16 %v3222, %v3221
  %v3233 = vpack.c.b16 %v3224, %v3223
  %v3234 = vpack.c.b16 %v3226, %v3225
  %3243 = vmatpush.bf16.msra.mxu0 %v3234
  %3244 = vmatpush.bf16.msra.mxu0 %v3233
  %3245 = vmatpush.bf16.msra.mxu0 %v3232
  %3246 = vmatpush.bf16.msra.mxu0 %v3231
  %3247 = vmatpush.bf16.msra.mxu0 %v3230
  %3248 = vmatpush.bf16.msra.mxu0 %v3229
  %3249 = vmatpush.bf16.msra.mxu0 %v3228
  %3250 = vmatpush.bf16.msra.mxu0 %v3227
  %3251 = vmatmul.bf16.gmra.mxu0 %v3179
  %v3252 = vpop.f32.mrf.mxu0
  %v3253 = vadd.f32 0.0, %v3252
  %v3254 = vpop.f32.mrf.mxu0
  %v3255 = vadd.f32 0.0, %v3254
  %3256 = vmatmul.bf16.gmra.mxu0 %v3180
  %v3257 = vpop.f32.mrf.mxu0
  %v3258 = vadd.f32 0.0, %v3257
  %v3259 = vpop.f32.mrf.mxu0
  %v3260 = vadd.f32 0.0, %v3259
  %3261 = vmatmul.bf16.gmra.mxu0 %v3181
  %v3262 = vpop.f32.mrf.mxu0
  %v3263 = vadd.f32 0.0, %v3262
  %v3264 = vpop.f32.mrf.mxu0
  %v3265 = vadd.f32 0.0, %v3264
  %3266 = vmatmul.bf16.gmra.mxu0 %v3182
  %v3267 = vpop.f32.mrf.mxu0
  %v3268 = vadd.f32 0.0, %v3267
  %v3269 = vpop.f32.mrf.mxu0
  %v3270 = vadd.f32 0.0, %v3269
  %3271 = vmatmul.bf16.gmra.mxu0 %v3183
  %v3272 = vpop.f32.mrf.mxu0
  %v3273 = vadd.f32 0.0, %v3272
  %v3274 = vpop.f32.mrf.mxu0
  %v3275 = vadd.f32 0.0, %v3274
  %3276 = vmatmul.bf16.gmra.mxu0 %v3184
  %v3277 = vpop.f32.mrf.mxu0
  %v3278 = vadd.f32 0.0, %v3277
  %v3279 = vpop.f32.mrf.mxu0
  %v3280 = vadd.f32 0.0, %v3279
  %3281 = vmatmul.bf16.gmra.mxu0 %v3185
  %v3282 = vpop.f32.mrf.mxu0
  %v3283 = vadd.f32 0.0, %v3282
  %v3284 = vpop.f32.mrf.mxu0
  %v3285 = vadd.f32 0.0, %v3284
  %3286 = vmatmul.bf16.gmra.mxu0 %v3186
  %v3287 = vpop.f32.mrf.mxu0
  %v3288 = vadd.f32 0.0, %v3287
  %v3289 = vpop.f32.mrf.mxu0
  %v3290 = vadd.f32 0.0, %v3289
  %3291 = vdwg.mxu0
  %v3292 = vadd.f32 %v2992, %v3253
  %v3293 = vadd.f32 %v2994, %v3255
  %v3294 = vadd.f32 %v2997, %v3258
  %v3295 = vadd.f32 %v2999, %v3260
  %v3296 = vadd.f32 %v3002, %v3263
  %v3297 = vadd.f32 %v3004, %v3265
  %v3298 = vadd.f32 %v3007, %v3268
  %v3299 = vadd.f32 %v3009, %v3270
  %v3300 = vadd.f32 %v3012, %v3273
  %v3301 = vadd.f32 %v3014, %v3275
  %v3302 = vadd.f32 %v3017, %v3278
  %v3303 = vadd.f32 %v3019, %v3280
  %v3304 = vadd.f32 %v3022, %v3283
  %v3305 = vadd.f32 %v3024, %v3285
  %v3306 = vadd.f32 %v3027, %v3288
  %v3307 = vadd.f32 %v3029, %v3290
  %v3308 = vld [vmem:[%s2369] sm:$0xf]
  %v3309 = vld [vmem:[%s2369 + $0x8] sm:$0xf]
  %v3310 = vld [vmem:[%s2369 + $0x10] sm:$0xf]
  %v3311 = vld [vmem:[%s2369 + $0x18] sm:$0xf]
  %v3312 = vld [vmem:[%s2369 + $0x20] sm:$0xf]
  %v3313 = vld [vmem:[%s2369 + $0x28] sm:$0xf]
  %v3314 = vld [vmem:[%s2369 + $0x30] sm:$0xf]
  %v3315 = vld [vmem:[%s2369 + $0x38] sm:$0xf]
  %v3316 = vld [vmem:[%s2369 + $0x50] sm:$0xf]
  %v3317 = vld [vmem:[%s2369 + $0x58] sm:$0xf]
  %v3318 = vld [vmem:[%s2369 + $0x60] sm:$0xf]
  %v3319 = vld [vmem:[%s2369 + $0x68] sm:$0xf]
  %v3320 = vld [vmem:[%s2369 + $0x70] sm:$0xf]
  %v3321 = vld [vmem:[%s2369 + $0x78] sm:$0xf]
  %v3322 = vld [vmem:[%s2369 + $0x80] sm:$0xf]
  %v3323 = vld [vmem:[%s2369 + $0x88] sm:$0xf]
  %s3324 = scalar_lea.vmem %s3, 192
  %v3325 = vld [vmem:[%s3324] sm:$0xf]
  %v3326 = vld [vmem:[%s3324 + $0x4] sm:$0xf]
  %v3327 = vld [vmem:[%s3324 + $0x8] sm:$0xf]
  %v3328 = vld [vmem:[%s3324 + $0xc] sm:$0xf]
  %v3329 = vld [vmem:[%s3324 + $0x10] sm:$0xf]
  %v3330 = vld [vmem:[%s3324 + $0x14] sm:$0xf]
  %v3331 = vld [vmem:[%s3324 + $0x18] sm:$0xf]
  %v3332 = vld [vmem:[%s3324 + $0x1c] sm:$0xf]
  %v3333 = vld [vmem:[%s3324 + $0x20] sm:$0xf]
  %v3334 = vld [vmem:[%s3324 + $0x24] sm:$0xf]
  %v3335 = vld [vmem:[%s3324 + $0x28] sm:$0xf]
  %v3336 = vld [vmem:[%s3324 + $0x2c] sm:$0xf]
  %v3337 = vld [vmem:[%s3324 + $0x30] sm:$0xf]
  %v3338 = vld [vmem:[%s3324 + $0x34] sm:$0xf]
  %v3339 = vld [vmem:[%s3324 + $0x38] sm:$0xf]
  %v3340 = vld [vmem:[%s3324 + $0x3c] sm:$0xf]
  %v3357 = vunpack.c.l.b16 %v3308
  %v3358 = vunpack.c.l.b16 %v3309
  %v3359 = vunpack.c.l.b16 %v3310
  %v3360 = vunpack.c.l.b16 %v3311
  %v3361 = vunpack.c.l.b16 %v3312
  %v3362 = vunpack.c.l.b16 %v3313
  %v3363 = vunpack.c.l.b16 %v3314
  %v3364 = vunpack.c.l.b16 %v3315
  %v3365 = vunpack.c.l.b16 %v3316
  %v3366 = vunpack.c.l.b16 %v3317
  %v3367 = vunpack.c.l.b16 %v3318
  %v3368 = vunpack.c.l.b16 %v3319
  %v3369 = vunpack.c.l.b16 %v3320
  %v3370 = vunpack.c.l.b16 %v3321
  %v3371 = vunpack.c.l.b16 %v3322
  %v3372 = vunpack.c.l.b16 %v3323
  %v3373 = vpack.c.b16 %v3358, %v3357
  %v3374 = vpack.c.b16 %v3360, %v3359
  %v3375 = vpack.c.b16 %v3362, %v3361
  %v3376 = vpack.c.b16 %v3364, %v3363
  %v3377 = vpack.c.b16 %v3366, %v3365
  %v3378 = vpack.c.b16 %v3368, %v3367
  %v3379 = vpack.c.b16 %v3370, %v3369
  %v3380 = vpack.c.b16 %v3372, %v3371
  %v3405 = vunpack.c.l.b16 %v3325
  %v3406 = vunpack.c.l.b16 %v3326
  %v3407 = vunpack.c.l.b16 %v3327
  %v3408 = vunpack.c.l.b16 %v3328
  %v3409 = vunpack.c.l.b16 %v3329
  %v3410 = vunpack.c.l.b16 %v3330
  %v3411 = vunpack.c.l.b16 %v3331
  %v3412 = vunpack.c.l.b16 %v3332
  %v3413 = vunpack.c.l.b16 %v3333
  %v3414 = vunpack.c.l.b16 %v3334
  %v3415 = vunpack.c.l.b16 %v3335
  %v3416 = vunpack.c.l.b16 %v3336
  %v3417 = vunpack.c.l.b16 %v3337
  %v3418 = vunpack.c.l.b16 %v3338
  %v3419 = vunpack.c.l.b16 %v3339
  %v3420 = vunpack.c.l.b16 %v3340
  %v3421 = vpack.c.b16 %v3406, %v3405
  %v3422 = vpack.c.b16 %v3408, %v3407
  %v3423 = vpack.c.b16 %v3410, %v3409
  %v3424 = vpack.c.b16 %v3412, %v3411
  %v3425 = vpack.c.b16 %v3414, %v3413
  %v3426 = vpack.c.b16 %v3416, %v3415
  %v3427 = vpack.c.b16 %v3418, %v3417
  %v3428 = vpack.c.b16 %v3420, %v3419
  %3437 = vmatpush.bf16.msra.mxu0 %v3428
  %3438 = vmatpush.bf16.msra.mxu0 %v3427
  %3439 = vmatpush.bf16.msra.mxu0 %v3426
  %3440 = vmatpush.bf16.msra.mxu0 %v3425
  %3441 = vmatpush.bf16.msra.mxu0 %v3424
  %3442 = vmatpush.bf16.msra.mxu0 %v3423
  %3443 = vmatpush.bf16.msra.mxu0 %v3422
  %3444 = vmatpush.bf16.msra.mxu0 %v3421
  %3445 = vmatmul.bf16.gmra.mxu0 %v3373
  %v3446 = vpop.f32.mrf.mxu0
  %v3447 = vadd.f32 0.0, %v3446
  %v3448 = vpop.f32.mrf.mxu0
  %v3449 = vadd.f32 0.0, %v3448
  %3450 = vmatmul.bf16.gmra.mxu0 %v3374
  %v3451 = vpop.f32.mrf.mxu0
  %v3452 = vadd.f32 0.0, %v3451
  %v3453 = vpop.f32.mrf.mxu0
  %v3454 = vadd.f32 0.0, %v3453
  %3455 = vmatmul.bf16.gmra.mxu0 %v3375
  %v3456 = vpop.f32.mrf.mxu0
  %v3457 = vadd.f32 0.0, %v3456
  %v3458 = vpop.f32.mrf.mxu0
  %v3459 = vadd.f32 0.0, %v3458
  %3460 = vmatmul.bf16.gmra.mxu0 %v3376
  %v3461 = vpop.f32.mrf.mxu0
  %v3462 = vadd.f32 0.0, %v3461
  %v3463 = vpop.f32.mrf.mxu0
  %v3464 = vadd.f32 0.0, %v3463
  %3465 = vmatmul.bf16.gmra.mxu0 %v3377
  %v3466 = vpop.f32.mrf.mxu0
  %v3467 = vadd.f32 0.0, %v3466
  %v3468 = vpop.f32.mrf.mxu0
  %v3469 = vadd.f32 0.0, %v3468
  %3470 = vmatmul.bf16.gmra.mxu0 %v3378
  %v3471 = vpop.f32.mrf.mxu0
  %v3472 = vadd.f32 0.0, %v3471
  %v3473 = vpop.f32.mrf.mxu0
  %v3474 = vadd.f32 0.0, %v3473
  %3475 = vmatmul.bf16.gmra.mxu0 %v3379
  %v3476 = vpop.f32.mrf.mxu0
  %v3477 = vadd.f32 0.0, %v3476
  %v3478 = vpop.f32.mrf.mxu0
  %v3479 = vadd.f32 0.0, %v3478
  %3480 = vmatmul.bf16.gmra.mxu0 %v3380
  %v3481 = vpop.f32.mrf.mxu0
  %v3482 = vadd.f32 0.0, %v3481
  %v3483 = vpop.f32.mrf.mxu0
  %v3484 = vadd.f32 0.0, %v3483
  %3485 = vdwg.mxu0
  %v3486 = vadd.f32 %v3292, %v3447
  %v3487 = vadd.f32 %v3293, %v3449
  %v3488 = vadd.f32 %v3294, %v3452
  %v3489 = vadd.f32 %v3295, %v3454
  %v3490 = vadd.f32 %v3296, %v3457
  %v3491 = vadd.f32 %v3297, %v3459
  %v3492 = vadd.f32 %v3298, %v3462
  %v3493 = vadd.f32 %v3299, %v3464
  %v3494 = vadd.f32 %v3300, %v3467
  %v3495 = vadd.f32 %v3301, %v3469
  %v3496 = vadd.f32 %v3302, %v3472
  %v3497 = vadd.f32 %v3303, %v3474
  %v3498 = vadd.f32 %v3304, %v3477
  %v3499 = vadd.f32 %v3305, %v3479
  %v3500 = vadd.f32 %v3306, %v3482
  %v3501 = vadd.f32 %v3307, %v3484
  %v3502 = vld [vmem:[%s2369] sm:$0xf]
  %v3503 = vld [vmem:[%s2369 + $0x4] sm:$0x1]
  %v3504 = vld [vmem:[%s2369 + $0x8] sm:$0xf]
  %v3505 = vld [vmem:[%s2369 + $0xc] sm:$0x1]
  %v3506 = vld [vmem:[%s2369 + $0x10] sm:$0xf]
  %v3507 = vld [vmem:[%s2369 + $0x14] sm:$0x1]
  %v3508 = vld [vmem:[%s2369 + $0x18] sm:$0xf]
  %v3509 = vld [vmem:[%s2369 + $0x1c] sm:$0x1]
  %v3510 = vld [vmem:[%s2369 + $0x20] sm:$0xf]
  %v3511 = vld [vmem:[%s2369 + $0x24] sm:$0x1]
  %v3512 = vld [vmem:[%s2369 + $0x28] sm:$0xf]
  %v3513 = vld [vmem:[%s2369 + $0x2c] sm:$0x1]
  %v3514 = vld [vmem:[%s2369 + $0x30] sm:$0xf]
  %v3515 = vld [vmem:[%s2369 + $0x34] sm:$0x1]
  %v3516 = vld [vmem:[%s2369 + $0x38] sm:$0xf]
  %v3517 = vld [vmem:[%s2369 + $0x3c] sm:$0x1]
  %v3518 = vld [vmem:[%s2369 + $0x50] sm:$0xf]
  %v3519 = vld [vmem:[%s2369 + $0x54] sm:$0x1]
  %v3520 = vld [vmem:[%s2369 + $0x58] sm:$0xf]
  %v3521 = vld [vmem:[%s2369 + $0x5c] sm:$0x1]
  %v3522 = vld [vmem:[%s2369 + $0x60] sm:$0xf]
  %v3523 = vld [vmem:[%s2369 + $0x64] sm:$0x1]
  %v3524 = vld [vmem:[%s2369 + $0x68] sm:$0xf]
  %v3525 = vld [vmem:[%s2369 + $0x6c] sm:$0x1]
  %v3526 = vld [vmem:[%s2369 + $0x70] sm:$0xf]
  %v3527 = vld [vmem:[%s2369 + $0x74] sm:$0x1]
  %v3528 = vld [vmem:[%s2369 + $0x78] sm:$0xf]
  %v3529 = vld [vmem:[%s2369 + $0x7c] sm:$0x1]
  %v3530 = vld [vmem:[%s2369 + $0x80] sm:$0xf]
  %v3531 = vld [vmem:[%s2369 + $0x84] sm:$0x1]
  %v3532 = vld [vmem:[%s2369 + $0x88] sm:$0xf]
  %v3533 = vld [vmem:[%s2369 + $0x8c] sm:$0x1]
  %v3535 = vshrl.u32 %v3502, 16
  %v3537 = vrot.slane %v3535, 4
  %v3538 = vshll.u32 %v3502, 16
  %v3540 = vrot.slane %v3538, 5
  %v3541 = vor.u32 %v3537, %v3540
  %v3542 = vrot.slane %v3541, 4
  %v3544 = vshll.u32 %v3503, 16
  %v3546 = vrot.slane %v3544, 5
  %v3547 = vsel %vm462, %v3542, %v3546
  %v3549 = vshrl.u32 %v3504, 16
  %v3551 = vrot.slane %v3549, 4
  %v3552 = vshll.u32 %v3504, 16
  %v3554 = vrot.slane %v3552, 5
  %v3555 = vor.u32 %v3551, %v3554
  %v3556 = vrot.slane %v3555, 4
  %v3558 = vshll.u32 %v3505, 16
  %v3560 = vrot.slane %v3558, 5
  %v3561 = vsel %vm462, %v3556, %v3560
  %v3563 = vshrl.u32 %v3506, 16
  %v3565 = vrot.slane %v3563, 4
  %v3566 = vshll.u32 %v3506, 16
  %v3568 = vrot.slane %v3566, 5
  %v3569 = vor.u32 %v3565, %v3568
  %v3570 = vrot.slane %v3569, 4
  %v3572 = vshll.u32 %v3507, 16
  %v3574 = vrot.slane %v3572, 5
  %v3575 = vsel %vm462, %v3570, %v3574
  %v3577 = vshrl.u32 %v3508, 16
  %v3579 = vrot.slane %v3577, 4
  %v3580 = vshll.u32 %v3508, 16
  %v3582 = vrot.slane %v3580, 5
  %v3583 = vor.u32 %v3579, %v3582
  %v3584 = vrot.slane %v3583, 4
  %v3586 = vshll.u32 %v3509, 16
  %v3588 = vrot.slane %v3586, 5
  %v3589 = vsel %vm462, %v3584, %v3588
  %v3591 = vshrl.u32 %v3510, 16
  %v3593 = vrot.slane %v3591, 4
  %v3594 = vshll.u32 %v3510, 16
  %v3596 = vrot.slane %v3594, 5
  %v3597 = vor.u32 %v3593, %v3596
  %v3598 = vrot.slane %v3597, 4
  %v3600 = vshll.u32 %v3511, 16
  %v3602 = vrot.slane %v3600, 5
  %v3603 = vsel %vm462, %v3598, %v3602
  %v3605 = vshrl.u32 %v3512, 16
  %v3607 = vrot.slane %v3605, 4
  %v3608 = vshll.u32 %v3512, 16
  %v3610 = vrot.slane %v3608, 5
  %v3611 = vor.u32 %v3607, %v3610
  %v3612 = vrot.slane %v3611, 4
  %v3614 = vshll.u32 %v3513, 16
  %v3616 = vrot.slane %v3614, 5
  %v3617 = vsel %vm462, %v3612, %v3616
  %v3619 = vshrl.u32 %v3514, 16
  %v3621 = vrot.slane %v3619, 4
  %v3622 = vshll.u32 %v3514, 16
  %v3624 = vrot.slane %v3622, 5
  %v3625 = vor.u32 %v3621, %v3624
  %v3626 = vrot.slane %v3625, 4
  %v3628 = vshll.u32 %v3515, 16
  %v3630 = vrot.slane %v3628, 5
  %v3631 = vsel %vm462, %v3626, %v3630
  %v3633 = vshrl.u32 %v3516, 16
  %v3635 = vrot.slane %v3633, 4
  %v3636 = vshll.u32 %v3516, 16
  %v3638 = vrot.slane %v3636, 5
  %v3639 = vor.u32 %v3635, %v3638
  %v3640 = vrot.slane %v3639, 4
  %v3642 = vshll.u32 %v3517, 16
  %v3644 = vrot.slane %v3642, 5
  %v3645 = vsel %vm462, %v3640, %v3644
  %v3647 = vshrl.u32 %v3518, 16
  %v3649 = vrot.slane %v3647, 4
  %v3650 = vshll.u32 %v3518, 16
  %v3652 = vrot.slane %v3650, 5
  %v3653 = vor.u32 %v3649, %v3652
  %v3654 = vrot.slane %v3653, 4
  %v3656 = vshll.u32 %v3519, 16
  %v3658 = vrot.slane %v3656, 5
  %v3659 = vsel %vm462, %v3654, %v3658
  %v3661 = vshrl.u32 %v3520, 16
  %v3663 = vrot.slane %v3661, 4
  %v3664 = vshll.u32 %v3520, 16
  %v3666 = vrot.slane %v3664, 5
  %v3667 = vor.u32 %v3663, %v3666
  %v3668 = vrot.slane %v3667, 4
  %v3670 = vshll.u32 %v3521, 16
  %v3672 = vrot.slane %v3670, 5
  %v3673 = vsel %vm462, %v3668, %v3672
  %v3675 = vshrl.u32 %v3522, 16
  %v3677 = vrot.slane %v3675, 4
  %v3678 = vshll.u32 %v3522, 16
  %v3680 = vrot.slane %v3678, 5
  %v3681 = vor.u32 %v3677, %v3680
  %v3682 = vrot.slane %v3681, 4
  %v3684 = vshll.u32 %v3523, 16
  %v3686 = vrot.slane %v3684, 5
  %v3687 = vsel %vm462, %v3682, %v3686
  %v3689 = vshrl.u32 %v3524, 16
  %v3691 = vrot.slane %v3689, 4
  %v3692 = vshll.u32 %v3524, 16
  %v3694 = vrot.slane %v3692, 5
  %v3695 = vor.u32 %v3691, %v3694
  %v3696 = vrot.slane %v3695, 4
  %v3698 = vshll.u32 %v3525, 16
  %v3700 = vrot.slane %v3698, 5
  %v3701 = vsel %vm462, %v3696, %v3700
  %v3703 = vshrl.u32 %v3526, 16
  %v3705 = vrot.slane %v3703, 4
  %v3706 = vshll.u32 %v3526, 16
  %v3708 = vrot.slane %v3706, 5
  %v3709 = vor.u32 %v3705, %v3708
  %v3710 = vrot.slane %v3709, 4
  %v3712 = vshll.u32 %v3527, 16
  %v3714 = vrot.slane %v3712, 5
  %v3715 = vsel %vm462, %v3710, %v3714
  %v3717 = vshrl.u32 %v3528, 16
  %v3719 = vrot.slane %v3717, 4
  %v3720 = vshll.u32 %v3528, 16
  %v3722 = vrot.slane %v3720, 5
  %v3723 = vor.u32 %v3719, %v3722
  %v3724 = vrot.slane %v3723, 4
  %v3726 = vshll.u32 %v3529, 16
  %v3728 = vrot.slane %v3726, 5
  %v3729 = vsel %vm462, %v3724, %v3728
  %v3731 = vshrl.u32 %v3530, 16
  %v3733 = vrot.slane %v3731, 4
  %v3734 = vshll.u32 %v3530, 16
  %v3736 = vrot.slane %v3734, 5
  %v3737 = vor.u32 %v3733, %v3736
  %v3738 = vrot.slane %v3737, 4
  %v3740 = vshll.u32 %v3531, 16
  %v3742 = vrot.slane %v3740, 5
  %v3743 = vsel %vm462, %v3738, %v3742
  %v3745 = vshrl.u32 %v3532, 16
  %v3747 = vrot.slane %v3745, 4
  %v3748 = vshll.u32 %v3532, 16
  %v3750 = vrot.slane %v3748, 5
  %v3751 = vor.u32 %v3747, %v3750
  %v3752 = vrot.slane %v3751, 4
  %v3754 = vshll.u32 %v3533, 16
  %v3756 = vrot.slane %v3754, 5
  %v3757 = vsel %vm462, %v3752, %v3756
  %s3758 = scalar_lea.vmem %s3, 256
  %v3759 = vld [vmem:[%s3758] sm:$0xf]
  %v3760 = vld [vmem:[%s3758 + $0x4] sm:$0xf]
  %v3761 = vld [vmem:[%s3758 + $0x8] sm:$0xf]
  %v3762 = vld [vmem:[%s3758 + $0xc] sm:$0xf]
  %v3763 = vld [vmem:[%s3758 + $0x10] sm:$0xf]
  %v3764 = vld [vmem:[%s3758 + $0x14] sm:$0xf]
  %v3765 = vld [vmem:[%s3758 + $0x18] sm:$0xf]
  %v3766 = vld [vmem:[%s3758 + $0x1c] sm:$0xf]
  %v3767 = vld [vmem:[%s3758 + $0x20] sm:$0xf]
  %v3768 = vld [vmem:[%s3758 + $0x24] sm:$0xf]
  %v3769 = vld [vmem:[%s3758 + $0x28] sm:$0xf]
  %v3770 = vld [vmem:[%s3758 + $0x2c] sm:$0xf]
  %v3771 = vld [vmem:[%s3758 + $0x30] sm:$0xf]
  %v3772 = vld [vmem:[%s3758 + $0x34] sm:$0xf]
  %v3773 = vld [vmem:[%s3758 + $0x38] sm:$0xf]
  %v3774 = vld [vmem:[%s3758 + $0x3c] sm:$0xf]
  %v3775 = vunpack.c.l.b16 %v3547
  %v3776 = vunpack.c.l.b16 %v3561
  %v3777 = vunpack.c.l.b16 %v3575
  %v3778 = vunpack.c.l.b16 %v3589
  %v3779 = vunpack.c.l.b16 %v3603
  %v3780 = vunpack.c.l.b16 %v3617
  %v3781 = vunpack.c.l.b16 %v3631
  %v3782 = vunpack.c.l.b16 %v3645
  %v3783 = vunpack.c.l.b16 %v3659
  %v3784 = vunpack.c.l.b16 %v3673
  %v3785 = vunpack.c.l.b16 %v3687
  %v3786 = vunpack.c.l.b16 %v3701
  %v3787 = vunpack.c.l.b16 %v3715
  %v3788 = vunpack.c.l.b16 %v3729
  %v3789 = vunpack.c.l.b16 %v3743
  %v3790 = vunpack.c.l.b16 %v3757
  %v3791 = vpack.c.b16 %v3776, %v3775
  %v3792 = vpack.c.b16 %v3778, %v3777
  %v3793 = vpack.c.b16 %v3780, %v3779
  %v3794 = vpack.c.b16 %v3782, %v3781
  %v3795 = vpack.c.b16 %v3784, %v3783
  %v3796 = vpack.c.b16 %v3786, %v3785
  %v3797 = vpack.c.b16 %v3788, %v3787
  %v3798 = vpack.c.b16 %v3790, %v3789
  %v3823 = vunpack.c.l.b16 %v3759
  %v3824 = vunpack.c.l.b16 %v3760
  %v3825 = vunpack.c.l.b16 %v3761
  %v3826 = vunpack.c.l.b16 %v3762
  %v3827 = vunpack.c.l.b16 %v3763
  %v3828 = vunpack.c.l.b16 %v3764
  %v3829 = vunpack.c.l.b16 %v3765
  %v3830 = vunpack.c.l.b16 %v3766
  %v3831 = vunpack.c.l.b16 %v3767
  %v3832 = vunpack.c.l.b16 %v3768
  %v3833 = vunpack.c.l.b16 %v3769
  %v3834 = vunpack.c.l.b16 %v3770
  %v3835 = vunpack.c.l.b16 %v3771
  %v3836 = vunpack.c.l.b16 %v3772
  %v3837 = vunpack.c.l.b16 %v3773
  %v3838 = vunpack.c.l.b16 %v3774
  %v3839 = vpack.c.b16 %v3824, %v3823
  %v3840 = vpack.c.b16 %v3826, %v3825
  %v3841 = vpack.c.b16 %v3828, %v3827
  %v3842 = vpack.c.b16 %v3830, %v3829
  %v3843 = vpack.c.b16 %v3832, %v3831
  %v3844 = vpack.c.b16 %v3834, %v3833
  %v3845 = vpack.c.b16 %v3836, %v3835
  %v3846 = vpack.c.b16 %v3838, %v3837
  %3855 = vmatpush.bf16.msra.mxu0 %v3846
  %3856 = vmatpush.bf16.msra.mxu0 %v3845
  %3857 = vmatpush.bf16.msra.mxu0 %v3844
  %3858 = vmatpush.bf16.msra.mxu0 %v3843
  %3859 = vmatpush.bf16.msra.mxu0 %v3842
  %3860 = vmatpush.bf16.msra.mxu0 %v3841
  %3861 = vmatpush.bf16.msra.mxu0 %v3840
  %3862 = vmatpush.bf16.msra.mxu0 %v3839
  %3863 = vmatmul.bf16.gmra.mxu0 %v3791
  %v3864 = vpop.f32.mrf.mxu0
  %v3865 = vadd.f32 0.0, %v3864
  %v3866 = vpop.f32.mrf.mxu0
  %v3867 = vadd.f32 0.0, %v3866
  %3868 = vmatmul.bf16.gmra.mxu0 %v3792
  %v3869 = vpop.f32.mrf.mxu0
  %v3870 = vadd.f32 0.0, %v3869
  %v3871 = vpop.f32.mrf.mxu0
  %v3872 = vadd.f32 0.0, %v3871
  %3873 = vmatmul.bf16.gmra.mxu0 %v3793
  %v3874 = vpop.f32.mrf.mxu0
  %v3875 = vadd.f32 0.0, %v3874
  %v3876 = vpop.f32.mrf.mxu0
  %v3877 = vadd.f32 0.0, %v3876
  %3878 = vmatmul.bf16.gmra.mxu0 %v3794
  %v3879 = vpop.f32.mrf.mxu0
  %v3880 = vadd.f32 0.0, %v3879
  %v3881 = vpop.f32.mrf.mxu0
  %v3882 = vadd.f32 0.0, %v3881
  %3883 = vmatmul.bf16.gmra.mxu0 %v3795
  %v3884 = vpop.f32.mrf.mxu0
  %v3885 = vadd.f32 0.0, %v3884
  %v3886 = vpop.f32.mrf.mxu0
  %v3887 = vadd.f32 0.0, %v3886
  %3888 = vmatmul.bf16.gmra.mxu0 %v3796
  %v3889 = vpop.f32.mrf.mxu0
  %v3890 = vadd.f32 0.0, %v3889
  %v3891 = vpop.f32.mrf.mxu0
  %v3892 = vadd.f32 0.0, %v3891
  %3893 = vmatmul.bf16.gmra.mxu0 %v3797
  %v3894 = vpop.f32.mrf.mxu0
  %v3895 = vadd.f32 0.0, %v3894
  %v3896 = vpop.f32.mrf.mxu0
  %v3897 = vadd.f32 0.0, %v3896
  %3898 = vmatmul.bf16.gmra.mxu0 %v3798
  %v3899 = vpop.f32.mrf.mxu0
  %v3900 = vadd.f32 0.0, %v3899
  %v3901 = vpop.f32.mrf.mxu0
  %v3902 = vadd.f32 0.0, %v3901
  %3903 = vdwg.mxu0
  %v3904 = vadd.f32 %v3486, %v3865
  %v3905 = vadd.f32 %v3487, %v3867
  %v3906 = vadd.f32 %v3488, %v3870
  %v3907 = vadd.f32 %v3489, %v3872
  %v3908 = vadd.f32 %v3490, %v3875
  %v3909 = vadd.f32 %v3491, %v3877
  %v3910 = vadd.f32 %v3492, %v3880
  %v3911 = vadd.f32 %v3493, %v3882
  %v3912 = vadd.f32 %v3494, %v3885
  %v3913 = vadd.f32 %v3495, %v3887
  %v3914 = vadd.f32 %v3496, %v3890
  %v3915 = vadd.f32 %v3497, %v3892
  %v3916 = vadd.f32 %v3498, %v3895
  %v3917 = vadd.f32 %v3499, %v3897
  %v3918 = vadd.f32 %v3500, %v3900
  %v3919 = vadd.f32 %v3501, %v3902
  %v3920 = vld [vmem:[%s2369] sm:$0xe]
  %v3921 = vld [vmem:[%s2369 + $0x8] sm:$0xe]
  %v3922 = vld [vmem:[%s2369 + $0x10] sm:$0xe]
  %v3923 = vld [vmem:[%s2369 + $0x18] sm:$0xe]
  %v3924 = vld [vmem:[%s2369 + $0x20] sm:$0xe]
  %v3925 = vld [vmem:[%s2369 + $0x28] sm:$0xe]
  %v3926 = vld [vmem:[%s2369 + $0x30] sm:$0xe]
  %v3927 = vld [vmem:[%s2369 + $0x38] sm:$0xe]
  %v3928 = vld [vmem:[%s2369 + $0x50] sm:$0xe]
  %v3929 = vld [vmem:[%s2369 + $0x58] sm:$0xe]
  %v3930 = vld [vmem:[%s2369 + $0x60] sm:$0xe]
  %v3931 = vld [vmem:[%s2369 + $0x68] sm:$0xe]
  %v3932 = vld [vmem:[%s2369 + $0x70] sm:$0xe]
  %v3933 = vld [vmem:[%s2369 + $0x78] sm:$0xe]
  %v3934 = vld [vmem:[%s2369 + $0x80] sm:$0xe]
  %v3935 = vld [vmem:[%s2369 + $0x88] sm:$0xe]
  %v3968 = vrot.slane %v3920, 5
  %v3969 = vrot.slane %v3968, 4
  %v3970 = vrot.slane %v3503, 5
  %v3971 = vsel %vm3081, %v3969, %v3970
  %v3972 = vrot.slane %v3921, 5
  %v3973 = vrot.slane %v3972, 4
  %v3974 = vrot.slane %v3505, 5
  %v3975 = vsel %vm3081, %v3973, %v3974
  %v3976 = vrot.slane %v3922, 5
  %v3977 = vrot.slane %v3976, 4
  %v3978 = vrot.slane %v3507, 5
  %v3979 = vsel %vm3081, %v3977, %v3978
  %v3980 = vrot.slane %v3923, 5
  %v3981 = vrot.slane %v3980, 4
  %v3982 = vrot.slane %v3509, 5
  %v3983 = vsel %vm3081, %v3981, %v3982
  %v3984 = vrot.slane %v3924, 5
  %v3985 = vrot.slane %v3984, 4
  %v3986 = vrot.slane %v3511, 5
  %v3987 = vsel %vm3081, %v3985, %v3986
  %v3988 = vrot.slane %v3925, 5
  %v3989 = vrot.slane %v3988, 4
  %v3990 = vrot.slane %v3513, 5
  %v3991 = vsel %vm3081, %v3989, %v3990
  %v3992 = vrot.slane %v3926, 5
  %v3993 = vrot.slane %v3992, 4
  %v3994 = vrot.slane %v3515, 5
  %v3995 = vsel %vm3081, %v3993, %v3994
  %v3996 = vrot.slane %v3927, 5
  %v3997 = vrot.slane %v3996, 4
  %v3998 = vrot.slane %v3517, 5
  %v3999 = vsel %vm3081, %v3997, %v3998
  %v4000 = vrot.slane %v3928, 5
  %v4001 = vrot.slane %v4000, 4
  %v4002 = vrot.slane %v3519, 5
  %v4003 = vsel %vm3081, %v4001, %v4002
  %v4004 = vrot.slane %v3929, 5
  %v4005 = vrot.slane %v4004, 4
  %v4006 = vrot.slane %v3521, 5
  %v4007 = vsel %vm3081, %v4005, %v4006
  %v4008 = vrot.slane %v3930, 5
  %v4009 = vrot.slane %v4008, 4
  %v4010 = vrot.slane %v3523, 5
  %v4011 = vsel %vm3081, %v4009, %v4010
  %v4012 = vrot.slane %v3931, 5
  %v4013 = vrot.slane %v4012, 4
  %v4014 = vrot.slane %v3525, 5
  %v4015 = vsel %vm3081, %v4013, %v4014
  %v4016 = vrot.slane %v3932, 5
  %v4017 = vrot.slane %v4016, 4
  %v4018 = vrot.slane %v3527, 5
  %v4019 = vsel %vm3081, %v4017, %v4018
  %v4020 = vrot.slane %v3933, 5
  %v4021 = vrot.slane %v4020, 4
  %v4022 = vrot.slane %v3529, 5
  %v4023 = vsel %vm3081, %v4021, %v4022
  %v4024 = vrot.slane %v3934, 5
  %v4025 = vrot.slane %v4024, 4
  %v4026 = vrot.slane %v3531, 5
  %v4027 = vsel %vm3081, %v4025, %v4026
  %v4028 = vrot.slane %v3935, 5
  %v4029 = vrot.slane %v4028, 4
  %v4030 = vrot.slane %v3533, 5
  %v4031 = vsel %vm3081, %v4029, %v4030
  %s4032 = scalar_lea.vmem %s3, 320
  %v4033 = vld [vmem:[%s4032] sm:$0xf]
  %v4034 = vld [vmem:[%s4032 + $0x4] sm:$0xf]
  %v4035 = vld [vmem:[%s4032 + $0x8] sm:$0xf]
  %v4036 = vld [vmem:[%s4032 + $0xc] sm:$0xf]
  %v4037 = vld [vmem:[%s4032 + $0x10] sm:$0xf]
  %v4038 = vld [vmem:[%s4032 + $0x14] sm:$0xf]
  %v4039 = vld [vmem:[%s4032 + $0x18] sm:$0xf]
  %v4040 = vld [vmem:[%s4032 + $0x1c] sm:$0xf]
  %v4041 = vld [vmem:[%s4032 + $0x20] sm:$0xf]
  %v4042 = vld [vmem:[%s4032 + $0x24] sm:$0xf]
  %v4043 = vld [vmem:[%s4032 + $0x28] sm:$0xf]
  %v4044 = vld [vmem:[%s4032 + $0x2c] sm:$0xf]
  %v4045 = vld [vmem:[%s4032 + $0x30] sm:$0xf]
  %v4046 = vld [vmem:[%s4032 + $0x34] sm:$0xf]
  %v4047 = vld [vmem:[%s4032 + $0x38] sm:$0xf]
  %v4048 = vld [vmem:[%s4032 + $0x3c] sm:$0xf]
  %v4049 = vunpack.c.l.b16 %v3971
  %v4050 = vunpack.c.l.b16 %v3975
  %v4051 = vunpack.c.l.b16 %v3979
  %v4052 = vunpack.c.l.b16 %v3983
  %v4053 = vunpack.c.l.b16 %v3987
  %v4054 = vunpack.c.l.b16 %v3991
  %v4055 = vunpack.c.l.b16 %v3995
  %v4056 = vunpack.c.l.b16 %v3999
  %v4057 = vunpack.c.l.b16 %v4003
  %v4058 = vunpack.c.l.b16 %v4007
  %v4059 = vunpack.c.l.b16 %v4011
  %v4060 = vunpack.c.l.b16 %v4015
  %v4061 = vunpack.c.l.b16 %v4019
  %v4062 = vunpack.c.l.b16 %v4023
  %v4063 = vunpack.c.l.b16 %v4027
  %v4064 = vunpack.c.l.b16 %v4031
  %v4065 = vpack.c.b16 %v4050, %v4049
  %v4066 = vpack.c.b16 %v4052, %v4051
  %v4067 = vpack.c.b16 %v4054, %v4053
  %v4068 = vpack.c.b16 %v4056, %v4055
  %v4069 = vpack.c.b16 %v4058, %v4057
  %v4070 = vpack.c.b16 %v4060, %v4059
  %v4071 = vpack.c.b16 %v4062, %v4061
  %v4072 = vpack.c.b16 %v4064, %v4063
  %v4097 = vunpack.c.l.b16 %v4033
  %v4098 = vunpack.c.l.b16 %v4034
  %v4099 = vunpack.c.l.b16 %v4035
  %v4100 = vunpack.c.l.b16 %v4036
  %v4101 = vunpack.c.l.b16 %v4037
  %v4102 = vunpack.c.l.b16 %v4038
  %v4103 = vunpack.c.l.b16 %v4039
  %v4104 = vunpack.c.l.b16 %v4040
  %v4105 = vunpack.c.l.b16 %v4041
  %v4106 = vunpack.c.l.b16 %v4042
  %v4107 = vunpack.c.l.b16 %v4043
  %v4108 = vunpack.c.l.b16 %v4044
  %v4109 = vunpack.c.l.b16 %v4045
  %v4110 = vunpack.c.l.b16 %v4046
  %v4111 = vunpack.c.l.b16 %v4047
  %v4112 = vunpack.c.l.b16 %v4048
  %v4113 = vpack.c.b16 %v4098, %v4097
  %v4114 = vpack.c.b16 %v4100, %v4099
  %v4115 = vpack.c.b16 %v4102, %v4101
  %v4116 = vpack.c.b16 %v4104, %v4103
  %v4117 = vpack.c.b16 %v4106, %v4105
  %v4118 = vpack.c.b16 %v4108, %v4107
  %v4119 = vpack.c.b16 %v4110, %v4109
  %v4120 = vpack.c.b16 %v4112, %v4111
  %4129 = vmatpush.bf16.msra.mxu0 %v4120
  %4130 = vmatpush.bf16.msra.mxu0 %v4119
  %4131 = vmatpush.bf16.msra.mxu0 %v4118
  %4132 = vmatpush.bf16.msra.mxu0 %v4117
  %4133 = vmatpush.bf16.msra.mxu0 %v4116
  %4134 = vmatpush.bf16.msra.mxu0 %v4115
  %4135 = vmatpush.bf16.msra.mxu0 %v4114
  %4136 = vmatpush.bf16.msra.mxu0 %v4113
  %4137 = vmatmul.bf16.gmra.mxu0 %v4065
  %v4138 = vpop.f32.mrf.mxu0
  %v4139 = vadd.f32 0.0, %v4138
  %v4140 = vpop.f32.mrf.mxu0
  %v4141 = vadd.f32 0.0, %v4140
  %4142 = vmatmul.bf16.gmra.mxu0 %v4066
  %v4143 = vpop.f32.mrf.mxu0
  %v4144 = vadd.f32 0.0, %v4143
  %v4145 = vpop.f32.mrf.mxu0
  %v4146 = vadd.f32 0.0, %v4145
  %4147 = vmatmul.bf16.gmra.mxu0 %v4067
  %v4148 = vpop.f32.mrf.mxu0
  %v4149 = vadd.f32 0.0, %v4148
  %v4150 = vpop.f32.mrf.mxu0
  %v4151 = vadd.f32 0.0, %v4150
  %4152 = vmatmul.bf16.gmra.mxu0 %v4068
  %v4153 = vpop.f32.mrf.mxu0
  %v4154 = vadd.f32 0.0, %v4153
  %v4155 = vpop.f32.mrf.mxu0
  %v4156 = vadd.f32 0.0, %v4155
  %4157 = vmatmul.bf16.gmra.mxu0 %v4069
  %v4158 = vpop.f32.mrf.mxu0
  %v4159 = vadd.f32 0.0, %v4158
  %v4160 = vpop.f32.mrf.mxu0
  %v4161 = vadd.f32 0.0, %v4160
  %4162 = vmatmul.bf16.gmra.mxu0 %v4070
  %v4163 = vpop.f32.mrf.mxu0
  %v4164 = vadd.f32 0.0, %v4163
  %v4165 = vpop.f32.mrf.mxu0
  %v4166 = vadd.f32 0.0, %v4165
  %4167 = vmatmul.bf16.gmra.mxu0 %v4071
  %v4168 = vpop.f32.mrf.mxu0
  %v4169 = vadd.f32 0.0, %v4168
  %v4170 = vpop.f32.mrf.mxu0
  %v4171 = vadd.f32 0.0, %v4170
  %4172 = vmatmul.bf16.gmra.mxu0 %v4072
  %v4173 = vpop.f32.mrf.mxu0
  %v4174 = vadd.f32 0.0, %v4173
  %v4175 = vpop.f32.mrf.mxu0
  %v4176 = vadd.f32 0.0, %v4175
  %4177 = vdwg.mxu0
  %v4178 = vadd.f32 %v3904, %v4139
  %v4179 = vadd.f32 %v3905, %v4141
  %v4180 = vadd.f32 %v3906, %v4144
  %v4181 = vadd.f32 %v3907, %v4146
  %v4182 = vadd.f32 %v3908, %v4149
  %v4183 = vadd.f32 %v3909, %v4151
  %v4184 = vadd.f32 %v3910, %v4154
  %v4185 = vadd.f32 %v3911, %v4156
  %v4186 = vadd.f32 %v3912, %v4159
  %v4187 = vadd.f32 %v3913, %v4161
  %v4188 = vadd.f32 %v3914, %v4164
  %v4189 = vadd.f32 %v3915, %v4166
  %v4190 = vadd.f32 %v3916, %v4169
  %v4191 = vadd.f32 %v3917, %v4171
  %v4192 = vadd.f32 %v3918, %v4174
  %v4193 = vadd.f32 %v3919, %v4176
  %s4194 = scalar_lea.vmem [#allocation2], 16
  %v4195 = vld [vmem:[%s4194] sm:$0xf]
  %v4196 = vld [vmem:[%s4194 + $0x8] sm:$0xf]
  %v4197 = vld [vmem:[%s4194 + $0x10] sm:$0xf]
  %v4198 = vld [vmem:[%s4194 + $0x18] sm:$0xf]
  %v4199 = vld [vmem:[%s4194 + $0x20] sm:$0xf]
  %v4200 = vld [vmem:[%s4194 + $0x28] sm:$0xf]
  %v4201 = vld [vmem:[%s4194 + $0x30] sm:$0xf]
  %v4202 = vld [vmem:[%s4194 + $0x38] sm:$0xf]
  %v4203 = vld [vmem:[%s4194 + $0x50] sm:$0xf]
  %v4204 = vld [vmem:[%s4194 + $0x58] sm:$0xf]
  %v4205 = vld [vmem:[%s4194 + $0x60] sm:$0xf]
  %v4206 = vld [vmem:[%s4194 + $0x68] sm:$0xf]
  %v4207 = vld [vmem:[%s4194 + $0x70] sm:$0xf]
  %v4208 = vld [vmem:[%s4194 + $0x78] sm:$0xf]
  %v4209 = vld [vmem:[%s4194 + $0x80] sm:$0xf]
  %v4210 = vld [vmem:[%s4194 + $0x88] sm:$0xf]
  %s4211 = scalar_lea.vmem %s3, 384
  %v4212 = vld [vmem:[%s4211] sm:$0xf]
  %v4213 = vld [vmem:[%s4211 + $0x4] sm:$0xf]
  %v4214 = vld [vmem:[%s4211 + $0x8] sm:$0xf]
  %v4215 = vld [vmem:[%s4211 + $0xc] sm:$0xf]
  %v4216 = vld [vmem:[%s4211 + $0x10] sm:$0xf]
  %v4217 = vld [vmem:[%s4211 + $0x14] sm:$0xf]
  %v4218 = vld [vmem:[%s4211 + $0x18] sm:$0xf]
  %v4219 = vld [vmem:[%s4211 + $0x1c] sm:$0xf]
  %v4220 = vld [vmem:[%s4211 + $0x20] sm:$0xf]
  %v4221 = vld [vmem:[%s4211 + $0x24] sm:$0xf]
  %v4222 = vld [vmem:[%s4211 + $0x28] sm:$0xf]
  %v4223 = vld [vmem:[%s4211 + $0x2c] sm:$0xf]
  %v4224 = vld [vmem:[%s4211 + $0x30] sm:$0xf]
  %v4225 = vld [vmem:[%s4211 + $0x34] sm:$0xf]
  %v4226 = vld [vmem:[%s4211 + $0x38] sm:$0xf]
  %v4227 = vld [vmem:[%s4211 + $0x3c] sm:$0xf]
  %v4244 = vunpack.c.l.b16 %v4195
  %v4245 = vunpack.c.l.b16 %v4196
  %v4246 = vunpack.c.l.b16 %v4197
  %v4247 = vunpack.c.l.b16 %v4198
  %v4248 = vunpack.c.l.b16 %v4199
  %v4249 = vunpack.c.l.b16 %v4200
  %v4250 = vunpack.c.l.b16 %v4201
  %v4251 = vunpack.c.l.b16 %v4202
  %v4252 = vunpack.c.l.b16 %v4203
  %v4253 = vunpack.c.l.b16 %v4204
  %v4254 = vunpack.c.l.b16 %v4205
  %v4255 = vunpack.c.l.b16 %v4206
  %v4256 = vunpack.c.l.b16 %v4207
  %v4257 = vunpack.c.l.b16 %v4208
  %v4258 = vunpack.c.l.b16 %v4209
  %v4259 = vunpack.c.l.b16 %v4210
  %v4260 = vpack.c.b16 %v4245, %v4244
  %v4261 = vpack.c.b16 %v4247, %v4246
  %v4262 = vpack.c.b16 %v4249, %v4248
  %v4263 = vpack.c.b16 %v4251, %v4250
  %v4264 = vpack.c.b16 %v4253, %v4252
  %v4265 = vpack.c.b16 %v4255, %v4254
  %v4266 = vpack.c.b16 %v4257, %v4256
  %v4267 = vpack.c.b16 %v4259, %v4258
  %v4292 = vunpack.c.l.b16 %v4212
  %v4293 = vunpack.c.l.b16 %v4213
  %v4294 = vunpack.c.l.b16 %v4214
  %v4295 = vunpack.c.l.b16 %v4215
  %v4296 = vunpack.c.l.b16 %v4216
  %v4297 = vunpack.c.l.b16 %v4217
  %v4298 = vunpack.c.l.b16 %v4218
  %v4299 = vunpack.c.l.b16 %v4219
  %v4300 = vunpack.c.l.b16 %v4220
  %v4301 = vunpack.c.l.b16 %v4221
  %v4302 = vunpack.c.l.b16 %v4222
  %v4303 = vunpack.c.l.b16 %v4223
  %v4304 = vunpack.c.l.b16 %v4224
  %v4305 = vunpack.c.l.b16 %v4225
  %v4306 = vunpack.c.l.b16 %v4226
  %v4307 = vunpack.c.l.b16 %v4227
  %v4308 = vpack.c.b16 %v4293, %v4292
  %v4309 = vpack.c.b16 %v4295, %v4294
  %v4310 = vpack.c.b16 %v4297, %v4296
  %v4311 = vpack.c.b16 %v4299, %v4298
  %v4312 = vpack.c.b16 %v4301, %v4300
  %v4313 = vpack.c.b16 %v4303, %v4302
  %v4314 = vpack.c.b16 %v4305, %v4304
  %v4315 = vpack.c.b16 %v4307, %v4306
  %4324 = vmatpush.bf16.msra.mxu0 %v4315
  %4325 = vmatpush.bf16.msra.mxu0 %v4314
  %4326 = vmatpush.bf16.msra.mxu0 %v4313
  %4327 = vmatpush.bf16.msra.mxu0 %v4312
  %4328 = vmatpush.bf16.msra.mxu0 %v4311
  %4329 = vmatpush.bf16.msra.mxu0 %v4310
  %4330 = vmatpush.bf16.msra.mxu0 %v4309
  %4331 = vmatpush.bf16.msra.mxu0 %v4308
  %4332 = vmatmul.bf16.gmra.mxu0 %v4260
  %v4333 = vpop.f32.mrf.mxu0
  %v4334 = vadd.f32 0.0, %v4333
  %v4335 = vpop.f32.mrf.mxu0
  %v4336 = vadd.f32 0.0, %v4335
  %4337 = vmatmul.bf16.gmra.mxu0 %v4261
  %v4338 = vpop.f32.mrf.mxu0
  %v4339 = vadd.f32 0.0, %v4338
  %v4340 = vpop.f32.mrf.mxu0
  %v4341 = vadd.f32 0.0, %v4340
  %4342 = vmatmul.bf16.gmra.mxu0 %v4262
  %v4343 = vpop.f32.mrf.mxu0
  %v4344 = vadd.f32 0.0, %v4343
  %v4345 = vpop.f32.mrf.mxu0
  %v4346 = vadd.f32 0.0, %v4345
  %4347 = vmatmul.bf16.gmra.mxu0 %v4263
  %v4348 = vpop.f32.mrf.mxu0
  %v4349 = vadd.f32 0.0, %v4348
  %v4350 = vpop.f32.mrf.mxu0
  %v4351 = vadd.f32 0.0, %v4350
  %4352 = vmatmul.bf16.gmra.mxu0 %v4264
  %v4353 = vpop.f32.mrf.mxu0
  %v4354 = vadd.f32 0.0, %v4353
  %v4355 = vpop.f32.mrf.mxu0
  %v4356 = vadd.f32 0.0, %v4355
  %4357 = vmatmul.bf16.gmra.mxu0 %v4265
  %v4358 = vpop.f32.mrf.mxu0
  %v4359 = vadd.f32 0.0, %v4358
  %v4360 = vpop.f32.mrf.mxu0
  %v4361 = vadd.f32 0.0, %v4360
  %4362 = vmatmul.bf16.gmra.mxu0 %v4266
  %v4363 = vpop.f32.mrf.mxu0
  %v4364 = vadd.f32 0.0, %v4363
  %v4365 = vpop.f32.mrf.mxu0
  %v4366 = vadd.f32 0.0, %v4365
  %4367 = vmatmul.bf16.gmra.mxu0 %v4267
  %v4368 = vpop.f32.mrf.mxu0
  %v4369 = vadd.f32 0.0, %v4368
  %v4370 = vpop.f32.mrf.mxu0
  %v4371 = vadd.f32 0.0, %v4370
  %4372 = vdwg.mxu0
  %v4373 = vadd.f32 %v4178, %v4334
  %v4374 = vadd.f32 %v4179, %v4336
  %v4375 = vadd.f32 %v4180, %v4339
  %v4376 = vadd.f32 %v4181, %v4341
  %v4377 = vadd.f32 %v4182, %v4344
  %v4378 = vadd.f32 %v4183, %v4346
  %v4379 = vadd.f32 %v4184, %v4349
  %v4380 = vadd.f32 %v4185, %v4351
  %v4381 = vadd.f32 %v4186, %v4354
  %v4382 = vadd.f32 %v4187, %v4356
  %v4383 = vadd.f32 %v4188, %v4359
  %v4384 = vadd.f32 %v4189, %v4361
  %v4385 = vadd.f32 %v4190, %v4364
  %v4386 = vadd.f32 %v4191, %v4366
  %v4387 = vadd.f32 %v4192, %v4369
  %v4388 = vadd.f32 %v4193, %v4371
  %v4389 = vld [vmem:[%s4194] sm:$0xf]
  %v4390 = vld [vmem:[%s4194 + $0x4] sm:$0x1]
  %v4391 = vld [vmem:[%s4194 + $0x8] sm:$0xf]
  %v4392 = vld [vmem:[%s4194 + $0xc] sm:$0x1]
  %v4393 = vld [vmem:[%s4194 + $0x10] sm:$0xf]
  %v4394 = vld [vmem:[%s4194 + $0x14] sm:$0x1]
  %v4395 = vld [vmem:[%s4194 + $0x18] sm:$0xf]
  %v4396 = vld [vmem:[%s4194 + $0x1c] sm:$0x1]
  %v4397 = vld [vmem:[%s4194 + $0x20] sm:$0xf]
  %v4398 = vld [vmem:[%s4194 + $0x24] sm:$0x1]
  %v4399 = vld [vmem:[%s4194 + $0x28] sm:$0xf]
  %v4400 = vld [vmem:[%s4194 + $0x2c] sm:$0x1]
  %v4401 = vld [vmem:[%s4194 + $0x30] sm:$0xf]
  %v4402 = vld [vmem:[%s4194 + $0x34] sm:$0x1]
  %v4403 = vld [vmem:[%s4194 + $0x38] sm:$0xf]
  %v4404 = vld [vmem:[%s4194 + $0x3c] sm:$0x1]
  %v4405 = vld [vmem:[%s4194 + $0x50] sm:$0xf]
  %v4406 = vld [vmem:[%s4194 + $0x54] sm:$0x1]
  %v4407 = vld [vmem:[%s4194 + $0x58] sm:$0xf]
  %v4408 = vld [vmem:[%s4194 + $0x5c] sm:$0x1]
  %v4409 = vld [vmem:[%s4194 + $0x60] sm:$0xf]
  %v4410 = vld [vmem:[%s4194 + $0x64] sm:$0x1]
  %v4411 = vld [vmem:[%s4194 + $0x68] sm:$0xf]
  %v4412 = vld [vmem:[%s4194 + $0x6c] sm:$0x1]
  %v4413 = vld [vmem:[%s4194 + $0x70] sm:$0xf]
  %v4414 = vld [vmem:[%s4194 + $0x74] sm:$0x1]
  %v4415 = vld [vmem:[%s4194 + $0x78] sm:$0xf]
  %v4416 = vld [vmem:[%s4194 + $0x7c] sm:$0x1]
  %v4417 = vld [vmem:[%s4194 + $0x80] sm:$0xf]
  %v4418 = vld [vmem:[%s4194 + $0x84] sm:$0x1]
  %v4419 = vld [vmem:[%s4194 + $0x88] sm:$0xf]
  %v4420 = vld [vmem:[%s4194 + $0x8c] sm:$0x1]
  %v4422 = vshrl.u32 %v4389, 16
  %v4424 = vrot.slane %v4422, 4
  %v4425 = vshll.u32 %v4389, 16
  %v4427 = vrot.slane %v4425, 5
  %v4428 = vor.u32 %v4424, %v4427
  %v4429 = vrot.slane %v4428, 4
  %v4431 = vshll.u32 %v4390, 16
  %v4433 = vrot.slane %v4431, 5
  %v4434 = vsel %vm462, %v4429, %v4433
  %v4436 = vshrl.u32 %v4391, 16
  %v4438 = vrot.slane %v4436, 4
  %v4439 = vshll.u32 %v4391, 16
  %v4441 = vrot.slane %v4439, 5
  %v4442 = vor.u32 %v4438, %v4441
  %v4443 = vrot.slane %v4442, 4
  %v4445 = vshll.u32 %v4392, 16
  %v4447 = vrot.slane %v4445, 5
  %v4448 = vsel %vm462, %v4443, %v4447
  %v4450 = vshrl.u32 %v4393, 16
  %v4452 = vrot.slane %v4450, 4
  %v4453 = vshll.u32 %v4393, 16
  %v4455 = vrot.slane %v4453, 5
  %v4456 = vor.u32 %v4452, %v4455
  %v4457 = vrot.slane %v4456, 4
  %v4459 = vshll.u32 %v4394, 16
  %v4461 = vrot.slane %v4459, 5
  %v4462 = vsel %vm462, %v4457, %v4461
  %v4464 = vshrl.u32 %v4395, 16
  %v4466 = vrot.slane %v4464, 4
  %v4467 = vshll.u32 %v4395, 16
  %v4469 = vrot.slane %v4467, 5
  %v4470 = vor.u32 %v4466, %v4469
  %v4471 = vrot.slane %v4470, 4
  %v4473 = vshll.u32 %v4396, 16
  %v4475 = vrot.slane %v4473, 5
  %v4476 = vsel %vm462, %v4471, %v4475
  %v4478 = vshrl.u32 %v4397, 16
  %v4480 = vrot.slane %v4478, 4
  %v4481 = vshll.u32 %v4397, 16
  %v4483 = vrot.slane %v4481, 5
  %v4484 = vor.u32 %v4480, %v4483
  %v4485 = vrot.slane %v4484, 4
  %v4487 = vshll.u32 %v4398, 16
  %v4489 = vrot.slane %v4487, 5
  %v4490 = vsel %vm462, %v4485, %v4489
  %v4492 = vshrl.u32 %v4399, 16
  %v4494 = vrot.slane %v4492, 4
  %v4495 = vshll.u32 %v4399, 16
  %v4497 = vrot.slane %v4495, 5
  %v4498 = vor.u32 %v4494, %v4497
  %v4499 = vrot.slane %v4498, 4
  %v4501 = vshll.u32 %v4400, 16
  %v4503 = vrot.slane %v4501, 5
  %v4504 = vsel %vm462, %v4499, %v4503
  %v4506 = vshrl.u32 %v4401, 16
  %v4508 = vrot.slane %v4506, 4
  %v4509 = vshll.u32 %v4401, 16
  %v4511 = vrot.slane %v4509, 5
  %v4512 = vor.u32 %v4508, %v4511
  %v4513 = vrot.slane %v4512, 4
  %v4515 = vshll.u32 %v4402, 16
  %v4517 = vrot.slane %v4515, 5
  %v4518 = vsel %vm462, %v4513, %v4517
  %v4520 = vshrl.u32 %v4403, 16
  %v4522 = vrot.slane %v4520, 4
  %v4523 = vshll.u32 %v4403, 16
  %v4525 = vrot.slane %v4523, 5
  %v4526 = vor.u32 %v4522, %v4525
  %v4527 = vrot.slane %v4526, 4
  %v4529 = vshll.u32 %v4404, 16
  %v4531 = vrot.slane %v4529, 5
  %v4532 = vsel %vm462, %v4527, %v4531
  %v4534 = vshrl.u32 %v4405, 16
  %v4536 = vrot.slane %v4534, 4
  %v4537 = vshll.u32 %v4405, 16
  %v4539 = vrot.slane %v4537, 5
  %v4540 = vor.u32 %v4536, %v4539
  %v4541 = vrot.slane %v4540, 4
  %v4543 = vshll.u32 %v4406, 16
  %v4545 = vrot.slane %v4543, 5
  %v4546 = vsel %vm462, %v4541, %v4545
  %v4548 = vshrl.u32 %v4407, 16
  %v4550 = vrot.slane %v4548, 4
  %v4551 = vshll.u32 %v4407, 16
  %v4553 = vrot.slane %v4551, 5
  %v4554 = vor.u32 %v4550, %v4553
  %v4555 = vrot.slane %v4554, 4
  %v4557 = vshll.u32 %v4408, 16
  %v4559 = vrot.slane %v4557, 5
  %v4560 = vsel %vm462, %v4555, %v4559
  %v4562 = vshrl.u32 %v4409, 16
  %v4564 = vrot.slane %v4562, 4
  %v4565 = vshll.u32 %v4409, 16
  %v4567 = vrot.slane %v4565, 5
  %v4568 = vor.u32 %v4564, %v4567
  %v4569 = vrot.slane %v4568, 4
  %v4571 = vshll.u32 %v4410, 16
  %v4573 = vrot.slane %v4571, 5
  %v4574 = vsel %vm462, %v4569, %v4573
  %v4576 = vshrl.u32 %v4411, 16
  %v4578 = vrot.slane %v4576, 4
  %v4579 = vshll.u32 %v4411, 16
  %v4581 = vrot.slane %v4579, 5
  %v4582 = vor.u32 %v4578, %v4581
  %v4583 = vrot.slane %v4582, 4
  %v4585 = vshll.u32 %v4412, 16
  %v4587 = vrot.slane %v4585, 5
  %v4588 = vsel %vm462, %v4583, %v4587
  %v4590 = vshrl.u32 %v4413, 16
  %v4592 = vrot.slane %v4590, 4
  %v4593 = vshll.u32 %v4413, 16
  %v4595 = vrot.slane %v4593, 5
  %v4596 = vor.u32 %v4592, %v4595
  %v4597 = vrot.slane %v4596, 4
  %v4599 = vshll.u32 %v4414, 16
  %v4601 = vrot.slane %v4599, 5
  %v4602 = vsel %vm462, %v4597, %v4601
  %v4604 = vshrl.u32 %v4415, 16
  %v4606 = vrot.slane %v4604, 4
  %v4607 = vshll.u32 %v4415, 16
  %v4609 = vrot.slane %v4607, 5
  %v4610 = vor.u32 %v4606, %v4609
  %v4611 = vrot.slane %v4610, 4
  %v4613 = vshll.u32 %v4416, 16
  %v4615 = vrot.slane %v4613, 5
  %v4616 = vsel %vm462, %v4611, %v4615
  %v4618 = vshrl.u32 %v4417, 16
  %v4620 = vrot.slane %v4618, 4
  %v4621 = vshll.u32 %v4417, 16
  %v4623 = vrot.slane %v4621, 5
  %v4624 = vor.u32 %v4620, %v4623
  %v4625 = vrot.slane %v4624, 4
  %v4627 = vshll.u32 %v4418, 16
  %v4629 = vrot.slane %v4627, 5
  %v4630 = vsel %vm462, %v4625, %v4629
  %v4632 = vshrl.u32 %v4419, 16
  %v4634 = vrot.slane %v4632, 4
  %v4635 = vshll.u32 %v4419, 16
  %v4637 = vrot.slane %v4635, 5
  %v4638 = vor.u32 %v4634, %v4637
  %v4639 = vrot.slane %v4638, 4
  %v4641 = vshll.u32 %v4420, 16
  %v4643 = vrot.slane %v4641, 5
  %v4644 = vsel %vm462, %v4639, %v4643
  %s4645 = scalar_lea.vmem %s3, 448
  %v4646 = vld [vmem:[%s4645] sm:$0xf]
  %v4647 = vld [vmem:[%s4645 + $0x4] sm:$0xf]
  %v4648 = vld [vmem:[%s4645 + $0x8] sm:$0xf]
  %v4649 = vld [vmem:[%s4645 + $0xc] sm:$0xf]
  %v4650 = vld [vmem:[%s4645 + $0x10] sm:$0xf]
  %v4651 = vld [vmem:[%s4645 + $0x14] sm:$0xf]
  %v4652 = vld [vmem:[%s4645 + $0x18] sm:$0xf]
  %v4653 = vld [vmem:[%s4645 + $0x1c] sm:$0xf]
  %v4654 = vld [vmem:[%s4645 + $0x20] sm:$0xf]
  %v4655 = vld [vmem:[%s4645 + $0x24] sm:$0xf]
  %v4656 = vld [vmem:[%s4645 + $0x28] sm:$0xf]
  %v4657 = vld [vmem:[%s4645 + $0x2c] sm:$0xf]
  %v4658 = vld [vmem:[%s4645 + $0x30] sm:$0xf]
  %v4659 = vld [vmem:[%s4645 + $0x34] sm:$0xf]
  %v4660 = vld [vmem:[%s4645 + $0x38] sm:$0xf]
  %v4661 = vld [vmem:[%s4645 + $0x3c] sm:$0xf]
  %v4662 = vunpack.c.l.b16 %v4434
  %v4663 = vunpack.c.l.b16 %v4448
  %v4664 = vunpack.c.l.b16 %v4462
  %v4665 = vunpack.c.l.b16 %v4476
  %v4666 = vunpack.c.l.b16 %v4490
  %v4667 = vunpack.c.l.b16 %v4504
  %v4668 = vunpack.c.l.b16 %v4518
  %v4669 = vunpack.c.l.b16 %v4532
  %v4670 = vunpack.c.l.b16 %v4546
  %v4671 = vunpack.c.l.b16 %v4560
  %v4672 = vunpack.c.l.b16 %v4574
  %v4673 = vunpack.c.l.b16 %v4588
  %v4674 = vunpack.c.l.b16 %v4602
  %v4675 = vunpack.c.l.b16 %v4616
  %v4676 = vunpack.c.l.b16 %v4630
  %v4677 = vunpack.c.l.b16 %v4644
  %v4678 = vpack.c.b16 %v4663, %v4662
  %v4679 = vpack.c.b16 %v4665, %v4664
  %v4680 = vpack.c.b16 %v4667, %v4666
  %v4681 = vpack.c.b16 %v4669, %v4668
  %v4682 = vpack.c.b16 %v4671, %v4670
  %v4683 = vpack.c.b16 %v4673, %v4672
  %v4684 = vpack.c.b16 %v4675, %v4674
  %v4685 = vpack.c.b16 %v4677, %v4676
  %v4710 = vunpack.c.l.b16 %v4646
  %v4711 = vunpack.c.l.b16 %v4647
  %v4712 = vunpack.c.l.b16 %v4648
  %v4713 = vunpack.c.l.b16 %v4649
  %v4714 = vunpack.c.l.b16 %v4650
  %v4715 = vunpack.c.l.b16 %v4651
  %v4716 = vunpack.c.l.b16 %v4652
  %v4717 = vunpack.c.l.b16 %v4653
  %v4718 = vunpack.c.l.b16 %v4654
  %v4719 = vunpack.c.l.b16 %v4655
  %v4720 = vunpack.c.l.b16 %v4656
  %v4721 = vunpack.c.l.b16 %v4657
  %v4722 = vunpack.c.l.b16 %v4658
  %v4723 = vunpack.c.l.b16 %v4659
  %v4724 = vunpack.c.l.b16 %v4660
  %v4725 = vunpack.c.l.b16 %v4661
  %v4726 = vpack.c.b16 %v4711, %v4710
  %v4727 = vpack.c.b16 %v4713, %v4712
  %v4728 = vpack.c.b16 %v4715, %v4714
  %v4729 = vpack.c.b16 %v4717, %v4716
  %v4730 = vpack.c.b16 %v4719, %v4718
  %v4731 = vpack.c.b16 %v4721, %v4720
  %v4732 = vpack.c.b16 %v4723, %v4722
  %v4733 = vpack.c.b16 %v4725, %v4724
  %4742 = vmatpush.bf16.msra.mxu0 %v4733
  %4743 = vmatpush.bf16.msra.mxu0 %v4732
  %4744 = vmatpush.bf16.msra.mxu0 %v4731
  %4745 = vmatpush.bf16.msra.mxu0 %v4730
  %4746 = vmatpush.bf16.msra.mxu0 %v4729
  %4747 = vmatpush.bf16.msra.mxu0 %v4728
  %4748 = vmatpush.bf16.msra.mxu0 %v4727
  %4749 = vmatpush.bf16.msra.mxu0 %v4726
  %4750 = vmatmul.bf16.gmra.mxu0 %v4678
  %v4751 = vpop.f32.mrf.mxu0
  %v4752 = vadd.f32 0.0, %v4751
  %v4753 = vpop.f32.mrf.mxu0
  %v4754 = vadd.f32 0.0, %v4753
  %4755 = vmatmul.bf16.gmra.mxu0 %v4679
  %v4756 = vpop.f32.mrf.mxu0
  %v4757 = vadd.f32 0.0, %v4756
  %v4758 = vpop.f32.mrf.mxu0
  %v4759 = vadd.f32 0.0, %v4758
  %4760 = vmatmul.bf16.gmra.mxu0 %v4680
  %v4761 = vpop.f32.mrf.mxu0
  %v4762 = vadd.f32 0.0, %v4761
  %v4763 = vpop.f32.mrf.mxu0
  %v4764 = vadd.f32 0.0, %v4763
  %4765 = vmatmul.bf16.gmra.mxu0 %v4681
  %v4766 = vpop.f32.mrf.mxu0
  %v4767 = vadd.f32 0.0, %v4766
  %v4768 = vpop.f32.mrf.mxu0
  %v4769 = vadd.f32 0.0, %v4768
  %4770 = vmatmul.bf16.gmra.mxu0 %v4682
  %v4771 = vpop.f32.mrf.mxu0
  %v4772 = vadd.f32 0.0, %v4771
  %v4773 = vpop.f32.mrf.mxu0
  %v4774 = vadd.f32 0.0, %v4773
  %4775 = vmatmul.bf16.gmra.mxu0 %v4683
  %v4776 = vpop.f32.mrf.mxu0
  %v4777 = vadd.f32 0.0, %v4776
  %v4778 = vpop.f32.mrf.mxu0
  %v4779 = vadd.f32 0.0, %v4778
  %4780 = vmatmul.bf16.gmra.mxu0 %v4684
  %v4781 = vpop.f32.mrf.mxu0
  %v4782 = vadd.f32 0.0, %v4781
  %v4783 = vpop.f32.mrf.mxu0
  %v4784 = vadd.f32 0.0, %v4783
  %4785 = vmatmul.bf16.gmra.mxu0 %v4685
  %v4786 = vpop.f32.mrf.mxu0
  %v4787 = vadd.f32 0.0, %v4786
  %v4788 = vpop.f32.mrf.mxu0
  %v4789 = vadd.f32 0.0, %v4788
  %4790 = vdwg.mxu0
  %v4791 = vadd.f32 %v4373, %v4752
  %v4792 = vadd.f32 %v4374, %v4754
  %v4793 = vadd.f32 %v4375, %v4757
  %v4794 = vadd.f32 %v4376, %v4759
  %v4795 = vadd.f32 %v4377, %v4762
  %v4796 = vadd.f32 %v4378, %v4764
  %v4797 = vadd.f32 %v4379, %v4767
  %v4798 = vadd.f32 %v4380, %v4769
  %v4799 = vadd.f32 %v4381, %v4772
  %v4800 = vadd.f32 %v4382, %v4774
  %v4801 = vadd.f32 %v4383, %v4777
  %v4802 = vadd.f32 %v4384, %v4779
  %v4803 = vadd.f32 %v4385, %v4782
  %v4804 = vadd.f32 %v4386, %v4784
  %v4805 = vadd.f32 %v4387, %v4787
  %v4806 = vadd.f32 %v4388, %v4789
  %v4807 = vld [vmem:[%s4194] sm:$0xe]
  %v4808 = vld [vmem:[%s4194 + $0x8] sm:$0xe]
  %v4809 = vld [vmem:[%s4194 + $0x10] sm:$0xe]
  %v4810 = vld [vmem:[%s4194 + $0x18] sm:$0xe]
  %v4811 = vld [vmem:[%s4194 + $0x20] sm:$0xe]
  %v4812 = vld [vmem:[%s4194 + $0x28] sm:$0xe]
  %v4813 = vld [vmem:[%s4194 + $0x30] sm:$0xe]
  %v4814 = vld [vmem:[%s4194 + $0x38] sm:$0xe]
  %v4815 = vld [vmem:[%s4194 + $0x50] sm:$0xe]
  %v4816 = vld [vmem:[%s4194 + $0x58] sm:$0xe]
  %v4817 = vld [vmem:[%s4194 + $0x60] sm:$0xe]
  %v4818 = vld [vmem:[%s4194 + $0x68] sm:$0xe]
  %v4819 = vld [vmem:[%s4194 + $0x70] sm:$0xe]
  %v4820 = vld [vmem:[%s4194 + $0x78] sm:$0xe]
  %v4821 = vld [vmem:[%s4194 + $0x80] sm:$0xe]
  %v4822 = vld [vmem:[%s4194 + $0x88] sm:$0xe]
  %v4855 = vrot.slane %v4807, 5
  %v4856 = vrot.slane %v4855, 4
  %v4857 = vrot.slane %v4390, 5
  %v4858 = vsel %vm3081, %v4856, %v4857
  %v4859 = vrot.slane %v4808, 5
  %v4860 = vrot.slane %v4859, 4
  %v4861 = vrot.slane %v4392, 5
  %v4862 = vsel %vm3081, %v4860, %v4861
  %v4863 = vrot.slane %v4809, 5
  %v4864 = vrot.slane %v4863, 4
  %v4865 = vrot.slane %v4394, 5
  %v4866 = vsel %vm3081, %v4864, %v4865
  %v4867 = vrot.slane %v4810, 5
  %v4868 = vrot.slane %v4867, 4
  %v4869 = vrot.slane %v4396, 5
  %v4870 = vsel %vm3081, %v4868, %v4869
  %v4871 = vrot.slane %v4811, 5
  %v4872 = vrot.slane %v4871, 4
  %v4873 = vrot.slane %v4398, 5
  %v4874 = vsel %vm3081, %v4872, %v4873
  %v4875 = vrot.slane %v4812, 5
  %v4876 = vrot.slane %v4875, 4
  %v4877 = vrot.slane %v4400, 5
  %v4878 = vsel %vm3081, %v4876, %v4877
  %v4879 = vrot.slane %v4813, 5
  %v4880 = vrot.slane %v4879, 4
  %v4881 = vrot.slane %v4402, 5
  %v4882 = vsel %vm3081, %v4880, %v4881
  %v4883 = vrot.slane %v4814, 5
  %v4884 = vrot.slane %v4883, 4
  %v4885 = vrot.slane %v4404, 5
  %v4886 = vsel %vm3081, %v4884, %v4885
  %v4887 = vrot.slane %v4815, 5
  %v4888 = vrot.slane %v4887, 4
  %v4889 = vrot.slane %v4406, 5
  %v4890 = vsel %vm3081, %v4888, %v4889
  %v4891 = vrot.slane %v4816, 5
  %v4892 = vrot.slane %v4891, 4
  %v4893 = vrot.slane %v4408, 5
  %v4894 = vsel %vm3081, %v4892, %v4893
  %v4895 = vrot.slane %v4817, 5
  %v4896 = vrot.slane %v4895, 4
  %v4897 = vrot.slane %v4410, 5
  %v4898 = vsel %vm3081, %v4896, %v4897
  %v4899 = vrot.slane %v4818, 5
  %v4900 = vrot.slane %v4899, 4
  %v4901 = vrot.slane %v4412, 5
  %v4902 = vsel %vm3081, %v4900, %v4901
  %v4903 = vrot.slane %v4819, 5
  %v4904 = vrot.slane %v4903, 4
  %v4905 = vrot.slane %v4414, 5
  %v4906 = vsel %vm3081, %v4904, %v4905
  %v4907 = vrot.slane %v4820, 5
  %v4908 = vrot.slane %v4907, 4
  %v4909 = vrot.slane %v4416, 5
  %v4910 = vsel %vm3081, %v4908, %v4909
  %v4911 = vrot.slane %v4821, 5
  %v4912 = vrot.slane %v4911, 4
  %v4913 = vrot.slane %v4418, 5
  %v4914 = vsel %vm3081, %v4912, %v4913
  %v4915 = vrot.slane %v4822, 5
  %v4916 = vrot.slane %v4915, 4
  %v4917 = vrot.slane %v4420, 5
  %v4918 = vsel %vm3081, %v4916, %v4917
  %s4919 = scalar_lea.vmem %s3, 512
  %v4920 = vld [vmem:[%s4919] sm:$0xf]
  %v4921 = vld [vmem:[%s4919 + $0x4] sm:$0xf]
  %v4922 = vld [vmem:[%s4919 + $0x8] sm:$0xf]
  %v4923 = vld [vmem:[%s4919 + $0xc] sm:$0xf]
  %v4924 = vld [vmem:[%s4919 + $0x10] sm:$0xf]
  %v4925 = vld [vmem:[%s4919 + $0x14] sm:$0xf]
  %v4926 = vld [vmem:[%s4919 + $0x18] sm:$0xf]
  %v4927 = vld [vmem:[%s4919 + $0x1c] sm:$0xf]
  %v4928 = vld [vmem:[%s4919 + $0x20] sm:$0xf]
  %v4929 = vld [vmem:[%s4919 + $0x24] sm:$0xf]
  %v4930 = vld [vmem:[%s4919 + $0x28] sm:$0xf]
  %v4931 = vld [vmem:[%s4919 + $0x2c] sm:$0xf]
  %v4932 = vld [vmem:[%s4919 + $0x30] sm:$0xf]
  %v4933 = vld [vmem:[%s4919 + $0x34] sm:$0xf]
  %v4934 = vld [vmem:[%s4919 + $0x38] sm:$0xf]
  %v4935 = vld [vmem:[%s4919 + $0x3c] sm:$0xf]
  %v4936 = vunpack.c.l.b16 %v4858
  %v4937 = vunpack.c.l.b16 %v4862
  %v4938 = vunpack.c.l.b16 %v4866
  %v4939 = vunpack.c.l.b16 %v4870
  %v4940 = vunpack.c.l.b16 %v4874
  %v4941 = vunpack.c.l.b16 %v4878
  %v4942 = vunpack.c.l.b16 %v4882
  %v4943 = vunpack.c.l.b16 %v4886
  %v4944 = vunpack.c.l.b16 %v4890
  %v4945 = vunpack.c.l.b16 %v4894
  %v4946 = vunpack.c.l.b16 %v4898
  %v4947 = vunpack.c.l.b16 %v4902
  %v4948 = vunpack.c.l.b16 %v4906
  %v4949 = vunpack.c.l.b16 %v4910
  %v4950 = vunpack.c.l.b16 %v4914
  %v4951 = vunpack.c.l.b16 %v4918
  %v4952 = vpack.c.b16 %v4937, %v4936
  %v4953 = vpack.c.b16 %v4939, %v4938
  %v4954 = vpack.c.b16 %v4941, %v4940
  %v4955 = vpack.c.b16 %v4943, %v4942
  %v4956 = vpack.c.b16 %v4945, %v4944
  %v4957 = vpack.c.b16 %v4947, %v4946
  %v4958 = vpack.c.b16 %v4949, %v4948
  %v4959 = vpack.c.b16 %v4951, %v4950
  %v4984 = vunpack.c.l.b16 %v4920
  %v4985 = vunpack.c.l.b16 %v4921
  %v4986 = vunpack.c.l.b16 %v4922
  %v4987 = vunpack.c.l.b16 %v4923
  %v4988 = vunpack.c.l.b16 %v4924
  %v4989 = vunpack.c.l.b16 %v4925
  %v4990 = vunpack.c.l.b16 %v4926
  %v4991 = vunpack.c.l.b16 %v4927
  %v4992 = vunpack.c.l.b16 %v4928
  %v4993 = vunpack.c.l.b16 %v4929
  %v4994 = vunpack.c.l.b16 %v4930
  %v4995 = vunpack.c.l.b16 %v4931
  %v4996 = vunpack.c.l.b16 %v4932
  %v4997 = vunpack.c.l.b16 %v4933
  %v4998 = vunpack.c.l.b16 %v4934
  %v4999 = vunpack.c.l.b16 %v4935
  %v5000 = vpack.c.b16 %v4985, %v4984
  %v5001 = vpack.c.b16 %v4987, %v4986
  %v5002 = vpack.c.b16 %v4989, %v4988
  %v5003 = vpack.c.b16 %v4991, %v4990
  %v5004 = vpack.c.b16 %v4993, %v4992
  %v5005 = vpack.c.b16 %v4995, %v4994
  %v5006 = vpack.c.b16 %v4997, %v4996
  %v5007 = vpack.c.b16 %v4999, %v4998
  %5016 = vmatpush.bf16.msra.mxu0 %v5007
  %5017 = vmatpush.bf16.msra.mxu0 %v5006
  %5018 = vmatpush.bf16.msra.mxu0 %v5005
  %5019 = vmatpush.bf16.msra.mxu0 %v5004
  %5020 = vmatpush.bf16.msra.mxu0 %v5003
  %5021 = vmatpush.bf16.msra.mxu0 %v5002
  %5022 = vmatpush.bf16.msra.mxu0 %v5001
  %5023 = vmatpush.bf16.msra.mxu0 %v5000
  %5024 = vmatmul.bf16.gmra.mxu0 %v4952
  %v5025 = vpop.f32.mrf.mxu0
  %v5026 = vadd.f32 0.0, %v5025
  %v5027 = vpop.f32.mrf.mxu0
  %v5028 = vadd.f32 0.0, %v5027
  %5029 = vmatmul.bf16.gmra.mxu0 %v4953
  %v5030 = vpop.f32.mrf.mxu0
  %v5031 = vadd.f32 0.0, %v5030
  %v5032 = vpop.f32.mrf.mxu0
  %v5033 = vadd.f32 0.0, %v5032
  %5034 = vmatmul.bf16.gmra.mxu0 %v4954
  %v5035 = vpop.f32.mrf.mxu0
  %v5036 = vadd.f32 0.0, %v5035
  %v5037 = vpop.f32.mrf.mxu0
  %v5038 = vadd.f32 0.0, %v5037
  %5039 = vmatmul.bf16.gmra.mxu0 %v4955
  %v5040 = vpop.f32.mrf.mxu0
  %v5041 = vadd.f32 0.0, %v5040
  %v5042 = vpop.f32.mrf.mxu0
  %v5043 = vadd.f32 0.0, %v5042
  %5044 = vmatmul.bf16.gmra.mxu0 %v4956
  %v5045 = vpop.f32.mrf.mxu0
  %v5046 = vadd.f32 0.0, %v5045
  %v5047 = vpop.f32.mrf.mxu0
  %v5048 = vadd.f32 0.0, %v5047
  %5049 = vmatmul.bf16.gmra.mxu0 %v4957
  %v5050 = vpop.f32.mrf.mxu0
  %v5051 = vadd.f32 0.0, %v5050
  %v5052 = vpop.f32.mrf.mxu0
  %v5053 = vadd.f32 0.0, %v5052
  %5054 = vmatmul.bf16.gmra.mxu0 %v4958
  %v5055 = vpop.f32.mrf.mxu0
  %v5056 = vadd.f32 0.0, %v5055
  %v5057 = vpop.f32.mrf.mxu0
  %v5058 = vadd.f32 0.0, %v5057
  %5059 = vmatmul.bf16.gmra.mxu0 %v4959
  %v5060 = vpop.f32.mrf.mxu0
  %v5061 = vadd.f32 0.0, %v5060
  %v5062 = vpop.f32.mrf.mxu0
  %v5063 = vadd.f32 0.0, %v5062
  %5064 = vdwg.mxu0
  %v5065 = vadd.f32 %v4791, %v5026
  %v5066 = vadd.f32 %v4792, %v5028
  %v5067 = vadd.f32 %v4793, %v5031
  %v5068 = vadd.f32 %v4794, %v5033
  %v5069 = vadd.f32 %v4795, %v5036
  %v5070 = vadd.f32 %v4796, %v5038
  %v5071 = vadd.f32 %v4797, %v5041
  %v5072 = vadd.f32 %v4798, %v5043
  %v5073 = vadd.f32 %v4799, %v5046
  %v5074 = vadd.f32 %v4800, %v5048
  %v5075 = vadd.f32 %v4801, %v5051
  %v5076 = vadd.f32 %v4802, %v5053
  %v5077 = vadd.f32 %v4803, %v5056
  %v5078 = vadd.f32 %v4804, %v5058
  %v5079 = vadd.f32 %v4805, %v5061
  %v5080 = vadd.f32 %v4806, %v5063
  %v5081 = vld [vmem:[%s956] sm:$0xf]
  %v5082 = vld [vmem:[%s956 + $0x8] sm:$0xf]
  %v5083 = vld [vmem:[%s956 + $0x10] sm:$0xf]
  %v5084 = vld [vmem:[%s956 + $0x18] sm:$0xf]
  %v5085 = vld [vmem:[%s956 + $0x20] sm:$0xf]
  %v5086 = vld [vmem:[%s956 + $0x28] sm:$0xf]
  %v5087 = vld [vmem:[%s956 + $0x30] sm:$0xf]
  %v5088 = vld [vmem:[%s956 + $0x38] sm:$0xf]
  %v5089 = vld [vmem:[%s956 + $0x120] sm:$0xf]
  %v5090 = vld [vmem:[%s956 + $0x128] sm:$0xf]
  %v5091 = vld [vmem:[%s956 + $0x130] sm:$0xf]
  %v5092 = vld [vmem:[%s956 + $0x138] sm:$0xf]
  %v5093 = vld [vmem:[%s956 + $0x140] sm:$0xf]
  %v5094 = vld [vmem:[%s956 + $0x148] sm:$0xf]
  %v5095 = vld [vmem:[%s956 + $0x150] sm:$0xf]
  %v5096 = vld [vmem:[%s956 + $0x158] sm:$0xf]
  %v5097 = vld [vmem:[%s5] sm:$0x3]
  %v5114 = vunpack.c.l.b16 %v5081
  %v5115 = vunpack.c.l.b16 %v5082
  %v5116 = vunpack.c.l.b16 %v5083
  %v5117 = vunpack.c.l.b16 %v5084
  %v5118 = vunpack.c.l.b16 %v5085
  %v5119 = vunpack.c.l.b16 %v5086
  %v5120 = vunpack.c.l.b16 %v5087
  %v5121 = vunpack.c.l.b16 %v5088
  %v5122 = vunpack.c.l.b16 %v5089
  %v5123 = vunpack.c.l.b16 %v5090
  %v5124 = vunpack.c.l.b16 %v5091
  %v5125 = vunpack.c.l.b16 %v5092
  %v5126 = vunpack.c.l.b16 %v5093
  %v5127 = vunpack.c.l.b16 %v5094
  %v5128 = vunpack.c.l.b16 %v5095
  %v5129 = vunpack.c.l.b16 %v5096
  %v5130 = vpack.c.b16 %v5115, %v5114
  %v5131 = vpack.c.b16 %v5117, %v5116
  %v5132 = vpack.c.b16 %v5119, %v5118
  %v5133 = vpack.c.b16 %v5121, %v5120
  %v5134 = vpack.c.b16 %v5123, %v5122
  %v5135 = vpack.c.b16 %v5125, %v5124
  %v5136 = vpack.c.b16 %v5127, %v5126
  %v5137 = vpack.c.b16 %v5129, %v5128
  %v5139 = vsel %vm234, %v5130, 0
  %v5142 = vsel %vm234, %v5131, 0
  %v5145 = vsel %vm234, %v5132, 0
  %v5148 = vsel %vm234, %v5133, 0
  %v5151 = vsel %vm234, %v5134, 0
  %v5154 = vsel %vm234, %v5135, 0
  %v5157 = vsel %vm234, %v5136, 0
  %v5160 = vsel %vm234, %v5137, 0
  %v5163 = vsel %vm259, %v5097, 0
  %5165 = vmatpush.bf16.msra.mxu0 0
  %5166 = vmatpush.bf16.msra.mxu0 0
  %5167 = vmatpush.bf16.msra.mxu0 0
  %5168 = vmatpush.bf16.msra.mxu0 0
  %5169 = vmatpush.bf16.msra.mxu0 0
  %5170 = vmatpush.bf16.msra.mxu0 0
  %5171 = vmatpush.bf16.msra.mxu0 0
  %5172 = vmatpush.bf16.msra.mxu0 %v5163
  %5173 = vmatmul.bf16.gmra.mxu0 %v5139
  %v5174 = vpop.f32.mrf.mxu0
  %v5175 = vadd.f32 0.0, %v5174
  %v5176 = vpop.f32.mrf.mxu0
  %v5177 = vadd.f32 0.0, %v5176
  %5178 = vmatmul.bf16.gmra.mxu0 %v5142
  %v5179 = vpop.f32.mrf.mxu0
  %v5180 = vadd.f32 0.0, %v5179
  %v5181 = vpop.f32.mrf.mxu0
  %v5182 = vadd.f32 0.0, %v5181
  %5183 = vmatmul.bf16.gmra.mxu0 %v5145
  %v5184 = vpop.f32.mrf.mxu0
  %v5185 = vadd.f32 0.0, %v5184
  %v5186 = vpop.f32.mrf.mxu0
  %v5187 = vadd.f32 0.0, %v5186
  %5188 = vmatmul.bf16.gmra.mxu0 %v5148
  %v5189 = vpop.f32.mrf.mxu0
  %v5190 = vadd.f32 0.0, %v5189
  %v5191 = vpop.f32.mrf.mxu0
  %v5192 = vadd.f32 0.0, %v5191
  %5193 = vmatmul.bf16.gmra.mxu0 %v5151
  %v5194 = vpop.f32.mrf.mxu0
  %v5195 = vadd.f32 0.0, %v5194
  %v5196 = vpop.f32.mrf.mxu0
  %v5197 = vadd.f32 0.0, %v5196
  %5198 = vmatmul.bf16.gmra.mxu0 %v5154
  %v5199 = vpop.f32.mrf.mxu0
  %v5200 = vadd.f32 0.0, %v5199
  %v5201 = vpop.f32.mrf.mxu0
  %v5202 = vadd.f32 0.0, %v5201
  %5203 = vmatmul.bf16.gmra.mxu0 %v5157
  %v5204 = vpop.f32.mrf.mxu0
  %v5205 = vadd.f32 0.0, %v5204
  %v5206 = vpop.f32.mrf.mxu0
  %v5207 = vadd.f32 0.0, %v5206
  %5208 = vmatmul.bf16.gmra.mxu0 %v5160
  %v5209 = vpop.f32.mrf.mxu0
  %v5210 = vadd.f32 0.0, %v5209
  %v5211 = vpop.f32.mrf.mxu0
  %v5212 = vadd.f32 0.0, %v5211
  %5213 = vdwg.mxu0
  %v5214 = vadd.f32 %v5065, %v5175
  %v5215 = vadd.f32 %v5066, %v5177
  %v5216 = vadd.f32 %v5067, %v5180
  %v5217 = vadd.f32 %v5068, %v5182
  %v5218 = vadd.f32 %v5069, %v5185
  %v5219 = vadd.f32 %v5070, %v5187
  %v5220 = vadd.f32 %v5071, %v5190
  %v5221 = vadd.f32 %v5072, %v5192
  %v5222 = vadd.f32 %v5073, %v5195
  %v5223 = vadd.f32 %v5074, %v5197
  %v5224 = vadd.f32 %v5075, %v5200
  %v5225 = vadd.f32 %v5076, %v5202
  %v5226 = vadd.f32 %v5077, %v5205
  %v5227 = vadd.f32 %v5078, %v5207
  %v5228 = vadd.f32 %v5079, %v5210
  %v5229 = vadd.f32 %v5080, %v5212
  %v5230 = vld [vmem:[%s4] sm:$0x1]
  %v5232 = vperm.slane %v5230, 0
  %v5234 = vadd.f32 %v5214, %v5232
  %v5235 = vadd.f32 %v5215, %v5232
  %v5236 = vadd.f32 %v5216, %v5232
  %v5237 = vadd.f32 %v5217, %v5232
  %v5238 = vadd.f32 %v5218, %v5232
  %v5239 = vadd.f32 %v5219, %v5232
  %v5240 = vadd.f32 %v5220, %v5232
  %v5241 = vadd.f32 %v5221, %v5232
  %v5242 = vadd.f32 %v5222, %v5232
  %v5243 = vadd.f32 %v5223, %v5232
  %v5244 = vadd.f32 %v5224, %v5232
  %v5245 = vadd.f32 %v5225, %v5232
  %v5246 = vadd.f32 %v5226, %v5232
  %v5247 = vadd.f32 %v5227, %v5232
  %v5248 = vadd.f32 %v5228, %v5232
  %v5249 = vadd.f32 %v5229, %v5232
  %v5250 = vmax.f32 %v5234, 0.0
  %v5251 = vmax.f32 %v5235, 0.0
  %v5252 = vmax.f32 %v5236, 0.0
  %v5253 = vmax.f32 %v5237, 0.0
  %v5254 = vmax.f32 %v5238, 0.0
  %v5255 = vmax.f32 %v5239, 0.0
  %v5256 = vmax.f32 %v5240, 0.0
  %v5257 = vmax.f32 %v5241, 0.0
  %v5258 = vmax.f32 %v5242, 0.0
  %v5259 = vmax.f32 %v5243, 0.0
  %v5260 = vmax.f32 %v5244, 0.0
  %v5261 = vmax.f32 %v5245, 0.0
  %v5262 = vmax.f32 %v5246, 0.0
  %v5263 = vmax.f32 %v5247, 0.0
  %v5264 = vmax.f32 %v5248, 0.0
  %v5265 = vmax.f32 %v5249, 0.0
  %5266 = vst [vmem:[%s6] sm:$0xff] %v5250
  %5267 = vst [vmem:[%s6 + $0x8] sm:$0xff] %v5251
  %5268 = vst [vmem:[%s6 + $0x10] sm:$0xff] %v5252
  %5269 = vst [vmem:[%s6 + $0x18] sm:$0xff] %v5253
  %5270 = vst [vmem:[%s6 + $0x20] sm:$0xff] %v5254
  %5271 = vst [vmem:[%s6 + $0x28] sm:$0xff] %v5255
  %5272 = vst [vmem:[%s6 + $0x30] sm:$0xff] %v5256
  %5273 = vst [vmem:[%s6 + $0x38] sm:$0xff] %v5257
  %5274 = vst [vmem:[%s6 + $0x40] sm:$0xff] %v5258
  %5275 = vst [vmem:[%s6 + $0x48] sm:$0xff] %v5259
  %5276 = vst [vmem:[%s6 + $0x50] sm:$0xff] %v5260
  %5277 = vst [vmem:[%s6 + $0x58] sm:$0xff] %v5261
  %5278 = vst [vmem:[%s6 + $0x60] sm:$0xff] %v5262
  %5279 = vst [vmem:[%s6 + $0x68] sm:$0xff] %v5263
  %5280 = vst [vmem:[%s6 + $0x70] sm:$0xff] %v5264
  %5281 = vst [vmem:[%s6 + $0x78] sm:$0xff] %v5265
  // Predicated region
  $region26: #{residual_block.1} parent=0 // pred_check
    _
  $region27: #{residual_block.1} parent=0 // pred_check_branch
    %5283 = sbr.rel (0) target = $region29
  $region28: #{residual_block.1} parent=0 // pred_region
    _
  $region29: #{residual_block.1} parent=0 // pred_fallthru
    _
  // Predicated region
  $region30: #{residual_block.1} parent=0 // pred_check
    _
  $region31: #{residual_block.1} parent=0 // pred_check_branch
    %5285 = sbr.rel (0) target = $region33
  $region32: #{residual_block.1} parent=0 // pred_region
    _
  $region33: #{residual_block.1} parent=0 // pred_fallthru
    _

</llo_original>
